<compile_context>
chip_gen: v6e
topology: v6e:2x2x1
jax: 0.10.0
libtpu: 0.0.40
codegen_flags: <defaults>
</compile_context>

<pallas_src>
import functools

import jax
import jax.numpy as jnp
from jax.experimental import pallas as pl
from jax.experimental.pallas import tpu as pltpu

EPS = 1e-5


def _round_up(x, m):
    return (x + m - 1) // m * m


def _vmem_budget_bytes():
    """Generation-aware VMEM budget with headroom for Mosaic scratch/double-buffers."""
    cap = 64 * 1024 * 1024  # conservative default (v7x: 64 MiB per TensorCore)
    try:
        info = pltpu.get_tpu_info()
        cap = int(getattr(info, "vmem_capacity_bytes", cap) or cap)
    except Exception:
        pass
    return min(cap * 3 // 4, 100 * 1024 * 1024)


def _conv_step_vmem_bytes(TH, W, Cp, Coutp, cdt_bytes, out_bytes):
    """Rough per-grid-step VMEM footprint of the conv pass for row-tile TH."""
    rows, slab = TH * W, (TH + 2) * W
    dma = 2 * (rows * Cp + 2 * W * Cp) * cdt_bytes            # double-buffered in + halos
    dma += 2 * (rows * Coutp * out_bytes + 8 * Coutp * 4)      # double-buffered outputs
    dma += 2 * 9 * Cp * Coutp * cdt_bytes                      # weights (default 2 bufs)
    tmp = (3 * slab * Cp + rows * 3 * Cp) * cdt_bytes          # slab + shifted + one LHS
    tmp += slab * Cp * 4 + rows * Coutp * 4                    # f32 activation + accumulator
    return dma + tmp


def _pick_row_tile(H, W, Cp, Coutp, cdt_bytes, out_bytes, budget):
    best = 1
    for t in range(1, H + 1):
        if H % t == 0 and _conv_step_vmem_bytes(t, W, Cp, Coutp,
                                                cdt_bytes, out_bytes) <= budget:
            best = t
    return best


def _conv3x3_bn_stats_kernel(xm_ref, xt_ref, xb_ref, w_ref, scale_ref, shift_ref,
                             y_ref, st_ref, *, TH, W, Cp, Coutp, pre_act):
    """One (1, TH, W, Cp) row-tile of a 3x3 SAME conv (+ optional fused BN+ReLU of the
    previous conv on the input), as three K=3*Cp MXU matmuls with f32 accumulation.
    Also emits per-tile per-channel sum / sum-of-squares for the two-pass BatchNorm."""
    i = pl.program_id(1)
    n_rt = pl.num_programs(1)
    cdt = w_ref.dtype  # MXU operand dtype (bf16 recommended on every generation)

    xm = xm_ref[...].reshape(TH * W, Cp)
    xt = xt_ref[...].reshape(W, Cp)   # row above the tile (clamped at image top)
    xb = xb_ref[...].reshape(W, Cp)   # row below the tile (clamped at image bottom)

    if pre_act:
        def act(v):
            v = v.astype(jnp.float32) * scale_ref[...] + shift_ref[...]
            return jnp.maximum(v, 0.0).astype(cdt)
    else:
        def act(v):
            return v.astype(cdt)

    xm = act(xm)
    xt = act(xt)
    xb = act(xb)

    # SAME padding (top/bottom): only the two halo rows can be image-border rows.
    # Mask them AFTER the activation (the conv zero-pads its *input*).
    zrow = jnp.zeros_like(xt)
    xt = jnp.where(i == 0, zrow, xt)
    xb = jnp.where(i == n_rt - 1, zrow, xb)

    slab = jnp.concatenate([xt, xm, xb], axis=0)            # ((TH+2)*W, Cp)

    # Hoisted left/right column shifts: 2 rolls + 2 selects for the whole tile.
    L = (TH + 2) * W
    col = jax.lax.broadcasted_iota(jnp.int32, (L, 1), 0) % W
    zero = jnp.zeros((), cdt)
    left_slab = jnp.where(col == 0, zero, pltpu.roll(slab, shift=1, axis=0))
    right_slab = jnp.where(col == W - 1, zero,
                           pltpu.roll(slab, shift=L - 1, axis=0))  # == shift -1

    # 3-way K-split im2col: one (TH*W, 3*Cp) LHS per kernel row, f32 accumulation.
    acc = jnp.zeros((TH * W, Coutp), jnp.float32)
    for ky in range(3):
        lo = ky * W
        lhs = jnp.concatenate([left_slab[lo:lo + TH * W],
                               slab[lo:lo + TH * W],
                               right_slab[lo:lo + TH * W]], axis=1)
        w_ky = w_ref[ky * 3 * Cp:(ky + 1) * 3 * Cp, :]
        acc = acc + jnp.dot(lhs, w_ky, preferred_element_type=jnp.float32)

    # Per-tile BN partial statistics (f32, from the f32 accumulator).
    s = jnp.sum(acc, axis=0, keepdims=True)
    sq = jnp.sum(acc * acc, axis=0, keepdims=True)
    ridx = jax.lax.broadcasted_iota(jnp.int32, (8, Coutp), 0)
    st = jnp.where(ridx == 0, s, jnp.where(ridx == 1, sq, 0.0))
    st_ref[...] = st.reshape(1, 1, 8, Coutp)

    y_ref[...] = acc.reshape(1, TH, W, Coutp).astype(y_ref.dtype)


def _bn_relu_kernel(y_ref, scale_ref, shift_ref, o_ref):
    y = y_ref[...].astype(jnp.float32)
    o_ref[...] = jnp.maximum(y * scale_ref[...] + shift_ref[...], 0.0).astype(o_ref.dtype)


def _conv_pass(inp, wmat, scale, shift, *, pre_act, N, H, W, TH, Cp, Coutp,
               out_dtype, vmem_limit):
    n_rt = H // TH
    kern = functools.partial(_conv3x3_bn_stats_kernel,
                             TH=TH, W=W, Cp=Cp, Coutp=Coutp, pre_act=pre_act)
    out_b = jnp.dtype(out_dtype).itemsize
    flops = 2 * N * H * W * (9 * Cp) * Coutp
    bytes_acc = (inp.size * inp.dtype.itemsize
                 + wmat.size * wmat.dtype.itemsize
                 + N * H * W * Coutp * out_b
                 + N * n_rt * 8 * Coutp * 4)
    return pl.pallas_call(
        kern,
        grid=(N, n_rt),
        in_specs=[
            # main row-tile
            pl.BlockSpec((1, TH, W, Cp), lambda n, i: (n, i, 0, 0)),
            # 1-row halo above (clamped; zeroed in-kernel at the image top)
            pl.BlockSpec((1, 1, W, Cp),
                         lambda n, i: (n, jnp.maximum(i * TH - 1, 0), 0, 0)),
            # 1-row halo below (clamped; zeroed in-kernel at the image bottom)
            pl.BlockSpec((1, 1, W, Cp),
                         lambda n, i: (n, jnp.minimum((i + 1) * TH, H - 1), 0, 0)),
            # weight matrix (9*Cp, Coutp), constant index across the grid.
            # TODO(synk): pipeline_mode=pl.Buffered(1) would save one weight-sized VMEM
            # buffer on v7x; left at the default for portability.
            pl.BlockSpec((9 * Cp, Coutp), lambda n, i: (0, 0)),
            # per-channel affine of the previous BN (unused when pre_act=False)
            pl.BlockSpec((1, Cp), lambda n, i: (0, 0)),
            pl.BlockSpec((1, Cp), lambda n, i: (0, 0)),
        ],
        out_specs=[
            pl.BlockSpec((1, TH, W, Coutp), lambda n, i: (n, i, 0, 0)),
            pl.BlockSpec((1, 1, 8, Coutp), lambda n, i: (n, i, 0, 0)),
        ],
        out_shape=[
            jax.ShapeDtypeStruct((N, H, W, Coutp), out_dtype),
            jax.ShapeDtypeStruct((N, n_rt, 8, Coutp), jnp.float32),
        ],
        compiler_params=pltpu.CompilerParams(
            dimension_semantics=("parallel", "parallel"),
            vmem_limit_bytes=int(vmem_limit)),
        cost_estimate=pl.CostEstimate(flops=int(flops), transcendentals=0,
                                      bytes_accessed=int(bytes_acc)),
    )(inp, inp, inp, wmat, scale, shift)


def _bn_relu_pass(y, scale, shift, *, N, H, W, TH, Coutp, vmem_limit):
    n_rt = H // TH
    out_b = jnp.dtype(y.dtype).itemsize
    return pl.pallas_call(
        _bn_relu_kernel,
        grid=(N, n_rt),
        in_specs=[
            pl.BlockSpec((1, TH, W, Coutp), lambda n, i: (n, i, 0, 0)),
            pl.BlockSpec((1, Coutp), lambda n, i: (0, 0)),
            pl.BlockSpec((1, Coutp), lambda n, i: (0, 0)),
        ],
        out_specs=pl.BlockSpec((1, TH, W, Coutp), lambda n, i: (n, i, 0, 0)),
        out_shape=jax.ShapeDtypeStruct((N, H, W, Coutp), y.dtype),
        compiler_params=pltpu.CompilerParams(
            dimension_semantics=("parallel", "parallel"),
            vmem_limit_bytes=int(vmem_limit)),
        cost_estimate=pl.CostEstimate(flops=int(2 * N * H * W * Coutp),
                                      transcendentals=0,
                                      bytes_accessed=int(2 * N * H * W * Coutp * out_b)),
    )(y, scale, shift)


def encoding_block_nhwc(x, w1k, w2k, g1, b1, g2, b2, *, row_tile=None):
    """EncodingBlock on channel-padded NHWC activations (lane-dense layout).

    x:   (N, H, W, Cp)     compute-dtype, Cp = in-channels padded to a multiple of 128
    w1k: (9*Cp, Coutp)     compute-dtype im2col weights of conv1
    w2k: (9*Coutp, Coutp)  compute-dtype im2col weights of conv2
    g/b: (Coutp,)          f32 BatchNorm affine params (zero-padded)
    Returns (N, H, W, Coutp) in compute-dtype.  Chain blocks in this layout; only
    convert to/from NCHW at the model boundary (see `encoding_block`).
    """
    N, H, W, Cp = x.shape
    Coutp = w1k.shape[1]
    cdt = x.dtype
    if W % 8:
        raise ValueError("W must be a multiple of 8 (TPU sublane tiling)")

    cdt_b = jnp.dtype(cdt).itemsize
    budget = _vmem_budget_bytes()
    if row_tile is None:
        # Size against the larger (pass-2) footprint so every pass fits the budget.
        row_tile = _pick_row_tile(H, W, max(Cp, Coutp), Coutp, cdt_b, cdt_b,
                                  budget * 2 // 3)
    if H % row_tile:
        raise ValueError("row_tile must divide H")

    cnt = float(N * H * W)

    def bn_affine(stats, gamma, beta):
        # Finish the two-pass BN: combine per-tile partials -> global N*H*W statistics.
        # TODO(synk): E[x^2]-E[x]^2 over f32 partial sums can cancel catastrophically for
        # very large/offset activations; a Welford-style (count, mean, M2) combine would
        # be more robust.  Clamped at 0 as a guard.
        s = jnp.sum(stats[:, :, 0, :], axis=(0, 1))
        sq = jnp.sum(stats[:, :, 1, :], axis=(0, 1))
        mean = s / cnt
        var = jnp.maximum(sq / cnt - mean * mean, 0.0)
        scale = gamma * jax.lax.rsqrt(var + EPS)
        shift = beta - mean * scale
        return scale.reshape(1, Coutp), shift.reshape(1, Coutp)

    ones = jnp.ones((1, Cp), jnp.float32)
    zeros = jnp.zeros((1, Cp), jnp.float32)

    # pass 1: conv1 + BN1 partial statistics
    y1, st1 = _conv_pass(x, w1k, ones, zeros, pre_act=False,
                         N=N, H=H, W=W, TH=row_tile, Cp=Cp, Coutp=Coutp,
                         out_dtype=cdt, vmem_limit=budget)
    scale1, shift1 = bn_affine(st1, g1, b1)

    # pass 2: (BN1 + ReLU) fused into conv2 + BN2 partial statistics
    y2, st2 = _conv_pass(y1, w2k, scale1, shift1, pre_act=True,
                         N=N, H=H, W=W, TH=row_tile, Cp=Coutp, Coutp=Coutp,
                         out_dtype=cdt, vmem_limit=budget)
    scale2, shift2 = bn_affine(st2, g2, b2)

    # pass 3: BN2 + ReLU
    return _bn_relu_pass(y2, scale2, shift2,
                         N=N, H=H, W=W, TH=row_tile, Coutp=Coutp, vmem_limit=budget)


def encoding_block(x_nchw, w1, g1, b1, w2, g2, b2, *,
                   row_tile=None, compute_dtype=jnp.bfloat16):
    """NCHW model-boundary wrapper (PyTorch training-mode BN semantics).

    x_nchw: (N, Cin, H, W); w: (Cout, Cin, 3, 3) OIHW; gamma/beta: (Cout,).
    """
    N, Cin, H, W = x_nchw.shape
    Cout = w1.shape[0]
    Cp = _round_up(Cin, 128)      # lane-dense padded in-channels
    Coutp = _round_up(Cout, 128)  # lane-dense padded out-channels
    # TODO(synk): for a stem conv with Cin << 128, packing the 9 taps x Cin into a single
    # 128-lane K block (and leaving x unpadded in HBM) would cut K and the input DMA
    # ~9-32x; kept on the generic lane-padded path here for lowering portability.

    x = jnp.transpose(x_nchw, (0, 2, 3, 1))
    x = jnp.pad(x, ((0, 0), (0, 0), (0, 0), (0, Cp - Cin))).astype(compute_dtype)

    def prep_w(w, cin, cin_p):
        wk = jnp.transpose(w, (2, 3, 1, 0))                        # (3, 3, Cin, Cout)
        wk = jnp.pad(wk, ((0, 0), (0, 0), (0, cin_p - cin), (0, Coutp - Cout)))
        return wk.reshape(9 * cin_p, Coutp).astype(compute_dtype)  # row = (ky*3+kx)*Cp+cin

    w1k = prep_w(w1, Cin, Cp)
    w2k = prep_w(w2, Cout, Coutp)
    pad_c = (0, Coutp - Cout)
    g1p = jnp.pad(g1.astype(jnp.float32), pad_c)
    b1p = jnp.pad(b1.astype(jnp.float32), pad_c)
    g2p = jnp.pad(g2.astype(jnp.float32), pad_c)
    b2p = jnp.pad(b2.astype(jnp.float32), pad_c)

    out = encoding_block_nhwc(x, w1k, w2k, g1p, b1p, g2p, b2p, row_tile=row_tile)

    # TODO(synk): BN running_mean/running_var buffer updates are training-side module
    # state and not part of the returned tensor, so they are not computed here.
    return jnp.transpose(out[..., :Cout], (0, 3, 1, 2)).astype(x_nchw.dtype)


def _reference(x, w1, g1, b1, w2, g2, b2):
    """Pure-JAX f32 reference (NCHW) mirroring the PyTorch training-mode forward."""
    def conv(x, w):
        return jax.lax.conv_general_dilated(
            x, w, window_strides=(1, 1), padding=((1, 1), (1, 1)),
            dimension_numbers=("NCHW", "OIHW", "NCHW"))

    def bn_relu(y, g, b):
        mean = y.mean(axis=(0, 2, 3), keepdims=True)
        var = ((y - mean) ** 2).mean(axis=(0, 2, 3), keepdims=True)
        out = (y - mean) / jnp.sqrt(var + EPS)
        out = out * g.reshape(1, -1, 1, 1) + b.reshape(1, -1, 1, 1)
        return jnp.maximum(out, 0.0)

    y = bn_relu(conv(x, w1), g1, b1)
    return bn_relu(conv(y, w2), g2, b2)


if __name__ == "__main__":
    key = jax.random.PRNGKey(0)
    N, Cin, Cout, H, W = 2, 4, 8, 16, 16

    k_x, k_w1, k_w2 = jax.random.split(key, 3)
    x = jax.random.normal(k_x, (N, Cin, H, W), jnp.float32)
    w1 = 0.1 * jax.random.normal(k_w1, (Cout, Cin, 3, 3), jnp.float32)
    w2 = 0.1 * jax.random.normal(k_w2, (Cout, Cout, 3, 3), jnp.float32)
    g1 = jnp.ones((Cout,), jnp.float32)
    b1 = jnp.zeros((Cout,), jnp.float32)
    g2 = jnp.ones((Cout,), jnp.float32)
    b2 = jnp.zeros((Cout,), jnp.float32)

    ref = jax.block_until_ready(_reference(x, w1, g1, b1, w2, g2, b2))

    # f32 operands / f32 intermediates: checks tiling / halo / masking / two-pass BN.
    fwd_f32 = jax.jit(functools.partial(encoding_block, row_tile=8,
                                        compute_dtype=jnp.float32))
    out_f32 = jax.block_until_ready(fwd_f32(x, w1, g1, b1, w2, g2, b2))
    assert out_f32.shape == (N, Cout, H, W)
    assert float(jnp.max(jnp.abs(out_f32 - ref))) < 1e-1, "f32 path mismatch"

    # Default fast path: bf16 MXU operands and bf16 inter-pass activations, auto row_tile.
    fwd_bf16 = jax.jit(encoding_block)
    out_bf16 = jax.block_until_ready(fwd_bf16(x, w1, g1, b1, w2, g2, b2))
    assert out_bf16.shape == (N, Cout, H, W)
    assert float(jnp.max(jnp.abs(out_bf16.astype(jnp.float32) - ref))) < 2e-1, \
        "bf16 path mismatch"

    print("KERNEL_OK")
</pallas_src>

<mosaic_0001>
module attributes {stable_mosaic.version = 11 : i64} {
  func.func @_bn_relu_kernel(%arg0: i32, %arg1: i32, %arg2: memref<1x8x16x128xf32, #tpu.memory_space<vmem>>, %arg3: memref<1x128xf32, #tpu.memory_space<vmem>>, %arg4: memref<1x128xf32, #tpu.memory_space<vmem>>, %arg5: memref<1x8x16x128xf32, #tpu.memory_space<vmem>>) attributes {dimension_semantics = [#tpu.dimension_semantics<parallel>, #tpu.dimension_semantics<parallel>], iteration_bounds = array<i64: 2, 2>, scalar_prefetch = 0 : i64, scratch_operands = 0 : i64, tpu.core_type = #tpu.core_type<tc>, window_params = [{transform_indices = @transform_0, window_bounds = array<i64: 1, 8, 16, 128>}, {pipeline_mode = #tpu.pipeline_mode<synchronous>, transform_indices = @transform_1, window_bounds = array<i64: 1, 128>}, {pipeline_mode = #tpu.pipeline_mode<synchronous>, transform_indices = @transform_2, window_bounds = array<i64: 1, 128>}, {transform_indices = @transform_3, window_bounds = array<i64: 1, 8, 16, 128>}]} {
    %c0 = arith.constant 0 : index
    %c0_0 = arith.constant 0 : index
    %c0_1 = arith.constant 0 : index
    %c0_2 = arith.constant 0 : index
    %0 = vector.load %arg2[%c0, %c0_0, %c0_1, %c0_2] : memref<1x8x16x128xf32, #tpu.memory_space<vmem>>, vector<1x8x16x128xf32>
    %c0_3 = arith.constant 0 : index
    %c0_4 = arith.constant 0 : index
    %1 = vector.load %arg3[%c0_3, %c0_4] : memref<1x128xf32, #tpu.memory_space<vmem>>, vector<1x128xf32>
    %2 = vector.shape_cast %1 : vector<1x128xf32> to vector<1x1x1x128xf32>
    %3 = vector.broadcast %2 : vector<1x1x1x128xf32> to vector<1x8x16x128xf32>
    %4 = arith.mulf %0, %3 : vector<1x8x16x128xf32>
    %c0_5 = arith.constant 0 : index
    %c0_6 = arith.constant 0 : index
    %5 = vector.load %arg4[%c0_5, %c0_6] : memref<1x128xf32, #tpu.memory_space<vmem>>, vector<1x128xf32>
    %6 = vector.shape_cast %5 : vector<1x128xf32> to vector<1x1x1x128xf32>
    %7 = vector.broadcast %6 : vector<1x1x1x128xf32> to vector<1x8x16x128xf32>
    %8 = arith.addf %4, %7 : vector<1x8x16x128xf32>
    %cst = arith.constant 0.000000e+00 : f32
    %9 = vector.broadcast %cst : f32 to vector<1x8x16x128xf32>
    %10 = arith.maximumf %8, %9 : vector<1x8x16x128xf32>
    %c0_7 = arith.constant 0 : index
    %c0_8 = arith.constant 0 : index
    %c0_9 = arith.constant 0 : index
    %c0_10 = arith.constant 0 : index
    %11 = vector.load %arg5[%c0_7, %c0_8, %c0_9, %c0_10] : memref<1x8x16x128xf32, #tpu.memory_space<vmem>>, vector<1x8x16x128xf32>
    tpu.vector_store %arg5[%c0_7, %c0_8, %c0_9, %c0_10], %10 {strides = array<i32>} : memref<1x8x16x128xf32, #tpu.memory_space<vmem>>, vector<1x8x16x128xf32>,
    return
  }
  func.func @transform_0(%arg0: i32, %arg1: i32) -> (i32, i32, i32, i32) {
    %c0_i32 = arith.constant 0 : i32
    %c0_i32_0 = arith.constant 0 : i32
    %c0_i32_1 = arith.constant 0 : i32
    return %arg0, %arg1, %c0_i32, %c0_i32_0 : i32, i32, i32, i32
  }
  func.func @transform_1(%arg0: i32, %arg1: i32) -> (i32, i32) {
    %c0_i32 = arith.constant 0 : i32
    %c0_i32_0 = arith.constant 0 : i32
    %c0_i32_1 = arith.constant 0 : i32
    return %c0_i32, %c0_i32_0 : i32, i32
  }
  func.func @transform_2(%arg0: i32, %arg1: i32) -> (i32, i32) {
    %c0_i32 = arith.constant 0 : i32
    %c0_i32_0 = arith.constant 0 : i32
    %c0_i32_1 = arith.constant 0 : i32
    return %c0_i32, %c0_i32_0 : i32, i32
  }
  func.func @transform_3(%arg0: i32, %arg1: i32) -> (i32, i32, i32, i32) {
    %c0_i32 = arith.constant 0 : i32
    %c0_i32_0 = arith.constant 0 : i32
    %c0_i32_1 = arith.constant 0 : i32
    return %arg0, %arg1, %c0_i32, %c0_i32_0 : i32, i32, i32, i32
  }
}

module attributes {stable_mosaic.version = 11 : i64} {
  func.func @_conv3x3_bn_stats_kernel(%arg0: i32, %arg1: i32, %arg2: memref<1x8x16x128xf32, #tpu.memory_space<vmem>>, %arg3: memref<1x1x16x128xf32, #tpu.memory_space<vmem>>, %arg4: memref<1x1x16x128xf32, #tpu.memory_space<vmem>>, %arg5: memref<1152x128xf32, #tpu.memory_space<vmem>>, %arg6: memref<1x128xf32, #tpu.memory_space<vmem>>, %arg7: memref<1x128xf32, #tpu.memory_space<vmem>>, %arg8: memref<1x8x16x128xf32, #tpu.memory_space<vmem>>, %arg9: memref<1x1x8x128xf32, #tpu.memory_space<vmem>>) attributes {dimension_semantics = [#tpu.dimension_semantics<parallel>, #tpu.dimension_semantics<parallel>], iteration_bounds = array<i64: 2, 2>, scalar_prefetch = 0 : i64, scratch_operands = 0 : i64, tpu.core_type = #tpu.core_type<tc>, window_params = [{transform_indices = @transform_0, window_bounds = array<i64: 1, 8, 16, 128>}, {transform_indices = @transform_1, window_bounds = array<i64: 1, 1, 16, 128>}, {transform_indices = @transform_2, window_bounds = array<i64: 1, 1, 16, 128>}, {pipeline_mode = #tpu.pipeline_mode<synchronous>, transform_indices = @transform_3, window_bounds = array<i64: 1152, 128>}, {pipeline_mode = #tpu.pipeline_mode<synchronous>, transform_indices = @transform_4, window_bounds = array<i64: 1, 128>}, {pipeline_mode = #tpu.pipeline_mode<synchronous>, transform_indices = @transform_5, window_bounds = array<i64: 1, 128>}, {transform_indices = @transform_6, window_bounds = array<i64: 1, 8, 16, 128>}, {transform_indices = @transform_7, window_bounds = array<i64: 1, 1, 8, 128>}]} {
    %c0 = arith.constant 0 : index
    %c0_0 = arith.constant 0 : index
    %c0_1 = arith.constant 0 : index
    %c0_2 = arith.constant 0 : index
    %0 = vector.load %arg2[%c0, %c0_0, %c0_1, %c0_2] : memref<1x8x16x128xf32, #tpu.memory_space<vmem>>, vector<1x8x16x128xf32>
    %1 = vector.shape_cast %0 : vector<1x8x16x128xf32> to vector<128x128xf32>
    %c0_3 = arith.constant 0 : index
    %c0_4 = arith.constant 0 : index
    %c0_5 = arith.constant 0 : index
    %c0_6 = arith.constant 0 : index
    %2 = vector.load %arg3[%c0_3, %c0_4, %c0_5, %c0_6] : memref<1x1x16x128xf32, #tpu.memory_space<vmem>>, vector<1x1x16x128xf32>
    %3 = vector.shape_cast %2 : vector<1x1x16x128xf32> to vector<16x128xf32>
    %c0_7 = arith.constant 0 : index
    %c0_8 = arith.constant 0 : index
    %c0_9 = arith.constant 0 : index
    %c0_10 = arith.constant 0 : index
    %4 = vector.load %arg4[%c0_7, %c0_8, %c0_9, %c0_10] : memref<1x1x16x128xf32, #tpu.memory_space<vmem>>, vector<1x1x16x128xf32>
    %5 = vector.shape_cast %4 : vector<1x1x16x128xf32> to vector<16x128xf32>
    %cst = arith.constant 0.000000e+00 : f32
    %6 = vector.broadcast %cst : f32 to vector<16x128xf32>
    %c0_i32 = arith.constant 0 : i32
    %7 = arith.cmpi eq, %arg1, %c0_i32 : i32
    %8 = arith.select %7, %6, %3 : vector<16x128xf32>
    %c1_i32 = arith.constant 1 : i32
    %9 = arith.cmpi eq, %arg1, %c1_i32 : i32
    %10 = arith.select %9, %6, %5 : vector<16x128xf32>
    %11 = tpu.concatenate %8, %1, %10 in 0 : vector<16x128xf32>, vector<128x128xf32>, vector<16x128xf32> -> vector<160x128xf32>
    %12 = tpu.iota {dimensions = array<i32: 0>} : vector<160x1xi32>
    %c16_i32 = arith.constant 16 : i32
    %c0_i32_11 = arith.constant 0 : i32
    %13 = arith.cmpi eq, %c16_i32, %c0_i32_11 : i32
    %c1_i32_12 = arith.constant 1 : i32
    %14 = arith.select %13, %c1_i32_12, %c16_i32 : i32
    %15 = vector.broadcast %14 : i32 to vector<160x1xi32>
    %16 = arith.remsi %12, %15 : vector<160x1xi32>
    %c0_i32_13 = arith.constant 0 : i32
    %17 = vector.broadcast %c0_i32_13 : i32 to vector<160x1xi32>
    %18 = arith.cmpi ne, %16, %17 : vector<160x1xi32>
    %c0_i32_14 = arith.constant 0 : i32
    %19 = vector.broadcast %c0_i32_14 : i32 to vector<160x1xi32>
    %20 = arith.cmpi slt, %16, %19 : vector<160x1xi32>
    %c0_i32_15 = arith.constant 0 : i32
    %21 = arith.cmpi slt, %14, %c0_i32_15 : i32
    %22 = vector.broadcast %21 : i1 to vector<160x1xi1>
    %23 = vector.broadcast %22 : vector<160x1xi1> to vector<160x1xi1>
    %24 = arith.xori %20, %23 : vector<160x1xi1>
    %25 = arith.andi %24, %18 : vector<160x1xi1>
    %26 = vector.broadcast %14 : i32 to vector<160x1xi32>
    %27 = arith.addi %16, %26 : vector<160x1xi32>
    %28 = arith.select %25, %27, %16 : vector<160x1xi1>, vector<160x1xi32>
    %c0_i32_16 = arith.constant 0 : i32
    %29 = vector.broadcast %c0_i32_16 : i32 to vector<160x1xi32>
    %30 = arith.cmpi eq, %28, %29 : vector<160x1xi32>
    %c1_i32_17 = arith.constant 1 : i32
    %31 = tpu.dynamic_rotate %11 by %c1_i32_17 dim 0 : vector<160x128xf32>, i32 -> vector<160x128xf32>
    %cst_18 = arith.constant 0.000000e+00 : f32
    %32 = vector.shape_cast %30 : vector<160x1xi1> to vector<160x1xi1>
    %33 = vector.broadcast %32 : vector<160x1xi1> to vector<160x128xi1>
    %34 = vector.broadcast %cst_18 : f32 to vector<160x128xf32>
    %35 = arith.select %33, %34, %31 : vector<160x128xi1>, vector<160x128xf32>
    %c15_i32 = arith.constant 15 : i32
    %36 = vector.broadcast %c15_i32 : i32 to vector<160x1xi32>
    %37 = arith.cmpi eq, %28, %36 : vector<160x1xi32>
    %c159_i32 = arith.constant 159 : i32
    %38 = tpu.dynamic_rotate %11 by %c159_i32 dim 0 : vector<160x128xf32>, i32 -> vector<160x128xf32>
    %cst_19 = arith.constant 0.000000e+00 : f32
    %39 = vector.shape_cast %37 : vector<160x1xi1> to vector<160x1xi1>
    %40 = vector.broadcast %39 : vector<160x1xi1> to vector<160x128xi1>
    %41 = vector.broadcast %cst_19 : f32 to vector<160x128xf32>
    %42 = arith.select %40, %41, %38 : vector<160x128xi1>, vector<160x128xf32>
    %cst_20 = arith.constant 0.000000e+00 : f32
    %43 = vector.broadcast %cst_20 : f32 to vector<128x128xf32>
    %44 = vector.extract_strided_slice %35 {offsets = [0, 0], sizes = [128, 128], strides = [1, 1]} : vector<160x128xf32> to vector<128x128xf32>
    %45 = vector.extract_strided_slice %11 {offsets = [0, 0], sizes = [128, 128], strides = [1, 1]} : vector<160x128xf32> to vector<128x128xf32>
    %46 = vector.extract_strided_slice %42 {offsets = [0, 0], sizes = [128, 128], strides = [1, 1]} : vector<160x128xf32> to vector<128x128xf32>
    %47 = tpu.concatenate %44, %45, %46 in 1 : vector<128x128xf32>, vector<128x128xf32>, vector<128x128xf32> -> vector<128x384xf32>
    %c0_21 = arith.constant 0 : index
    %c0_22 = arith.constant 0 : index
    %48 = vector.load %arg5[%c0_21, %c0_22] : memref<1152x128xf32, #tpu.memory_space<vmem>>, vector<384x128xf32>
    %cst_23 = arith.constant dense<0.000000e+00> : vector<128x128xf32>
    %49 = tpu.matmul %47, %48, %cst_23 {dimension_numbers = #tpu.dot_dimension_numbers<[1], [0], [0], [1], [0, 0, 1, 1], [], []>} : vector<128x384xf32>, vector<384x128xf32>, vector<128x128xf32> -> vector<128x128xf32>
    %50 = arith.addf %43, %49 : vector<128x128xf32>
    %51 = vector.extract_strided_slice %35 {offsets = [16, 0], sizes = [128, 128], strides = [1, 1]} : vector<160x128xf32> to vector<128x128xf32>
    %52 = vector.extract_strided_slice %11 {offsets = [16, 0], sizes = [128, 128], strides = [1, 1]} : vector<160x128xf32> to vector<128x128xf32>
    %53 = vector.extract_strided_slice %42 {offsets = [16, 0], sizes = [128, 128], strides = [1, 1]} : vector<160x128xf32> to vector<128x128xf32>
    %54 = tpu.concatenate %51, %52, %53 in 1 : vector<128x128xf32>, vector<128x128xf32>, vector<128x128xf32> -> vector<128x384xf32>
    %c384 = arith.constant 384 : index
    %c0_24 = arith.constant 0 : index
    %55 = vector.load %arg5[%c384, %c0_24] : memref<1152x128xf32, #tpu.memory_space<vmem>>, vector<384x128xf32>
    %cst_25 = arith.constant dense<0.000000e+00> : vector<128x128xf32>
    %56 = tpu.matmul %54, %55, %cst_25 {dimension_numbers = #tpu.dot_dimension_numbers<[1], [0], [0], [1], [0, 0, 1, 1], [], []>} : vector<128x384xf32>, vector<384x128xf32>, vector<128x128xf32> -> vector<128x128xf32>
    %57 = arith.addf %50, %56 : vector<128x128xf32>
    %58 = vector.extract_strided_slice %35 {offsets = [32, 0], sizes = [128, 128], strides = [1, 1]} : vector<160x128xf32> to vector<128x128xf32>
    %59 = vector.extract_strided_slice %11 {offsets = [32, 0], sizes = [128, 128], strides = [1, 1]} : vector<160x128xf32> to vector<128x128xf32>
    %60 = vector.extract_strided_slice %42 {offsets = [32, 0], sizes = [128, 128], strides = [1, 1]} : vector<160x128xf32> to vector<128x128xf32>
    %61 = tpu.concatenate %58, %59, %60 in 1 : vector<128x128xf32>, vector<128x128xf32>, vector<128x128xf32> -> vector<128x384xf32>
    %c768 = arith.constant 768 : index
    %c0_26 = arith.constant 0 : index
    %62 = vector.load %arg5[%c768, %c0_26] : memref<1152x128xf32, #tpu.memory_space<vmem>>, vector<384x128xf32>
    %cst_27 = arith.constant dense<0.000000e+00> : vector<128x128xf32>
    %63 = tpu.matmul %61, %62, %cst_27 {dimension_numbers = #tpu.dot_dimension_numbers<[1], [0], [0], [1], [0, 0, 1, 1], [], []>} : vector<128x384xf32>, vector<384x128xf32>, vector<128x128xf32> -> vector<128x128xf32>
    %64 = arith.addf %57, %63 : vector<128x128xf32>
    %cst_28 = arith.constant dense<0.000000e+00> : vector<128xf32>
    %65 = vector.multi_reduction <add>, %64, %cst_28 [0] : vector<128x128xf32> to vector<128xf32>
    %66 = vector.shape_cast %65 : vector<128xf32> to vector<1x128xf32>
    %67 = arith.mulf %64, %64 : vector<128x128xf32>
    %cst_29 = arith.constant dense<0.000000e+00> : vector<128xf32>
    %68 = vector.multi_reduction <add>, %67, %cst_29 [0] : vector<128x128xf32> to vector<128xf32>
    %69 = vector.shape_cast %68 : vector<128xf32> to vector<1x128xf32>
    %70 = tpu.iota {dimensions = array<i32: 0>} : vector<8x128xi32>
    %c0_i32_30 = arith.constant 0 : i32
    %71 = vector.broadcast %c0_i32_30 : i32 to vector<8x128xi32>
    %72 = arith.cmpi eq, %70, %71 : vector<8x128xi32>
    %c1_i32_31 = arith.constant 1 : i32
    %73 = vector.broadcast %c1_i32_31 : i32 to vector<8x128xi32>
    %74 = arith.cmpi eq, %70, %73 : vector<8x128xi32>
    %cst_32 = arith.constant 0.000000e+00 : f32
    %75 = vector.shape_cast %69 : vector<1x128xf32> to vector<1x128xf32>
    %76 = vector.broadcast %75 : vector<1x128xf32> to vector<8x128xf32>
    %77 = vector.broadcast %cst_32 : f32 to vector<8x128xf32>
    %78 = arith.select %74, %76, %77 : vector<8x128xi1>, vector<8x128xf32>
    %79 = vector.shape_cast %66 : vector<1x128xf32> to vector<1x128xf32>
    %80 = vector.broadcast %79 : vector<1x128xf32> to vector<8x128xf32>
    %81 = arith.select %72, %80, %78 : vector<8x128xi1>, vector<8x128xf32>
    %82 = vector.shape_cast %81 : vector<8x128xf32> to vector<1x1x8x128xf32>
    %c0_33 = arith.constant 0 : index
    %c0_34 = arith.constant 0 : index
    %c0_35 = arith.constant 0 : index
    %c0_36 = arith.constant 0 : index
    %83 = vector.load %arg9[%c0_33, %c0_34, %c0_35, %c0_36] : memref<1x1x8x128xf32, #tpu.memory_space<vmem>>, vector<1x1x8x128xf32>
    tpu.vector_store %arg9[%c0_33, %c0_34, %c0_35, %c0_36], %82 {strides = array<i32>} : memref<1x1x8x128xf32, #tpu.memory_space<vmem>>, vector<1x1x8x128xf32>,
    %84 = vector.shape_cast %64 : vector<128x128xf32> to vector<1x8x16x128xf32>
    %c0_37 = arith.constant 0 : index
    %c0_38 = arith.constant 0 : index
    %c0_39 = arith.constant 0 : index
    %c0_40 = arith.constant 0 : index
    %85 = vector.load %arg8[%c0_37, %c0_38, %c0_39, %c0_40] : memref<1x8x16x128xf32, #tpu.memory_space<vmem>>, vector<1x8x16x128xf32>
    tpu.vector_store %arg8[%c0_37, %c0_38, %c0_39, %c0_40], %84 {strides = array<i32>} : memref<1x8x16x128xf32, #tpu.memory_space<vmem>>, vector<1x8x16x128xf32>,
    return
  }
  func.func @transform_0(%arg0: i32, %arg1: i32) -> (i32, i32, i32, i32) {
    %c0_i32 = arith.constant 0 : i32
    %c0_i32_0 = arith.constant 0 : i32
    %c0_i32_1 = arith.constant 0 : i32
    return %arg0, %arg1, %c0_i32, %c0_i32_0 : i32, i32, i32, i32
  }
  func.func @transform_1(%arg0: i32, %arg1: i32) -> (i32, i32, i32, i32) {
    %c8_i32 = arith.constant 8 : i32
    %0 = arith.muli %arg1, %c8_i32 : i32
    %c1_i32 = arith.constant 1 : i32
    %1 = arith.subi %0, %c1_i32 : i32
    %c0_i32 = arith.constant 0 : i32
    %2 = arith.maxsi %1, %c0_i32 : i32
    %c0_i32_0 = arith.constant 0 : i32
    %c0_i32_1 = arith.constant 0 : i32
    %c0_i32_2 = arith.constant 0 : i32
    return %arg0, %2, %c0_i32_0, %c0_i32_1 : i32, i32, i32, i32
  }
  func.func @transform_2(%arg0: i32, %arg1: i32) -> (i32, i32, i32, i32) {
    %c1_i32 = arith.constant 1 : i32
    %0 = arith.addi %arg1, %c1_i32 : i32
    %c8_i32 = arith.constant 8 : i32
    %1 = arith.muli %0, %c8_i32 : i32
    %c15_i32 = arith.constant 15 : i32
    %2 = arith.minsi %1, %c15_i32 : i32
    %c0_i32 = arith.constant 0 : i32
    %c0_i32_0 = arith.constant 0 : i32
    %c0_i32_1 = arith.constant 0 : i32
    return %arg0, %2, %c0_i32, %c0_i32_0 : i32, i32, i32, i32
  }
  func.func @transform_3(%arg0: i32, %arg1: i32) -> (i32, i32) {
    %c0_i32 = arith.constant 0 : i32
    %c0_i32_0 = arith.constant 0 : i32
    %c0_i32_1 = arith.constant 0 : i32
    return %c0_i32, %c0_i32_0 : i32, i32
  }
  func.func @transform_4(%arg0: i32, %arg1: i32) -> (i32, i32) {
    %c0_i32 = arith.constant 0 : i32
    %c0_i32_0 = arith.constant 0 : i32
    %c0_i32_1 = arith.constant 0 : i32
    return %c0_i32, %c0_i32_0 : i32, i32
  }
  func.func @transform_5(%arg0: i32, %arg1: i32) -> (i32, i32) {
    %c0_i32 = arith.constant 0 : i32
    %c0_i32_0 = arith.constant 0 : i32
    %c0_i32_1 = arith.constant 0 : i32
    return %c0_i32, %c0_i32_0 : i32, i32
  }
  func.func @transform_6(%arg0: i32, %arg1: i32) -> (i32, i32, i32, i32) {
    %c0_i32 = arith.constant 0 : i32
    %c0_i32_0 = arith.constant 0 : i32
    %c0_i32_1 = arith.constant 0 : i32
    return %arg0, %arg1, %c0_i32, %c0_i32_0 : i32, i32, i32, i32
  }
  func.func @transform_7(%arg0: i32, %arg1: i32) -> (i32, i32, i32, i32) {
    %c0_i32 = arith.constant 0 : i32
    %c0_i32_0 = arith.constant 0 : i32
    %c0_i32_1 = arith.constant 0 : i32
    return %arg0, %arg1, %c0_i32, %c0_i32_0 : i32, i32, i32, i32
  }
}

module attributes {stable_mosaic.version = 11 : i64} {
  func.func @_conv3x3_bn_stats_kernel(%arg0: i32, %arg1: i32, %arg2: memref<1x8x16x128xf32, #tpu.memory_space<vmem>>, %arg3: memref<1x1x16x128xf32, #tpu.memory_space<vmem>>, %arg4: memref<1x1x16x128xf32, #tpu.memory_space<vmem>>, %arg5: memref<1152x128xf32, #tpu.memory_space<vmem>>, %arg6: memref<1x128xf32, #tpu.memory_space<vmem>>, %arg7: memref<1x128xf32, #tpu.memory_space<vmem>>, %arg8: memref<1x8x16x128xf32, #tpu.memory_space<vmem>>, %arg9: memref<1x1x8x128xf32, #tpu.memory_space<vmem>>) attributes {dimension_semantics = [#tpu.dimension_semantics<parallel>, #tpu.dimension_semantics<parallel>], iteration_bounds = array<i64: 2, 2>, scalar_prefetch = 0 : i64, scratch_operands = 0 : i64, tpu.core_type = #tpu.core_type<tc>, window_params = [{transform_indices = @transform_0, window_bounds = array<i64: 1, 8, 16, 128>}, {transform_indices = @transform_1, window_bounds = array<i64: 1, 1, 16, 128>}, {transform_indices = @transform_2, window_bounds = array<i64: 1, 1, 16, 128>}, {pipeline_mode = #tpu.pipeline_mode<synchronous>, transform_indices = @transform_3, window_bounds = array<i64: 1152, 128>}, {pipeline_mode = #tpu.pipeline_mode<synchronous>, transform_indices = @transform_4, window_bounds = array<i64: 1, 128>}, {pipeline_mode = #tpu.pipeline_mode<synchronous>, transform_indices = @transform_5, window_bounds = array<i64: 1, 128>}, {transform_indices = @transform_6, window_bounds = array<i64: 1, 8, 16, 128>}, {transform_indices = @transform_7, window_bounds = array<i64: 1, 1, 8, 128>}]} {
    %c0 = arith.constant 0 : index
    %c0_0 = arith.constant 0 : index
    %c0_1 = arith.constant 0 : index
    %c0_2 = arith.constant 0 : index
    %0 = vector.load %arg2[%c0, %c0_0, %c0_1, %c0_2] : memref<1x8x16x128xf32, #tpu.memory_space<vmem>>, vector<1x8x16x128xf32>
    %1 = vector.shape_cast %0 : vector<1x8x16x128xf32> to vector<128x128xf32>
    %c0_3 = arith.constant 0 : index
    %c0_4 = arith.constant 0 : index
    %c0_5 = arith.constant 0 : index
    %c0_6 = arith.constant 0 : index
    %2 = vector.load %arg3[%c0_3, %c0_4, %c0_5, %c0_6] : memref<1x1x16x128xf32, #tpu.memory_space<vmem>>, vector<1x1x16x128xf32>
    %3 = vector.shape_cast %2 : vector<1x1x16x128xf32> to vector<16x128xf32>
    %c0_7 = arith.constant 0 : index
    %c0_8 = arith.constant 0 : index
    %c0_9 = arith.constant 0 : index
    %c0_10 = arith.constant 0 : index
    %4 = vector.load %arg4[%c0_7, %c0_8, %c0_9, %c0_10] : memref<1x1x16x128xf32, #tpu.memory_space<vmem>>, vector<1x1x16x128xf32>
    %5 = vector.shape_cast %4 : vector<1x1x16x128xf32> to vector<16x128xf32>
    %c0_11 = arith.constant 0 : index
    %c0_12 = arith.constant 0 : index
    %6 = vector.load %arg6[%c0_11, %c0_12] : memref<1x128xf32, #tpu.memory_space<vmem>>, vector<1x128xf32>
    %7 = vector.broadcast %6 : vector<1x128xf32> to vector<128x128xf32>
    %8 = arith.mulf %1, %7 : vector<128x128xf32>
    %c0_13 = arith.constant 0 : index
    %c0_14 = arith.constant 0 : index
    %9 = vector.load %arg7[%c0_13, %c0_14] : memref<1x128xf32, #tpu.memory_space<vmem>>, vector<1x128xf32>
    %10 = vector.broadcast %9 : vector<1x128xf32> to vector<128x128xf32>
    %11 = arith.addf %8, %10 : vector<128x128xf32>
    %cst = arith.constant 0.000000e+00 : f32
    %12 = vector.broadcast %cst : f32 to vector<128x128xf32>
    %13 = arith.maximumf %11, %12 : vector<128x128xf32>
    %c0_15 = arith.constant 0 : index
    %c0_16 = arith.constant 0 : index
    %14 = vector.load %arg6[%c0_15, %c0_16] : memref<1x128xf32, #tpu.memory_space<vmem>>, vector<1x128xf32>
    %15 = vector.broadcast %14 : vector<1x128xf32> to vector<16x128xf32>
    %16 = arith.mulf %3, %15 : vector<16x128xf32>
    %c0_17 = arith.constant 0 : index
    %c0_18 = arith.constant 0 : index
    %17 = vector.load %arg7[%c0_17, %c0_18] : memref<1x128xf32, #tpu.memory_space<vmem>>, vector<1x128xf32>
    %18 = vector.broadcast %17 : vector<1x128xf32> to vector<16x128xf32>
    %19 = arith.addf %16, %18 : vector<16x128xf32>
    %cst_19 = arith.constant 0.000000e+00 : f32
    %20 = vector.broadcast %cst_19 : f32 to vector<16x128xf32>
    %21 = arith.maximumf %19, %20 : vector<16x128xf32>
    %c0_20 = arith.constant 0 : index
    %c0_21 = arith.constant 0 : index
    %22 = vector.load %arg6[%c0_20, %c0_21] : memref<1x128xf32, #tpu.memory_space<vmem>>, vector<1x128xf32>
    %23 = vector.broadcast %22 : vector<1x128xf32> to vector<16x128xf32>
    %24 = arith.mulf %5, %23 : vector<16x128xf32>
    %c0_22 = arith.constant 0 : index
    %c0_23 = arith.constant 0 : index
    %25 = vector.load %arg7[%c0_22, %c0_23] : memref<1x128xf32, #tpu.memory_space<vmem>>, vector<1x128xf32>
    %26 = vector.broadcast %25 : vector<1x128xf32> to vector<16x128xf32>
    %27 = arith.addf %24, %26 : vector<16x128xf32>
    %cst_24 = arith.constant 0.000000e+00 : f32
    %28 = vector.broadcast %cst_24 : f32 to vector<16x128xf32>
    %29 = arith.maximumf %27, %28 : vector<16x128xf32>
    %cst_25 = arith.constant 0.000000e+00 : f32
    %30 = vector.broadcast %cst_25 : f32 to vector<16x128xf32>
    %c0_i32 = arith.constant 0 : i32
    %31 = arith.cmpi eq, %arg1, %c0_i32 : i32
    %32 = arith.select %31, %30, %21 : vector<16x128xf32>
    %c1_i32 = arith.constant 1 : i32
    %33 = arith.cmpi eq, %arg1, %c1_i32 : i32
    %34 = arith.select %33, %30, %29 : vector<16x128xf32>
    %35 = tpu.concatenate %32, %13, %34 in 0 : vector<16x128xf32>, vector<128x128xf32>, vector<16x128xf32> -> vector<160x128xf32>
    %36 = tpu.iota {dimensions = array<i32: 0>} : vector<160x1xi32>
    %c16_i32 = arith.constant 16 : i32
    %c0_i32_26 = arith.constant 0 : i32
    %37 = arith.cmpi eq, %c16_i32, %c0_i32_26 : i32
    %c1_i32_27 = arith.constant 1 : i32
    %38 = arith.select %37, %c1_i32_27, %c16_i32 : i32
    %39 = vector.broadcast %38 : i32 to vector<160x1xi32>
    %40 = arith.remsi %36, %39 : vector<160x1xi32>
    %c0_i32_28 = arith.constant 0 : i32
    %41 = vector.broadcast %c0_i32_28 : i32 to vector<160x1xi32>
    %42 = arith.cmpi ne, %40, %41 : vector<160x1xi32>
    %c0_i32_29 = arith.constant 0 : i32
    %43 = vector.broadcast %c0_i32_29 : i32 to vector<160x1xi32>
    %44 = arith.cmpi slt, %40, %43 : vector<160x1xi32>
    %c0_i32_30 = arith.constant 0 : i32
    %45 = arith.cmpi slt, %38, %c0_i32_30 : i32
    %46 = vector.broadcast %45 : i1 to vector<160x1xi1>
    %47 = vector.broadcast %46 : vector<160x1xi1> to vector<160x1xi1>
    %48 = arith.xori %44, %47 : vector<160x1xi1>
    %49 = arith.andi %48, %42 : vector<160x1xi1>
    %50 = vector.broadcast %38 : i32 to vector<160x1xi32>
    %51 = arith.addi %40, %50 : vector<160x1xi32>
    %52 = arith.select %49, %51, %40 : vector<160x1xi1>, vector<160x1xi32>
    %c0_i32_31 = arith.constant 0 : i32
    %53 = vector.broadcast %c0_i32_31 : i32 to vector<160x1xi32>
    %54 = arith.cmpi eq, %52, %53 : vector<160x1xi32>
    %c1_i32_32 = arith.constant 1 : i32
    %55 = tpu.dynamic_rotate %35 by %c1_i32_32 dim 0 : vector<160x128xf32>, i32 -> vector<160x128xf32>
    %cst_33 = arith.constant 0.000000e+00 : f32
    %56 = vector.shape_cast %54 : vector<160x1xi1> to vector<160x1xi1>
    %57 = vector.broadcast %56 : vector<160x1xi1> to vector<160x128xi1>
    %58 = vector.broadcast %cst_33 : f32 to vector<160x128xf32>
    %59 = arith.select %57, %58, %55 : vector<160x128xi1>, vector<160x128xf32>
    %c15_i32 = arith.constant 15 : i32
    %60 = vector.broadcast %c15_i32 : i32 to vector<160x1xi32>
    %61 = arith.cmpi eq, %52, %60 : vector<160x1xi32>
    %c159_i32 = arith.constant 159 : i32
    %62 = tpu.dynamic_rotate %35 by %c159_i32 dim 0 : vector<160x128xf32>, i32 -> vector<160x128xf32>
    %cst_34 = arith.constant 0.000000e+00 : f32
    %63 = vector.shape_cast %61 : vector<160x1xi1> to vector<160x1xi1>
    %64 = vector.broadcast %63 : vector<160x1xi1> to vector<160x128xi1>
    %65 = vector.broadcast %cst_34 : f32 to vector<160x128xf32>
    %66 = arith.select %64, %65, %62 : vector<160x128xi1>, vector<160x128xf32>
    %cst_35 = arith.constant 0.000000e+00 : f32
    %67 = vector.broadcast %cst_35 : f32 to vector<128x128xf32>
    %68 = vector.extract_strided_slice %59 {offsets = [0, 0], sizes = [128, 128], strides = [1, 1]} : vector<160x128xf32> to vector<128x128xf32>
    %69 = vector.extract_strided_slice %35 {offsets = [0, 0], sizes = [128, 128], strides = [1, 1]} : vector<160x128xf32> to vector<128x128xf32>
    %70 = vector.extract_strided_slice %66 {offsets = [0, 0], sizes = [128, 128], strides = [1, 1]} : vector<160x128xf32> to vector<128x128xf32>
    %71 = tpu.concatenate %68, %69, %70 in 1 : vector<128x128xf32>, vector<128x128xf32>, vector<128x128xf32> -> vector<128x384xf32>
    %c0_36 = arith.constant 0 : index
    %c0_37 = arith.constant 0 : index
    %72 = vector.load %arg5[%c0_36, %c0_37] : memref<1152x128xf32, #tpu.memory_space<vmem>>, vector<384x128xf32>
    %cst_38 = arith.constant dense<0.000000e+00> : vector<128x128xf32>
    %73 = tpu.matmul %71, %72, %cst_38 {dimension_numbers = #tpu.dot_dimension_numbers<[1], [0], [0], [1], [0, 0, 1, 1], [], []>} : vector<128x384xf32>, vector<384x128xf32>, vector<128x128xf32> -> vector<128x128xf32>
    %74 = arith.addf %67, %73 : vector<128x128xf32>
    %75 = vector.extract_strided_slice %59 {offsets = [16, 0], sizes = [128, 128], strides = [1, 1]} : vector<160x128xf32> to vector<128x128xf32>
    %76 = vector.extract_strided_slice %35 {offsets = [16, 0], sizes = [128, 128], strides = [1, 1]} : vector<160x128xf32> to vector<128x128xf32>
    %77 = vector.extract_strided_slice %66 {offsets = [16, 0], sizes = [128, 128], strides = [1, 1]} : vector<160x128xf32> to vector<128x128xf32>
    %78 = tpu.concatenate %75, %76, %77 in 1 : vector<128x128xf32>, vector<128x128xf32>, vector<128x128xf32> -> vector<128x384xf32>
    %c384 = arith.constant 384 : index
    %c0_39 = arith.constant 0 : index
    %79 = vector.load %arg5[%c384, %c0_39] : memref<1152x128xf32, #tpu.memory_space<vmem>>, vector<384x128xf32>
    %cst_40 = arith.constant dense<0.000000e+00> : vector<128x128xf32>
    %80 = tpu.matmul %78, %79, %cst_40 {dimension_numbers = #tpu.dot_dimension_numbers<[1], [0], [0], [1], [0, 0, 1, 1], [], []>} : vector<128x384xf32>, vector<384x128xf32>, vector<128x128xf32> -> vector<128x128xf32>
    %81 = arith.addf %74, %80 : vector<128x128xf32>
    %82 = vector.extract_strided_slice %59 {offsets = [32, 0], sizes = [128, 128], strides = [1, 1]} : vector<160x128xf32> to vector<128x128xf32>
    %83 = vector.extract_strided_slice %35 {offsets = [32, 0], sizes = [128, 128], strides = [1, 1]} : vector<160x128xf32> to vector<128x128xf32>
    %84 = vector.extract_strided_slice %66 {offsets = [32, 0], sizes = [128, 128], strides = [1, 1]} : vector<160x128xf32> to vector<128x128xf32>
    %85 = tpu.concatenate %82, %83, %84 in 1 : vector<128x128xf32>, vector<128x128xf32>, vector<128x128xf32> -> vector<128x384xf32>
    %c768 = arith.constant 768 : index
    %c0_41 = arith.constant 0 : index
    %86 = vector.load %arg5[%c768, %c0_41] : memref<1152x128xf32, #tpu.memory_space<vmem>>, vector<384x128xf32>
    %cst_42 = arith.constant dense<0.000000e+00> : vector<128x128xf32>
    %87 = tpu.matmul %85, %86, %cst_42 {dimension_numbers = #tpu.dot_dimension_numbers<[1], [0], [0], [1], [0, 0, 1, 1], [], []>} : vector<128x384xf32>, vector<384x128xf32>, vector<128x128xf32> -> vector<128x128xf32>
    %88 = arith.addf %81, %87 : vector<128x128xf32>
    %cst_43 = arith.constant dense<0.000000e+00> : vector<128xf32>
    %89 = vector.multi_reduction <add>, %88, %cst_43 [0] : vector<128x128xf32> to vector<128xf32>
    %90 = vector.shape_cast %89 : vector<128xf32> to vector<1x128xf32>
    %91 = arith.mulf %88, %88 : vector<128x128xf32>
    %cst_44 = arith.constant dense<0.000000e+00> : vector<128xf32>
    %92 = vector.multi_reduction <add>, %91, %cst_44 [0] : vector<128x128xf32> to vector<128xf32>
    %93 = vector.shape_cast %92 : vector<128xf32> to vector<1x128xf32>
    %94 = tpu.iota {dimensions = array<i32: 0>} : vector<8x128xi32>
    %c0_i32_45 = arith.constant 0 : i32
    %95 = vector.broadcast %c0_i32_45 : i32 to vector<8x128xi32>
    %96 = arith.cmpi eq, %94, %95 : vector<8x128xi32>
    %c1_i32_46 = arith.constant 1 : i32
    %97 = vector.broadcast %c1_i32_46 : i32 to vector<8x128xi32>
    %98 = arith.cmpi eq, %94, %97 : vector<8x128xi32>
    %cst_47 = arith.constant 0.000000e+00 : f32
    %99 = vector.shape_cast %93 : vector<1x128xf32> to vector<1x128xf32>
    %100 = vector.broadcast %99 : vector<1x128xf32> to vector<8x128xf32>
    %101 = vector.broadcast %cst_47 : f32 to vector<8x128xf32>
    %102 = arith.select %98, %100, %101 : vector<8x128xi1>, vector<8x128xf32>
    %103 = vector.shape_cast %90 : vector<1x128xf32> to vector<1x128xf32>
    %104 = vector.broadcast %103 : vector<1x128xf32> to vector<8x128xf32>
    %105 = arith.select %96, %104, %102 : vector<8x128xi1>, vector<8x128xf32>
    %106 = vector.shape_cast %105 : vector<8x128xf32> to vector<1x1x8x128xf32>
    %c0_48 = arith.constant 0 : index
    %c0_49 = arith.constant 0 : index
    %c0_50 = arith.constant 0 : index
    %c0_51 = arith.constant 0 : index
    %107 = vector.load %arg9[%c0_48, %c0_49, %c0_50, %c0_51] : memref<1x1x8x128xf32, #tpu.memory_space<vmem>>, vector<1x1x8x128xf32>
    tpu.vector_store %arg9[%c0_48, %c0_49, %c0_50, %c0_51], %106 {strides = array<i32>} : memref<1x1x8x128xf32, #tpu.memory_space<vmem>>, vector<1x1x8x128xf32>,
    %108 = vector.shape_cast %88 : vector<128x128xf32> to vector<1x8x16x128xf32>
    %c0_52 = arith.constant 0 : index
    %c0_53 = arith.constant 0 : index
    %c0_54 = arith.constant 0 : index
    %c0_55 = arith.constant 0 : index
    %109 = vector.load %arg8[%c0_52, %c0_53, %c0_54, %c0_55] : memref<1x8x16x128xf32, #tpu.memory_space<vmem>>, vector<1x8x16x128xf32>
    tpu.vector_store %arg8[%c0_52, %c0_53, %c0_54, %c0_55], %108 {strides = array<i32>} : memref<1x8x16x128xf32, #tpu.memory_space<vmem>>, vector<1x8x16x128xf32>,
    return
  }
  func.func @transform_0(%arg0: i32, %arg1: i32) -> (i32, i32, i32, i32) {
    %c0_i32 = arith.constant 0 : i32
    %c0_i32_0 = arith.constant 0 : i32
    %c0_i32_1 = arith.constant 0 : i32
    return %arg0, %arg1, %c0_i32, %c0_i32_0 : i32, i32, i32, i32
  }
  func.func @transform_1(%arg0: i32, %arg1: i32) -> (i32, i32, i32, i32) {
    %c8_i32 = arith.constant 8 : i32
    %0 = arith.muli %arg1, %c8_i32 : i32
    %c1_i32 = arith.constant 1 : i32
    %1 = arith.subi %0, %c1_i32 : i32
    %c0_i32 = arith.constant 0 : i32
    %2 = arith.maxsi %1, %c0_i32 : i32
    %c0_i32_0 = arith.constant 0 : i32
    %c0_i32_1 = arith.constant 0 : i32
    %c0_i32_2 = arith.constant 0 : i32
    return %arg0, %2, %c0_i32_0, %c0_i32_1 : i32, i32, i32, i32
  }
  func.func @transform_2(%arg0: i32, %arg1: i32) -> (i32, i32, i32, i32) {
    %c1_i32 = arith.constant 1 : i32
    %0 = arith.addi %arg1, %c1_i32 : i32
    %c8_i32 = arith.constant 8 : i32
    %1 = arith.muli %0, %c8_i32 : i32
    %c15_i32 = arith.constant 15 : i32
    %2 = arith.minsi %1, %c15_i32 : i32
    %c0_i32 = arith.constant 0 : i32
    %c0_i32_0 = arith.constant 0 : i32
    %c0_i32_1 = arith.constant 0 : i32
    return %arg0, %2, %c0_i32, %c0_i32_0 : i32, i32, i32, i32
  }
  func.func @transform_3(%arg0: i32, %arg1: i32) -> (i32, i32) {
    %c0_i32 = arith.constant 0 : i32
    %c0_i32_0 = arith.constant 0 : i32
    %c0_i32_1 = arith.constant 0 : i32
    return %c0_i32, %c0_i32_0 : i32, i32
  }
  func.func @transform_4(%arg0: i32, %arg1: i32) -> (i32, i32) {
    %c0_i32 = arith.constant 0 : i32
    %c0_i32_0 = arith.constant 0 : i32
    %c0_i32_1 = arith.constant 0 : i32
    return %c0_i32, %c0_i32_0 : i32, i32
  }
  func.func @transform_5(%arg0: i32, %arg1: i32) -> (i32, i32) {
    %c0_i32 = arith.constant 0 : i32
    %c0_i32_0 = arith.constant 0 : i32
    %c0_i32_1 = arith.constant 0 : i32
    return %c0_i32, %c0_i32_0 : i32, i32
  }
  func.func @transform_6(%arg0: i32, %arg1: i32) -> (i32, i32, i32, i32) {
    %c0_i32 = arith.constant 0 : i32
    %c0_i32_0 = arith.constant 0 : i32
    %c0_i32_1 = arith.constant 0 : i32
    return %arg0, %arg1, %c0_i32, %c0_i32_0 : i32, i32, i32, i32
  }
  func.func @transform_7(%arg0: i32, %arg1: i32) -> (i32, i32, i32, i32) {
    %c0_i32 = arith.constant 0 : i32
    %c0_i32_0 = arith.constant 0 : i32
    %c0_i32_1 = arith.constant 0 : i32
    return %arg0, %arg1, %c0_i32, %c0_i32_0 : i32, i32, i32, i32
  }
}

</mosaic_0001>

<llo_original>
// kernel: encoding_block.5
$region0: #{encoding_block.5}
  #allocation0 [shape = 'u32[]', space=smem, size = 0x4, offset = 0x4, fixed_abs, tag = 'smem constant byte address 0x4 - core index']
  #allocation1 [shape = 'u32[144,128]{1,0:T(1,128)}', space=vmem, size = 0x12000, scoped, tag = 'internal scratch']
  %s0 = inlined_call_operand.vmem [shape: f32[2,16,16,128], index: 0, kind: input, shape index: {}]
  %s1 = inlined_call_operand.vmem [shape: f32[1,128], index: 1, kind: input, shape index: {}]
  %s2 = inlined_call_operand.vmem [shape: f32[1,128], index: 2, kind: input, shape index: {}]
  %s3 = inlined_call_operand.vmem [shape: f32[2,16,16,128], index: 3, kind: output, shape index: {}]
  %s4 = sld [smem:[#allocation0]]
  $region45: #{encoding_block.5} parent=0
    _
  %s6 = ssub.s32 1, %s4
  %s7 = scalar_select 0, %s6, %s4
  loop: start=0, step=1, limit=6
  $region2: #{encoding_block.5} parent=0 // loop_pre_header
    _
  $region3: #{encoding_block.5} parent=0 // loop_header
    %s9 = sphi 0, %s13
    %p10 = scmp.ge.s32.totalorder %s9, 6
    %s16 = sphi 0, %s28
    %s17 = sphi 0, %s24
    %s18 = sphi 0, %s16
    %s19 = sphi 0, %s17
    %s20 = sphi 0, %s18
    %s21 = sphi 0, %s19
    %s33 = sphi 0, %s35
    %s36 = sphi 0, %s33
    %s37 = sphi 0, %s36
    %s53 = sphi 0, %s37
    %s57 = sphi 0, %s57
    %s59 = sphi 0, %s57
    %s60 = sphi 0, %s59
    %s74 = sphi 0, %s60
    %s78 = sphi 0, %s78
    %s80 = sphi 0, %s78
    %s81 = sphi 0, %s80
    %s95 = sphi 0, %s81
    %s103 = sphi 0, %s105
    %s106 = sphi 0, %s103
    %s107 = sphi 0, %s106
    %s123 = sphi 0, %s107
  $region4: #{encoding_block.5} parent=0 // loop_header_branch
    %12 = sbr.rel (%p10) target = $region8
  $region5: #{encoding_block.5} parent=0 // loop_body
    %s14 = ssub.s32 %s9, 1
    %s15 = ssub.s32 %s9, 2
    %s22 = sadd.s32 1, %s17
    %p23 = scmp.ge.s32.totalorder %s22, 2
    %s24 = scalar_select %p23, 0, %s22
    %s25 = sadd.s32 1, %s16
    %s26 = scalar_select %p23, %s25, %s16
    %p27 = scmp.ge.s32.totalorder %s26, 2
    %s28 = scalar_select %p27, 0, %s26
    %s29 = ssub.s32 %s16, %s28
    %s30 = ssub.s32 %s17, %s24
    %s31 = sor.u32 %s29, %s30
    %p32 = scmp.eq.s32.totalorder %s31, 0
    %s34 = sadd.s32 %s33, 1
    %s35 = scalar_select %p32, %s33, %s34
    %p38 = pneg %p32
    %p39 = scmp.eq.s32.totalorder %s9, 3
    %p40 = por %p38, %p39
    %p41 = scmp.ne.s32.totalorder %s33, %s36
    %p42 = scmp.eq.s32.totalorder %s9, 0
    %p43 = por %p41, %p42
    %p44 = scmp.ne.s32.totalorder %s33, %s36
    %p45 = scmp.eq.s32.totalorder %s14, 3
    %p46 = por %p44, %p45
    %p47 = scmp.ne.s32.totalorder %s36, %s37
    %p48 = scmp.eq.s32.totalorder %s14, 0
    %p49 = por %p47, %p48
    %p50 = scmp.ne.s32.totalorder %s36, %s37
    %p51 = scmp.eq.s32.totalorder %s15, 3
    %p52 = por %p50, %p51
    %p54 = scmp.ne.s32.totalorder %s37, %s53
    %p55 = scmp.eq.s32.totalorder %s15, 0
    %p56 = por %p54, %p55
    %s58 = sadd.s32 %s57, 1
    %p61 = scmp.eq.s32.totalorder %s9, 3
    %p62 = scmp.ne.s32.totalorder %s57, %s59
    %p63 = scmp.eq.s32.totalorder %s9, 0
    %p64 = por %p62, %p63
    %p65 = scmp.ne.s32.totalorder %s57, %s59
    %p66 = scmp.eq.s32.totalorder %s14, 3
    %p67 = por %p65, %p66
    %p68 = scmp.ne.s32.totalorder %s59, %s60
    %p69 = scmp.eq.s32.totalorder %s14, 0
    %p70 = por %p68, %p69
    %p71 = scmp.ne.s32.totalorder %s59, %s60
    %p72 = scmp.eq.s32.totalorder %s15, 3
    %p73 = por %p71, %p72
    %p75 = scmp.ne.s32.totalorder %s60, %s74
    %p76 = scmp.eq.s32.totalorder %s15, 0
    %p77 = por %p75, %p76
    %s79 = sadd.s32 %s78, 1
    %p82 = scmp.eq.s32.totalorder %s9, 3
    %p83 = scmp.ne.s32.totalorder %s78, %s80
    %p84 = scmp.eq.s32.totalorder %s9, 0
    %p85 = por %p83, %p84
    %p86 = scmp.ne.s32.totalorder %s78, %s80
    %p87 = scmp.eq.s32.totalorder %s14, 3
    %p88 = por %p86, %p87
    %p89 = scmp.ne.s32.totalorder %s80, %s81
    %p90 = scmp.eq.s32.totalorder %s14, 0
    %p91 = por %p89, %p90
    %p92 = scmp.ne.s32.totalorder %s80, %s81
    %p93 = scmp.eq.s32.totalorder %s15, 3
    %p94 = por %p92, %p93
    %p96 = scmp.ne.s32.totalorder %s81, %s95
    %p97 = scmp.eq.s32.totalorder %s15, 0
    %p98 = por %p96, %p97
    %s99 = ssub.s32 %s16, %s28
    %s100 = ssub.s32 %s17, %s24
    %s101 = sor.u32 %s99, %s100
    %p102 = scmp.eq.s32.totalorder %s101, 0
    %s104 = sadd.s32 %s103, 1
    %s105 = scalar_select %p102, %s103, %s104
    %p108 = pneg %p102
    %p109 = scmp.eq.s32.totalorder %s9, 3
    %p110 = por %p108, %p109
    %p111 = scmp.ne.s32.totalorder %s103, %s106
    %p112 = scmp.eq.s32.totalorder %s9, 0
    %p113 = por %p111, %p112
    %p114 = scmp.ne.s32.totalorder %s103, %s106
    %p115 = scmp.eq.s32.totalorder %s14, 3
    %p116 = por %p114, %p115
    %p117 = scmp.ne.s32.totalorder %s106, %s107
    %p118 = scmp.eq.s32.totalorder %s14, 0
    %p119 = por %p117, %p118
    %p120 = scmp.ne.s32.totalorder %s106, %s107
    %p121 = scmp.eq.s32.totalorder %s15, 3
    %p122 = por %p120, %p121
    %p124 = scmp.ne.s32.totalorder %s107, %s123
    %p125 = scmp.eq.s32.totalorder %s15, 0
    %p126 = por %p124, %p125
    %p127 = scmp.le.s32.totalorder 1, %s9
    %p128 = scmp.lt.s32.totalorder %s9, 5
    %p129 = pnand %p127, %p128
    %p130 = pneg %p129
    // Predicated region
    $region9: #{encoding_block.5} parent=5 // pred_check
      _
    $region10: #{encoding_block.5} parent=5 // pred_check_branch
      %132 = sbr.rel (%p129) target = $region12
    $region11: #{encoding_block.5} parent=5 // pred_region
      %s133 = ssub.s32 %s9, 1
      // Predicated region
      $region13: #{encoding_block.5} parent=11 // pred_check
        %p134 = pneg %p70
      $region14: #{encoding_block.5} parent=11 // pred_check_branch
        %136 = sbr.rel (%p134) target = $region16
      $region15: #{encoding_block.5} parent=11 // pred_region
        _
      $region16: #{encoding_block.5} parent=11 // pred_fallthru
        _
      // Predicated region
      $region17: #{encoding_block.5} parent=11 // pred_check
        %p137 = pneg %p91
      $region18: #{encoding_block.5} parent=11 // pred_check_branch
        %139 = sbr.rel (%p137) target = $region20
      $region19: #{encoding_block.5} parent=11 // pred_region
        _
      $region20: #{encoding_block.5} parent=11 // pred_fallthru
        _
    $region12: #{encoding_block.5} parent=5 // pred_fallthru
      _
    %p140 = scmp.lt.s32.totalorder %s9, 4
    // Predicated region
    $region21: #{encoding_block.5} parent=5 // pred_check
      %p141 = pneg %p140
    $region22: #{encoding_block.5} parent=5 // pred_check_branch
      %143 = sbr.rel (%p141) target = $region24
    $region23: #{encoding_block.5} parent=5 // pred_region
      // Predicated region
      $region25: #{encoding_block.5} parent=23 // pred_check
        %p144 = pneg %p43
      $region26: #{encoding_block.5} parent=23 // pred_check_branch
        %146 = sbr.rel (%p144) target = $region28
      $region27: #{encoding_block.5} parent=23 // pred_region
        %s147 = smul.u32 8, %s17
        %p148 = scmp.lt.s32.totalorder %s16, 1
        %s149 = scalar_select %p148, %s16, 1
        %p150 = scmp.lt.s32.totalorder %s147, 15
        %s151 = scalar_select %p150, %s147, 15
        %s152 = smul.addr %s151, 2
        %s153 = smul.addr %s149, 32
        %s154 = sadd.s32 %s152, %s153
        %s155 = smul.addr %s154, 8
        %s156 = scalar_lea.vmem %s0, %s155
        %s157 = smul.u32 8, %s17
      $region28: #{encoding_block.5} parent=23 // pred_fallthru
        _
    $region24: #{encoding_block.5} parent=5 // pred_fallthru
      _
    %p158 = scmp.le.s32.totalorder 1, %s9
    %p159 = scmp.lt.s32.totalorder %s9, 5
    %p160 = pnand %p158, %p159
    %p161 = pneg %p160
    // Predicated region
    $region29: #{encoding_block.5} parent=5 // pred_check
      _
    $region30: #{encoding_block.5} parent=5 // pred_check_branch
      %163 = sbr.rel (%p160) target = $region32
    $region31: #{encoding_block.5} parent=5 // pred_region
      %s164 = ssub.s32 %s9, 1
      %s165 = smul.u32 8, %s19
      %p166 = scmp.lt.s32.totalorder %s18, 1
      %s167 = scalar_select %p166, %s18, 1
      %p168 = scmp.lt.s32.totalorder %s165, 15
      %s169 = scalar_select %p168, %s165, 15
      %s170 = smul.addr %s169, 2
      %s171 = smul.addr %s167, 32
      %s172 = sadd.s32 %s170, %s171
      %s173 = smul.addr %s172, 8
      %s174 = scalar_lea.vmem %s0, %s173
      %p175 = pneg %p49
      %p176 = pneg %p46
      %p177 = pneg %p70
      %p178 = pneg %p67
      %p179 = pneg %p91
      %p180 = pneg %p88
      %p181 = pneg %p119
      %p182 = pneg %p116
      %s183 = smul.u32 8, %s19
      %p184 = scmp.lt.s32.totalorder %s18, 1
      %s185 = scalar_select %p184, %s18, 1
      %p186 = scmp.lt.s32.totalorder %s183, 15
      %s187 = scalar_select %p186, %s183, 15
      %s188 = smul.addr %s187, 2
      %s189 = smul.addr %s185, 32
      %s190 = sadd.s32 %s188, %s189
      %s191 = smul.addr %s190, 8
      %s192 = scalar_lea.vmem %s3, %s191
      %s193 = smul.u32 8, %s19
      %p194 = scmp.lt.s32.totalorder %s18, 1
      %s195 = scalar_select %p194, %s18, 1
      %p196 = scmp.lt.s32.totalorder %s193, 15
      %s197 = scalar_select %p196, %s193, 15
      %s198 = smul.addr %s197, 2
      %s199 = smul.addr %s195, 32
      %s200 = sadd.s32 %s198, %s199
      %s201 = smul.addr %s200, 8
      %s202 = scalar_lea.vmem %s0, %s201
      %s203 = smul.u32 8, %s19
      %s204 = smul.u32 8, %s19
      %p205 = scmp.lt.s32.totalorder %s18, 1
      %s206 = scalar_select %p205, %s18, 1
      %p207 = scmp.lt.s32.totalorder %s204, 15
      %s208 = scalar_select %p207, %s204, 15
      %s209 = smul.addr %s208, 2
      %s210 = smul.addr %s206, 32
      %s211 = sadd.s32 %s209, %s210
      %s212 = smul.addr %s211, 8
      %s213 = scalar_lea.vmem %s3, %s212
      %s214 = smul.u32 8, %s19
      %v215 = vld [vmem:[%s202] sm:$0xff]
      %v216 = vld [vmem:[%s202 + $0x8] sm:$0xff]
      %v217 = vld [vmem:[%s202 + $0x10] sm:$0xff]
      %v218 = vld [vmem:[%s202 + $0x18] sm:$0xff]
      %v219 = vld [vmem:[%s202 + $0x20] sm:$0xff]
      %v220 = vld [vmem:[%s202 + $0x28] sm:$0xff]
      %v221 = vld [vmem:[%s202 + $0x30] sm:$0xff]
      %v222 = vld [vmem:[%s202 + $0x38] sm:$0xff]
      %v223 = vld [vmem:[%s202 + $0x40] sm:$0xff]
      %v224 = vld [vmem:[%s202 + $0x48] sm:$0xff]
      %v225 = vld [vmem:[%s202 + $0x50] sm:$0xff]
      %v226 = vld [vmem:[%s202 + $0x58] sm:$0xff]
      %v227 = vld [vmem:[%s202 + $0x60] sm:$0xff]
      %v228 = vld [vmem:[%s202 + $0x68] sm:$0xff]
      %v229 = vld [vmem:[%s202 + $0x70] sm:$0xff]
      %v230 = vld [vmem:[%s202 + $0x78] sm:$0xff]
      %v231 = vld [vmem:[%s1] sm:$0x1]
      %v233 = vlaneseq
      %v234 = vshrl.u32 %v233, 7
      %v235 = vsub.s32 0, %v234
      %v236 = vrot.slane %v231, %v235
      %v238 = vmul.f32 %v215, %v236
      %v239 = vmul.f32 %v216, %v236
      %v240 = vmul.f32 %v217, %v236
      %v241 = vmul.f32 %v218, %v236
      %v242 = vmul.f32 %v219, %v236
      %v243 = vmul.f32 %v220, %v236
      %v244 = vmul.f32 %v221, %v236
      %v245 = vmul.f32 %v222, %v236
      %v246 = vmul.f32 %v223, %v236
      %v247 = vmul.f32 %v224, %v236
      %v248 = vmul.f32 %v225, %v236
      %v249 = vmul.f32 %v226, %v236
      %v250 = vmul.f32 %v227, %v236
      %v251 = vmul.f32 %v228, %v236
      %v252 = vmul.f32 %v229, %v236
      %v253 = vmul.f32 %v230, %v236
      %v254 = vld [vmem:[%s2] sm:$0x1]
      %v256 = vlaneseq
      %v257 = vshrl.u32 %v256, 7
      %v258 = vsub.s32 0, %v257
      %v259 = vrot.slane %v254, %v258
      %v261 = vadd.f32 %v238, %v259
      %v262 = vadd.f32 %v239, %v259
      %v263 = vadd.f32 %v240, %v259
      %v264 = vadd.f32 %v241, %v259
      %v265 = vadd.f32 %v242, %v259
      %v266 = vadd.f32 %v243, %v259
      %v267 = vadd.f32 %v244, %v259
      %v268 = vadd.f32 %v245, %v259
      %v269 = vadd.f32 %v246, %v259
      %v270 = vadd.f32 %v247, %v259
      %v271 = vadd.f32 %v248, %v259
      %v272 = vadd.f32 %v249, %v259
      %v273 = vadd.f32 %v250, %v259
      %v274 = vadd.f32 %v251, %v259
      %v275 = vadd.f32 %v252, %v259
      %v276 = vadd.f32 %v253, %v259
      %v277 = vmax.f32 %v261, 0.0
      %v278 = vmax.f32 %v262, 0.0
      %v279 = vmax.f32 %v263, 0.0
      %v280 = vmax.f32 %v264, 0.0
      %v281 = vmax.f32 %v265, 0.0
      %v282 = vmax.f32 %v266, 0.0
      %v283 = vmax.f32 %v267, 0.0
      %v284 = vmax.f32 %v268, 0.0
      %v285 = vmax.f32 %v269, 0.0
      %v286 = vmax.f32 %v270, 0.0
      %v287 = vmax.f32 %v271, 0.0
      %v288 = vmax.f32 %v272, 0.0
      %v289 = vmax.f32 %v273, 0.0
      %v290 = vmax.f32 %v274, 0.0
      %v291 = vmax.f32 %v275, 0.0
      %v292 = vmax.f32 %v276, 0.0
      %293 = vst [vmem:[%s213] sm:$0xff] %v277
      %294 = vst [vmem:[%s213 + $0x8] sm:$0xff] %v278
      %295 = vst [vmem:[%s213 + $0x10] sm:$0xff] %v279
      %296 = vst [vmem:[%s213 + $0x18] sm:$0xff] %v280
      %297 = vst [vmem:[%s213 + $0x20] sm:$0xff] %v281
      %298 = vst [vmem:[%s213 + $0x28] sm:$0xff] %v282
      %299 = vst [vmem:[%s213 + $0x30] sm:$0xff] %v283
      %300 = vst [vmem:[%s213 + $0x38] sm:$0xff] %v284
      %301 = vst [vmem:[%s213 + $0x40] sm:$0xff] %v285
      %302 = vst [vmem:[%s213 + $0x48] sm:$0xff] %v286
      %303 = vst [vmem:[%s213 + $0x50] sm:$0xff] %v287
      %304 = vst [vmem:[%s213 + $0x58] sm:$0xff] %v288
      %305 = vst [vmem:[%s213 + $0x60] sm:$0xff] %v289
      %306 = vst [vmem:[%s213 + $0x68] sm:$0xff] %v290
      %307 = vst [vmem:[%s213 + $0x70] sm:$0xff] %v291
      %308 = vst [vmem:[%s213 + $0x78] sm:$0xff] %v292
      %s309 = smul.u32 8, %s19
      %p310 = scmp.lt.s32.totalorder %s18, 1
      %s311 = scalar_select %p310, %s18, 1
      %p312 = scmp.lt.s32.totalorder %s309, 15
      %s313 = scalar_select %p312, %s309, 15
      %s314 = smul.addr %s313, 2
      %s315 = smul.addr %s311, 32
      %s316 = sadd.s32 %s314, %s315
      %s317 = smul.addr %s316, 8
      %s318 = scalar_lea.vmem %s3, %s317
      // Predicated region
      $region33: #{encoding_block.5} parent=31 // pred_check
        %p319 = pneg %p116
      $region34: #{encoding_block.5} parent=31 // pred_check_branch
        %321 = sbr.rel (%p319) target = $region36
      $region35: #{encoding_block.5} parent=31 // pred_region
        %s322 = smul.u32 8, %s19
      $region36: #{encoding_block.5} parent=31 // pred_fallthru
        _
    $region32: #{encoding_block.5} parent=5 // pred_fallthru
      _
    %p323 = scmp.le.s32.totalorder 2, %s9
    // Predicated region
    $region37: #{encoding_block.5} parent=5 // pred_check
      %p324 = pneg %p323
    $region38: #{encoding_block.5} parent=5 // pred_check_branch
      %326 = sbr.rel (%p324) target = $region40
    $region39: #{encoding_block.5} parent=5 // pred_region
      %s327 = ssub.s32 %s9, 2
      // Predicated region
      $region41: #{encoding_block.5} parent=39 // pred_check
        %p328 = pneg %p122
      $region42: #{encoding_block.5} parent=39 // pred_check_branch
        %330 = sbr.rel (%p328) target = $region44
      $region43: #{encoding_block.5} parent=39 // pred_region
        %s331 = smul.u32 8, %s21
        %p332 = scmp.lt.s32.totalorder %s20, 1
        %s333 = scalar_select %p332, %s20, 1
        %p334 = scmp.lt.s32.totalorder %s331, 15
        %s335 = scalar_select %p334, %s331, 15
        %s336 = smul.addr %s335, 2
        %s337 = smul.addr %s333, 32
        %s338 = sadd.s32 %s336, %s337
        %s339 = smul.addr %s338, 8
        %s340 = scalar_lea.vmem %s3, %s339
      $region44: #{encoding_block.5} parent=39 // pred_fallthru
        _
    $region40: #{encoding_block.5} parent=5 // pred_fallthru
      _
  $region6: #{encoding_block.5} parent=0 // loop_footer
    %s13 = sadd.s32 1, %s9
  $region7: #{encoding_block.5} parent=0 // loop_footer_branch
    %8 = sbr.rel target = $region3
  $region8: #{encoding_block.5} parent=0 // loop_exit
    _

// kernel: encoding_block.3
$region0: #{encoding_block.3}
  #allocation0 [shape = 'u32[]', space=smem, size = 0x4, offset = 0x4, fixed_abs, tag = 'smem constant byte address 0x4 - core index']
  #allocation1 [shape = 'u32[144,128]{1,0:T(1,128)}', space=vmem, size = 0x12000, scoped, tag = 'internal scratch']
  %s0 = inlined_call_operand.vmem [shape: f32[2,16,16,128], index: 0, kind: input, shape index: {}, may-alias: {0,1,2}]
  %s1 = inlined_call_operand.vmem [shape: f32[2,16,16,128], index: 1, kind: input, shape index: {}, may-alias: {0,1,2}]
  %s2 = inlined_call_operand.vmem [shape: f32[2,16,16,128], index: 2, kind: input, shape index: {}, may-alias: {0,1,2}]
  %s3 = inlined_call_operand.vmem [shape: f32[1152,128], index: 3, kind: input, shape index: {}]
  %s4 = inlined_call_operand.vmem [shape: f32[1,128], index: 4, kind: input, shape index: {}]
  %s5 = inlined_call_operand.vmem [shape: f32[1,128], index: 5, kind: input, shape index: {}]
  %s6 = inlined_call_operand.vmem [shape: f32[2,16,16,128], index: 6, kind: output, shape index: {0}]
  %s7 = inlined_call_operand.vmem [shape: f32[2,2,8,128], index: 7, kind: output, shape index: {1}]
  %8 = xla_tuple %s6, %s7
  %s9 = sld [smem:[#allocation0]]
  $region65: #{encoding_block.3} parent=0
    _
  %s11 = ssub.s32 1, %s9
  %s12 = scalar_select 0, %s11, %s9
  loop: start=0, step=1, limit=6
  $region2: #{encoding_block.3} parent=0 // loop_pre_header
    _
  $region3: #{encoding_block.3} parent=0 // loop_header
    %s14 = sphi 0, %s18
    %p15 = scmp.ge.s32.totalorder %s14, 6
    %s21 = sphi 0, %s33
    %s22 = sphi 0, %s29
    %s23 = sphi 0, %s21
    %s24 = sphi 0, %s22
    %s25 = sphi 0, %s23
    %s26 = sphi 0, %s24
    %s38 = sphi 0, %s40
    %s41 = sphi 0, %s38
    %s42 = sphi 0, %s41
    %s58 = sphi 0, %s42
    %s74 = sphi 0, %s76
    %s77 = sphi 0, %s74
    %s78 = sphi 0, %s77
    %s94 = sphi 0, %s78
    %s110 = sphi 0, %s112
    %s113 = sphi 0, %s110
    %s114 = sphi 0, %s113
    %s130 = sphi 0, %s114
    %s134 = sphi 0, %s134
    %s136 = sphi 0, %s134
    %s137 = sphi 0, %s136
    %s151 = sphi 0, %s137
    %s155 = sphi 0, %s155
    %s157 = sphi 0, %s155
    %s158 = sphi 0, %s157
    %s172 = sphi 0, %s158
    %s176 = sphi 0, %s176
    %s178 = sphi 0, %s176
    %s179 = sphi 0, %s178
    %s193 = sphi 0, %s179
    %s201 = sphi 0, %s203
    %s204 = sphi 0, %s201
    %s205 = sphi 0, %s204
    %s221 = sphi 0, %s205
    %s229 = sphi 0, %s231
    %s232 = sphi 0, %s229
    %s233 = sphi 0, %s232
    %s249 = sphi 0, %s233
  $region4: #{encoding_block.3} parent=0 // loop_header_branch
    %17 = sbr.rel (%p15) target = $region8
  $region5: #{encoding_block.3} parent=0 // loop_body
    %s19 = ssub.s32 %s14, 1
    %s20 = ssub.s32 %s14, 2
    %s27 = sadd.s32 1, %s22
    %p28 = scmp.ge.s32.totalorder %s27, 2
    %s29 = scalar_select %p28, 0, %s27
    %s30 = sadd.s32 1, %s21
    %s31 = scalar_select %p28, %s30, %s21
    %p32 = scmp.ge.s32.totalorder %s31, 2
    %s33 = scalar_select %p32, 0, %s31
    %s34 = ssub.s32 %s21, %s33
    %s35 = ssub.s32 %s22, %s29
    %s36 = sor.u32 %s34, %s35
    %p37 = scmp.eq.s32.totalorder %s36, 0
    %s39 = sadd.s32 %s38, 1
    %s40 = scalar_select %p37, %s38, %s39
    %p43 = pneg %p37
    %p44 = scmp.eq.s32.totalorder %s14, 3
    %p45 = por %p43, %p44
    %p46 = scmp.ne.s32.totalorder %s38, %s41
    %p47 = scmp.eq.s32.totalorder %s14, 0
    %p48 = por %p46, %p47
    %p49 = scmp.ne.s32.totalorder %s38, %s41
    %p50 = scmp.eq.s32.totalorder %s19, 3
    %p51 = por %p49, %p50
    %p52 = scmp.ne.s32.totalorder %s41, %s42
    %p53 = scmp.eq.s32.totalorder %s19, 0
    %p54 = por %p52, %p53
    %p55 = scmp.ne.s32.totalorder %s41, %s42
    %p56 = scmp.eq.s32.totalorder %s20, 3
    %p57 = por %p55, %p56
    %p59 = scmp.ne.s32.totalorder %s42, %s58
    %p60 = scmp.eq.s32.totalorder %s20, 0
    %p61 = por %p59, %p60
    %s62 = smul.u32 %s22, 8
    %s63 = ssub.s32 %s62, 1
    %p64 = scmp.gt.s32.totalorder %s63, 0
    %s65 = scalar_select %p64, %s63, 0
    %s66 = smul.u32 %s29, 8
    %s67 = ssub.s32 %s66, 1
    %p68 = scmp.gt.s32.totalorder %s67, 0
    %s69 = scalar_select %p68, %s67, 0
    %s70 = ssub.s32 %s21, %s33
    %s71 = ssub.s32 %s65, %s69
    %s72 = sor.u32 %s70, %s71
    %p73 = scmp.eq.s32.totalorder %s72, 0
    %s75 = sadd.s32 %s74, 1
    %s76 = scalar_select %p73, %s74, %s75
    %p79 = pneg %p73
    %p80 = scmp.eq.s32.totalorder %s14, 3
    %p81 = por %p79, %p80
    %p82 = scmp.ne.s32.totalorder %s74, %s77
    %p83 = scmp.eq.s32.totalorder %s14, 0
    %p84 = por %p82, %p83
    %p85 = scmp.ne.s32.totalorder %s74, %s77
    %p86 = scmp.eq.s32.totalorder %s19, 3
    %p87 = por %p85, %p86
    %p88 = scmp.ne.s32.totalorder %s77, %s78
    %p89 = scmp.eq.s32.totalorder %s19, 0
    %p90 = por %p88, %p89
    %p91 = scmp.ne.s32.totalorder %s77, %s78
    %p92 = scmp.eq.s32.totalorder %s20, 3
    %p93 = por %p91, %p92
    %p95 = scmp.ne.s32.totalorder %s78, %s94
    %p96 = scmp.eq.s32.totalorder %s20, 0
    %p97 = por %p95, %p96
    %s98 = sadd.s32 %s22, 1
    %s99 = smul.u32 %s98, 8
    %p100 = scmp.lt.s32.totalorder %s99, 15
    %s101 = scalar_select %p100, %s99, 15
    %s102 = sadd.s32 %s29, 1
    %s103 = smul.u32 %s102, 8
    %p104 = scmp.lt.s32.totalorder %s103, 15
    %s105 = scalar_select %p104, %s103, 15
    %s106 = ssub.s32 %s21, %s33
    %s107 = ssub.s32 %s101, %s105
    %s108 = sor.u32 %s106, %s107
    %p109 = scmp.eq.s32.totalorder %s108, 0
    %s111 = sadd.s32 %s110, 1
    %s112 = scalar_select %p109, %s110, %s111
    %p115 = pneg %p109
    %p116 = scmp.eq.s32.totalorder %s14, 3
    %p117 = por %p115, %p116
    %p118 = scmp.ne.s32.totalorder %s110, %s113
    %p119 = scmp.eq.s32.totalorder %s14, 0
    %p120 = por %p118, %p119
    %p121 = scmp.ne.s32.totalorder %s110, %s113
    %p122 = scmp.eq.s32.totalorder %s19, 3
    %p123 = por %p121, %p122
    %p124 = scmp.ne.s32.totalorder %s113, %s114
    %p125 = scmp.eq.s32.totalorder %s19, 0
    %p126 = por %p124, %p125
    %p127 = scmp.ne.s32.totalorder %s113, %s114
    %p128 = scmp.eq.s32.totalorder %s20, 3
    %p129 = por %p127, %p128
    %p131 = scmp.ne.s32.totalorder %s114, %s130
    %p132 = scmp.eq.s32.totalorder %s20, 0
    %p133 = por %p131, %p132
    %s135 = sadd.s32 %s134, 1
    %p138 = scmp.eq.s32.totalorder %s14, 3
    %p139 = scmp.ne.s32.totalorder %s134, %s136
    %p140 = scmp.eq.s32.totalorder %s14, 0
    %p141 = por %p139, %p140
    %p142 = scmp.ne.s32.totalorder %s134, %s136
    %p143 = scmp.eq.s32.totalorder %s19, 3
    %p144 = por %p142, %p143
    %p145 = scmp.ne.s32.totalorder %s136, %s137
    %p146 = scmp.eq.s32.totalorder %s19, 0
    %p147 = por %p145, %p146
    %p148 = scmp.ne.s32.totalorder %s136, %s137
    %p149 = scmp.eq.s32.totalorder %s20, 3
    %p150 = por %p148, %p149
    %p152 = scmp.ne.s32.totalorder %s137, %s151
    %p153 = scmp.eq.s32.totalorder %s20, 0
    %p154 = por %p152, %p153
    %s156 = sadd.s32 %s155, 1
    %p159 = scmp.eq.s32.totalorder %s14, 3
    %p160 = scmp.ne.s32.totalorder %s155, %s157
    %p161 = scmp.eq.s32.totalorder %s14, 0
    %p162 = por %p160, %p161
    %p163 = scmp.ne.s32.totalorder %s155, %s157
    %p164 = scmp.eq.s32.totalorder %s19, 3
    %p165 = por %p163, %p164
    %p166 = scmp.ne.s32.totalorder %s157, %s158
    %p167 = scmp.eq.s32.totalorder %s19, 0
    %p168 = por %p166, %p167
    %p169 = scmp.ne.s32.totalorder %s157, %s158
    %p170 = scmp.eq.s32.totalorder %s20, 3
    %p171 = por %p169, %p170
    %p173 = scmp.ne.s32.totalorder %s158, %s172
    %p174 = scmp.eq.s32.totalorder %s20, 0
    %p175 = por %p173, %p174
    %s177 = sadd.s32 %s176, 1
    %p180 = scmp.eq.s32.totalorder %s14, 3
    %p181 = scmp.ne.s32.totalorder %s176, %s178
    %p182 = scmp.eq.s32.totalorder %s14, 0
    %p183 = por %p181, %p182
    %p184 = scmp.ne.s32.totalorder %s176, %s178
    %p185 = scmp.eq.s32.totalorder %s19, 3
    %p186 = por %p184, %p185
    %p187 = scmp.ne.s32.totalorder %s178, %s179
    %p188 = scmp.eq.s32.totalorder %s19, 0
    %p189 = por %p187, %p188
    %p190 = scmp.ne.s32.totalorder %s178, %s179
    %p191 = scmp.eq.s32.totalorder %s20, 3
    %p192 = por %p190, %p191
    %p194 = scmp.ne.s32.totalorder %s179, %s193
    %p195 = scmp.eq.s32.totalorder %s20, 0
    %p196 = por %p194, %p195
    %s197 = ssub.s32 %s21, %s33
    %s198 = ssub.s32 %s22, %s29
    %s199 = sor.u32 %s197, %s198
    %p200 = scmp.eq.s32.totalorder %s199, 0
    %s202 = sadd.s32 %s201, 1
    %s203 = scalar_select %p200, %s201, %s202
    %p206 = pneg %p200
    %p207 = scmp.eq.s32.totalorder %s14, 3
    %p208 = por %p206, %p207
    %p209 = scmp.ne.s32.totalorder %s201, %s204
    %p210 = scmp.eq.s32.totalorder %s14, 0
    %p211 = por %p209, %p210
    %p212 = scmp.ne.s32.totalorder %s201, %s204
    %p213 = scmp.eq.s32.totalorder %s19, 3
    %p214 = por %p212, %p213
    %p215 = scmp.ne.s32.totalorder %s204, %s205
    %p216 = scmp.eq.s32.totalorder %s19, 0
    %p217 = por %p215, %p216
    %p218 = scmp.ne.s32.totalorder %s204, %s205
    %p219 = scmp.eq.s32.totalorder %s20, 3
    %p220 = por %p218, %p219
    %p222 = scmp.ne.s32.totalorder %s205, %s221
    %p223 = scmp.eq.s32.totalorder %s20, 0
    %p224 = por %p222, %p223
    %s225 = ssub.s32 %s21, %s33
    %s226 = ssub.s32 %s22, %s29
    %s227 = sor.u32 %s225, %s226
    %p228 = scmp.eq.s32.totalorder %s227, 0
    %s230 = sadd.s32 %s229, 1
    %s231 = scalar_select %p228, %s229, %s230
    %p234 = pneg %p228
    %p235 = scmp.eq.s32.totalorder %s14, 3
    %p236 = por %p234, %p235
    %p237 = scmp.ne.s32.totalorder %s229, %s232
    %p238 = scmp.eq.s32.totalorder %s14, 0
    %p239 = por %p237, %p238
    %p240 = scmp.ne.s32.totalorder %s229, %s232
    %p241 = scmp.eq.s32.totalorder %s19, 3
    %p242 = por %p240, %p241
    %p243 = scmp.ne.s32.totalorder %s232, %s233
    %p244 = scmp.eq.s32.totalorder %s19, 0
    %p245 = por %p243, %p244
    %p246 = scmp.ne.s32.totalorder %s232, %s233
    %p247 = scmp.eq.s32.totalorder %s20, 3
    %p248 = por %p246, %p247
    %p250 = scmp.ne.s32.totalorder %s233, %s249
    %p251 = scmp.eq.s32.totalorder %s20, 0
    %p252 = por %p250, %p251
    %p253 = scmp.le.s32.totalorder 1, %s14
    %p254 = scmp.lt.s32.totalorder %s14, 5
    %p255 = pnand %p253, %p254
    %p256 = pneg %p255
    // Predicated region
    $region9: #{encoding_block.3} parent=5 // pred_check
      _
    $region10: #{encoding_block.3} parent=5 // pred_check_branch
      %258 = sbr.rel (%p255) target = $region12
    $region11: #{encoding_block.3} parent=5 // pred_region
      %s259 = ssub.s32 %s14, 1
      // Predicated region
      $region13: #{encoding_block.3} parent=11 // pred_check
        %p260 = pneg %p147
      $region14: #{encoding_block.3} parent=11 // pred_check_branch
        %262 = sbr.rel (%p260) target = $region16
      $region15: #{encoding_block.3} parent=11 // pred_region
        _
      $region16: #{encoding_block.3} parent=11 // pred_fallthru
        _
      // Predicated region
      $region17: #{encoding_block.3} parent=11 // pred_check
        %p263 = pneg %p168
      $region18: #{encoding_block.3} parent=11 // pred_check_branch
        %265 = sbr.rel (%p263) target = $region20
      $region19: #{encoding_block.3} parent=11 // pred_region
        _
      $region20: #{encoding_block.3} parent=11 // pred_fallthru
        _
      // Predicated region
      $region21: #{encoding_block.3} parent=11 // pred_check
        %p266 = pneg %p189
      $region22: #{encoding_block.3} parent=11 // pred_check_branch
        %268 = sbr.rel (%p266) target = $region24
      $region23: #{encoding_block.3} parent=11 // pred_region
        _
      $region24: #{encoding_block.3} parent=11 // pred_fallthru
        _
    $region12: #{encoding_block.3} parent=5 // pred_fallthru
      _
    %p269 = scmp.lt.s32.totalorder %s14, 4
    // Predicated region
    $region25: #{encoding_block.3} parent=5 // pred_check
      %p270 = pneg %p269
    $region26: #{encoding_block.3} parent=5 // pred_check_branch
      %272 = sbr.rel (%p270) target = $region28
    $region27: #{encoding_block.3} parent=5 // pred_region
      // Predicated region
      $region29: #{encoding_block.3} parent=27 // pred_check
        %p273 = pneg %p48
      $region30: #{encoding_block.3} parent=27 // pred_check_branch
        %275 = sbr.rel (%p273) target = $region32
      $region31: #{encoding_block.3} parent=27 // pred_region
        %s276 = smul.u32 8, %s22
        %p277 = scmp.lt.s32.totalorder %s21, 1
        %s278 = scalar_select %p277, %s21, 1
        %p279 = scmp.lt.s32.totalorder %s276, 15
        %s280 = scalar_select %p279, %s276, 15
        %s281 = smul.addr %s280, 2
        %s282 = smul.addr %s278, 32
        %s283 = sadd.s32 %s281, %s282
        %s284 = smul.addr %s283, 8
        %s285 = scalar_lea.vmem %s0, %s284
        %s286 = smul.u32 8, %s22
      $region32: #{encoding_block.3} parent=27 // pred_fallthru
        _
      // Predicated region
      $region33: #{encoding_block.3} parent=27 // pred_check
        %p287 = pneg %p84
      $region34: #{encoding_block.3} parent=27 // pred_check_branch
        %289 = sbr.rel (%p287) target = $region36
      $region35: #{encoding_block.3} parent=27 // pred_region
        %s290 = smul.u32 %s22, 8
        %s291 = ssub.s32 %s290, 1
        %p292 = scmp.gt.s32.totalorder %s291, 0
        %s293 = scalar_select %p292, %s291, 0
        %p294 = scmp.lt.s32.totalorder %s21, 1
        %s295 = scalar_select %p294, %s21, 1
        %p296 = scmp.lt.s32.totalorder %s293, 15
        %s297 = scalar_select %p296, %s293, 15
        %s298 = smul.addr %s297, 2
        %s299 = smul.addr %s295, 32
        %s300 = sadd.s32 %s298, %s299
        %s301 = smul.addr %s300, 8
        %s302 = scalar_lea.vmem %s1, %s301
        %s303 = smul.u32 %s22, 8
        %s304 = ssub.s32 %s303, 1
        %p305 = scmp.gt.s32.totalorder %s304, 0
        %s306 = scalar_select %p305, %s304, 0
      $region36: #{encoding_block.3} parent=27 // pred_fallthru
        _
      // Predicated region
      $region37: #{encoding_block.3} parent=27 // pred_check
        %p307 = pneg %p120
      $region38: #{encoding_block.3} parent=27 // pred_check_branch
        %309 = sbr.rel (%p307) target = $region40
      $region39: #{encoding_block.3} parent=27 // pred_region
        %s310 = sadd.s32 %s22, 1
        %s311 = smul.u32 %s310, 8
        %p312 = scmp.lt.s32.totalorder %s311, 15
        %s313 = scalar_select %p312, %s311, 15
        %p314 = scmp.lt.s32.totalorder %s21, 1
        %s315 = scalar_select %p314, %s21, 1
        %p316 = scmp.lt.s32.totalorder %s313, 15
        %s317 = scalar_select %p316, %s313, 15
        %s318 = smul.addr %s317, 2
        %s319 = smul.addr %s315, 32
        %s320 = sadd.s32 %s318, %s319
        %s321 = smul.addr %s320, 8
        %s322 = scalar_lea.vmem %s2, %s321
        %s323 = sadd.s32 %s22, 1
        %s324 = smul.u32 %s323, 8
        %p325 = scmp.lt.s32.totalorder %s324, 15
        %s326 = scalar_select %p325, %s324, 15
      $region40: #{encoding_block.3} parent=27 // pred_fallthru
        _
    $region28: #{encoding_block.3} parent=5 // pred_fallthru
      _
    %p327 = scmp.le.s32.totalorder 1, %s14
    %p328 = scmp.lt.s32.totalorder %s14, 5
    %p329 = pnand %p327, %p328
    %p330 = pneg %p329
    // Predicated region
    $region41: #{encoding_block.3} parent=5 // pred_check
      _
    $region42: #{encoding_block.3} parent=5 // pred_check_branch
      %332 = sbr.rel (%p329) target = $region44
    $region43: #{encoding_block.3} parent=5 // pred_region
      %s333 = ssub.s32 %s14, 1
      %s334 = smul.u32 8, %s24
      %p335 = scmp.lt.s32.totalorder %s23, 1
      %s336 = scalar_select %p335, %s23, 1
      %p337 = scmp.lt.s32.totalorder %s334, 15
      %s338 = scalar_select %p337, %s334, 15
      %s339 = smul.addr %s338, 2
      %s340 = smul.addr %s336, 32
      %s341 = sadd.s32 %s339, %s340
      %s342 = smul.addr %s341, 8
      %s343 = scalar_lea.vmem %s0, %s342
      %p344 = pneg %p54
      %p345 = pneg %p51
      %s346 = smul.u32 %s24, 8
      %s347 = ssub.s32 %s346, 1
      %p348 = scmp.gt.s32.totalorder %s347, 0
      %s349 = scalar_select %p348, %s347, 0
      %p350 = scmp.lt.s32.totalorder %s23, 1
      %s351 = scalar_select %p350, %s23, 1
      %p352 = scmp.lt.s32.totalorder %s349, 15
      %s353 = scalar_select %p352, %s349, 15
      %s354 = smul.addr %s353, 2
      %s355 = smul.addr %s351, 32
      %s356 = sadd.s32 %s354, %s355
      %s357 = smul.addr %s356, 8
      %s358 = scalar_lea.vmem %s1, %s357
      %p359 = pneg %p90
      %p360 = pneg %p87
      %s361 = sadd.s32 %s24, 1
      %s362 = smul.u32 %s361, 8
      %p363 = scmp.lt.s32.totalorder %s362, 15
      %s364 = scalar_select %p363, %s362, 15
      %p365 = scmp.lt.s32.totalorder %s23, 1
      %s366 = scalar_select %p365, %s23, 1
      %p367 = scmp.lt.s32.totalorder %s364, 15
      %s368 = scalar_select %p367, %s364, 15
      %s369 = smul.addr %s368, 2
      %s370 = smul.addr %s366, 32
      %s371 = sadd.s32 %s369, %s370
      %s372 = smul.addr %s371, 8
      %s373 = scalar_lea.vmem %s2, %s372
      %p374 = pneg %p126
      %p375 = pneg %p123
      %p376 = pneg %p147
      %p377 = pneg %p144
      %p378 = pneg %p168
      %p379 = pneg %p165
      %p380 = pneg %p189
      %p381 = pneg %p186
      %p382 = pneg %p217
      %p383 = pneg %p214
      %s384 = smul.u32 8, %s24
      %p385 = scmp.lt.s32.totalorder %s23, 1
      %s386 = scalar_select %p385, %s23, 1
      %p387 = scmp.lt.s32.totalorder %s384, 15
      %s388 = scalar_select %p387, %s384, 15
      %s389 = smul.addr %s388, 2
      %s390 = smul.addr %s386, 32
      %s391 = sadd.s32 %s389, %s390
      %s392 = smul.addr %s391, 8
      %s393 = scalar_lea.vmem %s6, %s392
      %p394 = pneg %p245
      %p395 = pneg %p242
      %p396 = scmp.lt.s32.totalorder %s23, 1
      %s397 = scalar_select %p396, %s23, 1
      %p398 = scmp.lt.s32.totalorder %s24, 1
      %s399 = scalar_select %p398, %s24, 1
      %s400 = smul.addr %s397, 2
      %s401 = sadd.s32 %s399, %s400
      %s402 = smul.addr %s401, 8
      %s403 = scalar_lea.vmem %s7, %s402
      %s404 = smul.u32 8, %s24
      %p405 = scmp.lt.s32.totalorder %s23, 1
      %s406 = scalar_select %p405, %s23, 1
      %p407 = scmp.lt.s32.totalorder %s404, 15
      %s408 = scalar_select %p407, %s404, 15
      %s409 = smul.addr %s408, 2
      %s410 = smul.addr %s406, 32
      %s411 = sadd.s32 %s409, %s410
      %s412 = smul.addr %s411, 8
      %s413 = scalar_lea.vmem %s0, %s412
      %s414 = smul.u32 8, %s24
      %s415 = smul.u32 %s24, 8
      %s416 = ssub.s32 %s415, 1
      %p417 = scmp.gt.s32.totalorder %s416, 0
      %s418 = scalar_select %p417, %s416, 0
      %p419 = scmp.lt.s32.totalorder %s23, 1
      %s420 = scalar_select %p419, %s23, 1
      %p421 = scmp.lt.s32.totalorder %s418, 15
      %s422 = scalar_select %p421, %s418, 15
      %s423 = smul.addr %s422, 2
      %s424 = smul.addr %s420, 32
      %s425 = sadd.s32 %s423, %s424
      %s426 = smul.addr %s425, 8
      %s427 = scalar_lea.vmem %s1, %s426
      %s428 = smul.u32 %s24, 8
      %s429 = ssub.s32 %s428, 1
      %p430 = scmp.gt.s32.totalorder %s429, 0
      %s431 = scalar_select %p430, %s429, 0
      %s432 = sadd.s32 %s24, 1
      %s433 = smul.u32 %s432, 8
      %p434 = scmp.lt.s32.totalorder %s433, 15
      %s435 = scalar_select %p434, %s433, 15
      %p436 = scmp.lt.s32.totalorder %s23, 1
      %s437 = scalar_select %p436, %s23, 1
      %p438 = scmp.lt.s32.totalorder %s435, 15
      %s439 = scalar_select %p438, %s435, 15
      %s440 = smul.addr %s439, 2
      %s441 = smul.addr %s437, 32
      %s442 = sadd.s32 %s440, %s441
      %s443 = smul.addr %s442, 8
      %s444 = scalar_lea.vmem %s2, %s443
      %s445 = sadd.s32 %s24, 1
      %s446 = smul.u32 %s445, 8
      %p447 = scmp.lt.s32.totalorder %s446, 15
      %s448 = scalar_select %p447, %s446, 15
      %s449 = smul.u32 8, %s24
      %p450 = scmp.lt.s32.totalorder %s23, 1
      %s451 = scalar_select %p450, %s23, 1
      %p452 = scmp.lt.s32.totalorder %s449, 15
      %s453 = scalar_select %p452, %s449, 15
      %s454 = smul.addr %s453, 2
      %s455 = smul.addr %s451, 32
      %s456 = sadd.s32 %s454, %s455
      %s457 = smul.addr %s456, 8
      %s458 = scalar_lea.vmem %s6, %s457
      %s459 = smul.u32 8, %s24
      %p460 = scmp.lt.s32.totalorder %s23, 1
      %s461 = scalar_select %p460, %s23, 1
      %p462 = scmp.lt.s32.totalorder %s24, 1
      %s463 = scalar_select %p462, %s24, 1
      %s464 = smul.addr %s461, 2
      %s465 = sadd.s32 %s463, %s464
      %s466 = smul.addr %s465, 8
      %s467 = scalar_lea.vmem %s7, %s466
      %v468 = vld [vmem:[%s413] sm:$0xff]
      %v469 = vld [vmem:[%s413 + $0x8] sm:$0xff]
      %v470 = vld [vmem:[%s413 + $0x10] sm:$0xff]
      %v471 = vld [vmem:[%s413 + $0x18] sm:$0xff]
      %v472 = vld [vmem:[%s413 + $0x20] sm:$0xff]
      %v473 = vld [vmem:[%s413 + $0x28] sm:$0xff]
      %v474 = vld [vmem:[%s413 + $0x30] sm:$0xff]
      %v475 = vld [vmem:[%s413 + $0x38] sm:$0xff]
      %v476 = vld [vmem:[%s413 + $0x40] sm:$0xff]
      %v477 = vld [vmem:[%s413 + $0x48] sm:$0xff]
      %v478 = vld [vmem:[%s413 + $0x50] sm:$0xff]
      %v479 = vld [vmem:[%s413 + $0x58] sm:$0xff]
      %v480 = vld [vmem:[%s413 + $0x60] sm:$0xff]
      %v481 = vld [vmem:[%s413 + $0x68] sm:$0xff]
      %v482 = vld [vmem:[%s413 + $0x70] sm:$0xff]
      %v483 = vld [vmem:[%s413 + $0x78] sm:$0xff]
      %v484 = vld [vmem:[%s427] sm:$0xff]
      %v485 = vld [vmem:[%s427 + $0x8] sm:$0xff]
      %v486 = vld [vmem:[%s444] sm:$0xff]
      %v487 = vld [vmem:[%s444 + $0x8] sm:$0xff]
      %p488 = scmp.eq.s32.totalorder %s24, 0
      %s489 = scalar_select %p488, 1, 0
      %v490 = vstv %s489
      %vm491 = vcmp.eq.s32.totalorder %v490, 1
      %v492 = vsel %vm491, 0.0, %v484
      %v493 = vsel %vm491, 0.0, %v485
      %p494 = scmp.eq.s32.totalorder %s24, 1
      %s495 = scalar_select %p494, 1, 0
      %v496 = vstv %s495
      %vm497 = vcmp.eq.s32.totalorder %v496, 1
      %v498 = vsel %vm497, 0.0, %v486
      %v499 = vsel %vm497, 0.0, %v487
      %v500 = vlaneseq
      %v501 = vshrl.u32 %v500, 7
      %v502 = vadd.s32 %v501, 8
      %v503 = vadd.s32 %v501, 16
      %v504 = vadd.s32 %v501, 24
      %v505 = vadd.s32 %v501, 32
      %v506 = vadd.s32 %v501, 40
      %v507 = vadd.s32 %v501, 48
      %v508 = vadd.s32 %v501, 56
      %v509 = vadd.s32 %v501, 64
      %v510 = vadd.s32 %v501, 72
      %v511 = vadd.s32 %v501, 80
      %v512 = vadd.s32 %v501, 88
      %v513 = vadd.s32 %v501, 96
      %v514 = vadd.s32 %v501, 104
      %v515 = vadd.s32 %v501, 112
      %v516 = vadd.s32 %v501, 120
      %v517 = vadd.s32 %v501, 128
      %v518 = vadd.s32 %v501, 136
      %v519 = vadd.s32 %v501, 144
      %v520 = vadd.s32 %v501, 152
      %vm521 = vcmp.lt.s32.totalorder %v501, 0
      %v522 = vsub.s32 0, %v501
      %v523 = vsel %vm521, %v522, %v501
      %v524 = vshrl.u32 %v523, 4
      %v525 = vand.u32 %v523, 15
      %v526 = vsub.s32 0, %v525
      %v527 = vsel %vm521, %v526, %v525
      %vm528 = vcmp.lt.s32.totalorder %v502, 0
      %v529 = vsub.s32 0, %v502
      %v530 = vsel %vm528, %v529, %v502
      %v531 = vshrl.u32 %v530, 4
      %v532 = vand.u32 %v530, 15
      %v533 = vsub.s32 0, %v532
      %v534 = vsel %vm528, %v533, %v532
      %vm535 = vcmp.lt.s32.totalorder %v503, 0
      %v536 = vsub.s32 0, %v503
      %v537 = vsel %vm535, %v536, %v503
      %v538 = vshrl.u32 %v537, 4
      %v539 = vand.u32 %v537, 15
      %v540 = vsub.s32 0, %v539
      %v541 = vsel %vm535, %v540, %v539
      %vm542 = vcmp.lt.s32.totalorder %v504, 0
      %v543 = vsub.s32 0, %v504
      %v544 = vsel %vm542, %v543, %v504
      %v545 = vshrl.u32 %v544, 4
      %v546 = vand.u32 %v544, 15
      %v547 = vsub.s32 0, %v546
      %v548 = vsel %vm542, %v547, %v546
      %vm549 = vcmp.lt.s32.totalorder %v505, 0
      %v550 = vsub.s32 0, %v505
      %v551 = vsel %vm549, %v550, %v505
      %v552 = vshrl.u32 %v551, 4
      %v553 = vand.u32 %v551, 15
      %v554 = vsub.s32 0, %v553
      %v555 = vsel %vm549, %v554, %v553
      %vm556 = vcmp.lt.s32.totalorder %v506, 0
      %v557 = vsub.s32 0, %v506
      %v558 = vsel %vm556, %v557, %v506
      %v559 = vshrl.u32 %v558, 4
      %v560 = vand.u32 %v558, 15
      %v561 = vsub.s32 0, %v560
      %v562 = vsel %vm556, %v561, %v560
      %vm563 = vcmp.lt.s32.totalorder %v507, 0
      %v564 = vsub.s32 0, %v507
      %v565 = vsel %vm563, %v564, %v507
      %v566 = vshrl.u32 %v565, 4
      %v567 = vand.u32 %v565, 15
      %v568 = vsub.s32 0, %v567
      %v569 = vsel %vm563, %v568, %v567
      %vm570 = vcmp.lt.s32.totalorder %v508, 0
      %v571 = vsub.s32 0, %v508
      %v572 = vsel %vm570, %v571, %v508
      %v573 = vshrl.u32 %v572, 4
      %v574 = vand.u32 %v572, 15
      %v575 = vsub.s32 0, %v574
      %v576 = vsel %vm570, %v575, %v574
      %vm577 = vcmp.lt.s32.totalorder %v509, 0
      %v578 = vsub.s32 0, %v509
      %v579 = vsel %vm577, %v578, %v509
      %v580 = vshrl.u32 %v579, 4
      %v581 = vand.u32 %v579, 15
      %v582 = vsub.s32 0, %v581
      %v583 = vsel %vm577, %v582, %v581
      %vm584 = vcmp.lt.s32.totalorder %v510, 0
      %v585 = vsub.s32 0, %v510
      %v586 = vsel %vm584, %v585, %v510
      %v587 = vshrl.u32 %v586, 4
      %v588 = vand.u32 %v586, 15
      %v589 = vsub.s32 0, %v588
      %v590 = vsel %vm584, %v589, %v588
      %vm591 = vcmp.lt.s32.totalorder %v511, 0
      %v592 = vsub.s32 0, %v511
      %v593 = vsel %vm591, %v592, %v511
      %v594 = vshrl.u32 %v593, 4
      %v595 = vand.u32 %v593, 15
      %v596 = vsub.s32 0, %v595
      %v597 = vsel %vm591, %v596, %v595
      %vm598 = vcmp.lt.s32.totalorder %v512, 0
      %v599 = vsub.s32 0, %v512
      %v600 = vsel %vm598, %v599, %v512
      %v601 = vshrl.u32 %v600, 4
      %v602 = vand.u32 %v600, 15
      %v603 = vsub.s32 0, %v602
      %v604 = vsel %vm598, %v603, %v602
      %vm605 = vcmp.lt.s32.totalorder %v513, 0
      %v606 = vsub.s32 0, %v513
      %v607 = vsel %vm605, %v606, %v513
      %v608 = vshrl.u32 %v607, 4
      %v609 = vand.u32 %v607, 15
      %v610 = vsub.s32 0, %v609
      %v611 = vsel %vm605, %v610, %v609
      %vm612 = vcmp.lt.s32.totalorder %v514, 0
      %v613 = vsub.s32 0, %v514
      %v614 = vsel %vm612, %v613, %v514
      %v615 = vshrl.u32 %v614, 4
      %v616 = vand.u32 %v614, 15
      %v617 = vsub.s32 0, %v616
      %v618 = vsel %vm612, %v617, %v616
      %vm619 = vcmp.lt.s32.totalorder %v515, 0
      %v620 = vsub.s32 0, %v515
      %v621 = vsel %vm619, %v620, %v515
      %v622 = vshrl.u32 %v621, 4
      %v623 = vand.u32 %v621, 15
      %v624 = vsub.s32 0, %v623
      %v625 = vsel %vm619, %v624, %v623
      %vm626 = vcmp.lt.s32.totalorder %v516, 0
      %v627 = vsub.s32 0, %v516
      %v628 = vsel %vm626, %v627, %v516
      %v629 = vshrl.u32 %v628, 4
      %v630 = vand.u32 %v628, 15
      %v631 = vsub.s32 0, %v630
      %v632 = vsel %vm626, %v631, %v630
      %vm633 = vcmp.lt.s32.totalorder %v517, 0
      %v634 = vsub.s32 0, %v517
      %v635 = vsel %vm633, %v634, %v517
      %v636 = vshrl.u32 %v635, 4
      %v637 = vand.u32 %v635, 15
      %v638 = vsub.s32 0, %v637
      %v639 = vsel %vm633, %v638, %v637
      %vm640 = vcmp.lt.s32.totalorder %v518, 0
      %v641 = vsub.s32 0, %v518
      %v642 = vsel %vm640, %v641, %v518
      %v643 = vshrl.u32 %v642, 4
      %v644 = vand.u32 %v642, 15
      %v645 = vsub.s32 0, %v644
      %v646 = vsel %vm640, %v645, %v644
      %vm647 = vcmp.lt.s32.totalorder %v519, 0
      %v648 = vsub.s32 0, %v519
      %v649 = vsel %vm647, %v648, %v519
      %v650 = vshrl.u32 %v649, 4
      %v651 = vand.u32 %v649, 15
      %v652 = vsub.s32 0, %v651
      %v653 = vsel %vm647, %v652, %v651
      %vm654 = vcmp.lt.s32.totalorder %v520, 0
      %v655 = vsub.s32 0, %v520
      %v656 = vsel %vm654, %v655, %v520
      %v657 = vshrl.u32 %v656, 4
      %v658 = vand.u32 %v656, 15
      %v659 = vsub.s32 0, %v658
      %v660 = vsel %vm654, %v659, %v658
      %vm661 = vcmp.ne.s32.totalorder %v527, 0
      %vm662 = vcmp.ne.s32.totalorder %v534, 0
      %vm663 = vcmp.ne.s32.totalorder %v541, 0
      %vm664 = vcmp.ne.s32.totalorder %v548, 0
      %vm665 = vcmp.ne.s32.totalorder %v555, 0
      %vm666 = vcmp.ne.s32.totalorder %v562, 0
      %vm667 = vcmp.ne.s32.totalorder %v569, 0
      %vm668 = vcmp.ne.s32.totalorder %v576, 0
      %vm669 = vcmp.ne.s32.totalorder %v583, 0
      %vm670 = vcmp.ne.s32.totalorder %v590, 0
      %vm671 = vcmp.ne.s32.totalorder %v597, 0
      %vm672 = vcmp.ne.s32.totalorder %v604, 0
      %vm673 = vcmp.ne.s32.totalorder %v611, 0
      %vm674 = vcmp.ne.s32.totalorder %v618, 0
      %vm675 = vcmp.ne.s32.totalorder %v625, 0
      %vm676 = vcmp.ne.s32.totalorder %v632, 0
      %vm677 = vcmp.ne.s32.totalorder %v639, 0
      %vm678 = vcmp.ne.s32.totalorder %v646, 0
      %vm679 = vcmp.ne.s32.totalorder %v653, 0
      %vm680 = vcmp.ne.s32.totalorder %v660, 0
      %vm681 = vcmp.lt.s32.totalorder %v527, 0
      %vm682 = vcmp.lt.s32.totalorder %v534, 0
      %vm683 = vcmp.lt.s32.totalorder %v541, 0
      %vm684 = vcmp.lt.s32.totalorder %v548, 0
      %vm685 = vcmp.lt.s32.totalorder %v555, 0
      %vm686 = vcmp.lt.s32.totalorder %v562, 0
      %vm687 = vcmp.lt.s32.totalorder %v569, 0
      %vm688 = vcmp.lt.s32.totalorder %v576, 0
      %vm689 = vcmp.lt.s32.totalorder %v583, 0
      %vm690 = vcmp.lt.s32.totalorder %v590, 0
      %vm691 = vcmp.lt.s32.totalorder %v597, 0
      %vm692 = vcmp.lt.s32.totalorder %v604, 0
      %vm693 = vcmp.lt.s32.totalorder %v611, 0
      %vm694 = vcmp.lt.s32.totalorder %v618, 0
      %vm695 = vcmp.lt.s32.totalorder %v625, 0
      %vm696 = vcmp.lt.s32.totalorder %v632, 0
      %vm697 = vcmp.lt.s32.totalorder %v639, 0
      %vm698 = vcmp.lt.s32.totalorder %v646, 0
      %vm699 = vcmp.lt.s32.totalorder %v653, 0
      %vm700 = vcmp.lt.s32.totalorder %v660, 0
      %vm701 = vmand %vm681, %vm661
      %vm702 = vmand %vm682, %vm662
      %vm703 = vmand %vm683, %vm663
      %vm704 = vmand %vm684, %vm664
      %vm705 = vmand %vm685, %vm665
      %vm706 = vmand %vm686, %vm666
      %vm707 = vmand %vm687, %vm667
      %vm708 = vmand %vm688, %vm668
      %vm709 = vmand %vm689, %vm669
      %vm710 = vmand %vm690, %vm670
      %vm711 = vmand %vm691, %vm671
      %vm712 = vmand %vm692, %vm672
      %vm713 = vmand %vm693, %vm673
      %vm714 = vmand %vm694, %vm674
      %vm715 = vmand %vm695, %vm675
      %vm716 = vmand %vm696, %vm676
      %vm717 = vmand %vm697, %vm677
      %vm718 = vmand %vm698, %vm678
      %vm719 = vmand %vm699, %vm679
      %vm720 = vmand %vm700, %vm680
      %v721 = vadd.s32 %v527, 16
      %v722 = vadd.s32 %v534, 16
      %v723 = vadd.s32 %v541, 16
      %v724 = vadd.s32 %v548, 16
      %v725 = vadd.s32 %v555, 16
      %v726 = vadd.s32 %v562, 16
      %v727 = vadd.s32 %v569, 16
      %v728 = vadd.s32 %v576, 16
      %v729 = vadd.s32 %v583, 16
      %v730 = vadd.s32 %v590, 16
      %v731 = vadd.s32 %v597, 16
      %v732 = vadd.s32 %v604, 16
      %v733 = vadd.s32 %v611, 16
      %v734 = vadd.s32 %v618, 16
      %v735 = vadd.s32 %v625, 16
      %v736 = vadd.s32 %v632, 16
      %v737 = vadd.s32 %v639, 16
      %v738 = vadd.s32 %v646, 16
      %v739 = vadd.s32 %v653, 16
      %v740 = vadd.s32 %v660, 16
      %v741 = vsel %vm701, %v721, %v527
      %v742 = vsel %vm702, %v722, %v534
      %v743 = vsel %vm703, %v723, %v541
      %v744 = vsel %vm704, %v724, %v548
      %v745 = vsel %vm705, %v725, %v555
      %v746 = vsel %vm706, %v726, %v562
      %v747 = vsel %vm707, %v727, %v569
      %v748 = vsel %vm708, %v728, %v576
      %v749 = vsel %vm709, %v729, %v583
      %v750 = vsel %vm710, %v730, %v590
      %v751 = vsel %vm711, %v731, %v597
      %v752 = vsel %vm712, %v732, %v604
      %v753 = vsel %vm713, %v733, %v611
      %v754 = vsel %vm714, %v734, %v618
      %v755 = vsel %vm715, %v735, %v625
      %v756 = vsel %vm716, %v736, %v632
      %v757 = vsel %vm717, %v737, %v639
      %v758 = vsel %vm718, %v738, %v646
      %v759 = vsel %vm719, %v739, %v653
      %v760 = vsel %vm720, %v740, %v660
      %vm761 = vcmp.eq.s32.totalorder %v741, 0
      %vm762 = vcmp.eq.s32.totalorder %v742, 0
      %vm763 = vcmp.eq.s32.totalorder %v743, 0
      %vm764 = vcmp.eq.s32.totalorder %v744, 0
      %vm765 = vcmp.eq.s32.totalorder %v745, 0
      %vm766 = vcmp.eq.s32.totalorder %v746, 0
      %vm767 = vcmp.eq.s32.totalorder %v747, 0
      %vm768 = vcmp.eq.s32.totalorder %v748, 0
      %vm769 = vcmp.eq.s32.totalorder %v749, 0
      %vm770 = vcmp.eq.s32.totalorder %v750, 0
      %vm771 = vcmp.eq.s32.totalorder %v751, 0
      %vm772 = vcmp.eq.s32.totalorder %v752, 0
      %vm773 = vcmp.eq.s32.totalorder %v753, 0
      %vm774 = vcmp.eq.s32.totalorder %v754, 0
      %vm775 = vcmp.eq.s32.totalorder %v755, 0
      %vm776 = vcmp.eq.s32.totalorder %v756, 0
      %vm777 = vcmp.eq.s32.totalorder %v757, 0
      %vm778 = vcmp.eq.s32.totalorder %v758, 0
      %vm779 = vcmp.eq.s32.totalorder %v759, 0
      %vm780 = vcmp.eq.s32.totalorder %v760, 0
      %v781 = vrot.slane %v492, 7
      %v782 = vrot.slane %v493, 7
      %v783 = vrot.slane %v468, 7
      %v784 = vrot.slane %v469, 7
      %v785 = vrot.slane %v470, 7
      %v786 = vrot.slane %v471, 7
      %v787 = vrot.slane %v472, 7
      %v788 = vrot.slane %v473, 7
      %v789 = vrot.slane %v474, 7
      %v790 = vrot.slane %v475, 7
      %v791 = vrot.slane %v476, 7
      %v792 = vrot.slane %v477, 7
      %v793 = vrot.slane %v478, 7
      %v794 = vrot.slane %v479, 7
      %v795 = vrot.slane %v480, 7
      %v796 = vrot.slane %v481, 7
      %v797 = vrot.slane %v482, 7
      %v798 = vrot.slane %v483, 7
      %v799 = vrot.slane %v498, 7
      %v800 = vrot.slane %v499, 7
      %vm801 = vcmp.lt.s32.totalorder %v501, 1
      %v802 = vsel %vm801, %v799, %v800
      %v803 = vsel %vm801, %v798, %v799
      %v804 = vsel %vm801, %v797, %v798
      %v805 = vsel %vm801, %v796, %v797
      %v806 = vsel %vm801, %v795, %v796
      %v807 = vsel %vm801, %v794, %v795
      %v808 = vsel %vm801, %v793, %v794
      %v809 = vsel %vm801, %v792, %v793
      %v810 = vsel %vm801, %v791, %v792
      %v811 = vsel %vm801, %v790, %v791
      %v812 = vsel %vm801, %v789, %v790
      %v813 = vsel %vm801, %v788, %v789
      %v814 = vsel %vm801, %v787, %v788
      %v815 = vsel %vm801, %v786, %v787
      %v816 = vsel %vm801, %v785, %v786
      %v817 = vsel %vm801, %v784, %v785
      %v818 = vsel %vm801, %v783, %v784
      %v819 = vsel %vm801, %v782, %v783
      %v820 = vsel %vm801, %v781, %v782
      %v821 = vsel %vm801, %v800, %v781
      %v822 = vsel %vm761, 1, 0
      %v823 = vsel %vm762, 1, 0
      %v824 = vsel %vm763, 1, 0
      %v825 = vsel %vm764, 1, 0
      %v826 = vsel %vm765, 1, 0
      %v827 = vsel %vm766, 1, 0
      %v828 = vsel %vm767, 1, 0
      %v829 = vsel %vm768, 1, 0
      %v830 = vsel %vm769, 1, 0
      %v831 = vsel %vm770, 1, 0
      %v832 = vsel %vm771, 1, 0
      %v833 = vsel %vm772, 1, 0
      %v834 = vsel %vm773, 1, 0
      %v835 = vsel %vm774, 1, 0
      %v836 = vsel %vm775, 1, 0
      %v837 = vsel %vm776, 1, 0
      %v838 = vsel %vm777, 1, 0
      %v839 = vsel %vm778, 1, 0
      %v840 = vsel %vm779, 1, 0
      %v841 = vsel %vm780, 1, 0
      %vm842 = vcmp.eq.s32.totalorder %v822, 1
      %vm843 = vcmp.eq.s32.totalorder %v823, 1
      %vm844 = vcmp.eq.s32.totalorder %v824, 1
      %vm845 = vcmp.eq.s32.totalorder %v825, 1
      %vm846 = vcmp.eq.s32.totalorder %v826, 1
      %vm847 = vcmp.eq.s32.totalorder %v827, 1
      %vm848 = vcmp.eq.s32.totalorder %v828, 1
      %vm849 = vcmp.eq.s32.totalorder %v829, 1
      %vm850 = vcmp.eq.s32.totalorder %v830, 1
      %vm851 = vcmp.eq.s32.totalorder %v831, 1
      %vm852 = vcmp.eq.s32.totalorder %v832, 1
      %vm853 = vcmp.eq.s32.totalorder %v833, 1
      %vm854 = vcmp.eq.s32.totalorder %v834, 1
      %vm855 = vcmp.eq.s32.totalorder %v835, 1
      %vm856 = vcmp.eq.s32.totalorder %v836, 1
      %vm857 = vcmp.eq.s32.totalorder %v837, 1
      %vm858 = vcmp.eq.s32.totalorder %v838, 1
      %vm859 = vcmp.eq.s32.totalorder %v839, 1
      %vm860 = vcmp.eq.s32.totalorder %v840, 1
      %vm861 = vcmp.eq.s32.totalorder %v841, 1
      %v862 = vsel %vm842, 0.0, %v821
      %v863 = vsel %vm843, 0.0, %v820
      %v864 = vsel %vm844, 0.0, %v819
      %v865 = vsel %vm845, 0.0, %v818
      %v866 = vsel %vm846, 0.0, %v817
      %v867 = vsel %vm847, 0.0, %v816
      %v868 = vsel %vm848, 0.0, %v815
      %v869 = vsel %vm849, 0.0, %v814
      %v870 = vsel %vm850, 0.0, %v813
      %v871 = vsel %vm851, 0.0, %v812
      %v872 = vsel %vm852, 0.0, %v811
      %v873 = vsel %vm853, 0.0, %v810
      %v874 = vsel %vm854, 0.0, %v809
      %v875 = vsel %vm855, 0.0, %v808
      %v876 = vsel %vm856, 0.0, %v807
      %v877 = vsel %vm857, 0.0, %v806
      %v878 = vsel %vm858, 0.0, %v805
      %v879 = vsel %vm859, 0.0, %v804
      %v880 = vsel %vm860, 0.0, %v803
      %v881 = vsel %vm861, 0.0, %v802
      %vm882 = vcmp.eq.s32.totalorder %v741, 15
      %vm883 = vcmp.eq.s32.totalorder %v742, 15
      %vm884 = vcmp.eq.s32.totalorder %v743, 15
      %vm885 = vcmp.eq.s32.totalorder %v744, 15
      %vm886 = vcmp.eq.s32.totalorder %v745, 15
      %vm887 = vcmp.eq.s32.totalorder %v746, 15
      %vm888 = vcmp.eq.s32.totalorder %v747, 15
      %vm889 = vcmp.eq.s32.totalorder %v748, 15
      %vm890 = vcmp.eq.s32.totalorder %v749, 15
      %vm891 = vcmp.eq.s32.totalorder %v750, 15
      %vm892 = vcmp.eq.s32.totalorder %v751, 15
      %vm893 = vcmp.eq.s32.totalorder %v752, 15
      %vm894 = vcmp.eq.s32.totalorder %v753, 15
      %vm895 = vcmp.eq.s32.totalorder %v754, 15
      %vm896 = vcmp.eq.s32.totalorder %v755, 15
      %vm897 = vcmp.eq.s32.totalorder %v756, 15
      %vm898 = vcmp.eq.s32.totalorder %v757, 15
      %vm899 = vcmp.eq.s32.totalorder %v758, 15
      %vm900 = vcmp.eq.s32.totalorder %v759, 15
      %vm901 = vcmp.eq.s32.totalorder %v760, 15
      %v902 = vrot.slane %v492, 1
      %v903 = vrot.slane %v493, 1
      %v904 = vrot.slane %v468, 1
      %v905 = vrot.slane %v469, 1
      %v906 = vrot.slane %v470, 1
      %v907 = vrot.slane %v471, 1
      %v908 = vrot.slane %v472, 1
      %v909 = vrot.slane %v473, 1
      %v910 = vrot.slane %v474, 1
      %v911 = vrot.slane %v475, 1
      %v912 = vrot.slane %v476, 1
      %v913 = vrot.slane %v477, 1
      %v914 = vrot.slane %v478, 1
      %v915 = vrot.slane %v479, 1
      %v916 = vrot.slane %v480, 1
      %v917 = vrot.slane %v481, 1
      %v918 = vrot.slane %v482, 1
      %v919 = vrot.slane %v483, 1
      %v920 = vrot.slane %v498, 1
      %v921 = vrot.slane %v499, 1
      %vm922 = vcmp.lt.s32.totalorder %v501, 7
      %v923 = vsel %vm922, %v920, %v921
      %v924 = vsel %vm922, %v919, %v920
      %v925 = vsel %vm922, %v918, %v919
      %v926 = vsel %vm922, %v917, %v918
      %v927 = vsel %vm922, %v916, %v917
      %v928 = vsel %vm922, %v915, %v916
      %v929 = vsel %vm922, %v914, %v915
      %v930 = vsel %vm922, %v913, %v914
      %v931 = vsel %vm922, %v912, %v913
      %v932 = vsel %vm922, %v911, %v912
      %v933 = vsel %vm922, %v910, %v911
      %v934 = vsel %vm922, %v909, %v910
      %v935 = vsel %vm922, %v908, %v909
      %v936 = vsel %vm922, %v907, %v908
      %v937 = vsel %vm922, %v906, %v907
      %v938 = vsel %vm922, %v905, %v906
      %v939 = vsel %vm922, %v904, %v905
      %v940 = vsel %vm922, %v903, %v904
      %v941 = vsel %vm922, %v902, %v903
      %v942 = vsel %vm922, %v921, %v902
      %v943 = vsel %vm882, 1, 0
      %v944 = vsel %vm883, 1, 0
      %v945 = vsel %vm884, 1, 0
      %v946 = vsel %vm885, 1, 0
      %v947 = vsel %vm886, 1, 0
      %v948 = vsel %vm887, 1, 0
      %v949 = vsel %vm888, 1, 0
      %v950 = vsel %vm889, 1, 0
      %v951 = vsel %vm890, 1, 0
      %v952 = vsel %vm891, 1, 0
      %v953 = vsel %vm892, 1, 0
      %v954 = vsel %vm893, 1, 0
      %v955 = vsel %vm894, 1, 0
      %v956 = vsel %vm895, 1, 0
      %v957 = vsel %vm896, 1, 0
      %v958 = vsel %vm897, 1, 0
      %v959 = vsel %vm898, 1, 0
      %v960 = vsel %vm899, 1, 0
      %v961 = vsel %vm900, 1, 0
      %v962 = vsel %vm901, 1, 0
      %vm963 = vcmp.eq.s32.totalorder %v943, 1
      %vm964 = vcmp.eq.s32.totalorder %v944, 1
      %vm965 = vcmp.eq.s32.totalorder %v945, 1
      %vm966 = vcmp.eq.s32.totalorder %v946, 1
      %vm967 = vcmp.eq.s32.totalorder %v947, 1
      %vm968 = vcmp.eq.s32.totalorder %v948, 1
      %vm969 = vcmp.eq.s32.totalorder %v949, 1
      %vm970 = vcmp.eq.s32.totalorder %v950, 1
      %vm971 = vcmp.eq.s32.totalorder %v951, 1
      %vm972 = vcmp.eq.s32.totalorder %v952, 1
      %vm973 = vcmp.eq.s32.totalorder %v953, 1
      %vm974 = vcmp.eq.s32.totalorder %v954, 1
      %vm975 = vcmp.eq.s32.totalorder %v955, 1
      %vm976 = vcmp.eq.s32.totalorder %v956, 1
      %vm977 = vcmp.eq.s32.totalorder %v957, 1
      %vm978 = vcmp.eq.s32.totalorder %v958, 1
      %vm979 = vcmp.eq.s32.totalorder %v959, 1
      %vm980 = vcmp.eq.s32.totalorder %v960, 1
      %vm981 = vcmp.eq.s32.totalorder %v961, 1
      %vm982 = vcmp.eq.s32.totalorder %v962, 1
      %v983 = vsel %vm963, 0.0, %v941
      %v984 = vsel %vm964, 0.0, %v940
      %v985 = vsel %vm965, 0.0, %v939
      %v986 = vsel %vm966, 0.0, %v938
      %v987 = vsel %vm967, 0.0, %v937
      %v988 = vsel %vm968, 0.0, %v936
      %v989 = vsel %vm969, 0.0, %v935
      %v990 = vsel %vm970, 0.0, %v934
      %v991 = vsel %vm971, 0.0, %v933
      %v992 = vsel %vm972, 0.0, %v932
      %v993 = vsel %vm973, 0.0, %v931
      %v994 = vsel %vm974, 0.0, %v930
      %v995 = vsel %vm975, 0.0, %v929
      %v996 = vsel %vm976, 0.0, %v928
      %v997 = vsel %vm977, 0.0, %v927
      %v998 = vsel %vm978, 0.0, %v926
      %v999 = vsel %vm979, 0.0, %v925
      %v1000 = vsel %vm980, 0.0, %v924
      %v1001 = vsel %vm981, 0.0, %v923
      %v1002 = vsel %vm982, 0.0, %v942
      %v1003 = vld [vmem:[%s3] sm:$0xff]
      %v1004 = vld [vmem:[%s3 + $0x8] sm:$0xff]
      %v1005 = vld [vmem:[%s3 + $0x10] sm:$0xff]
      %v1006 = vld [vmem:[%s3 + $0x18] sm:$0xff]
      %v1007 = vld [vmem:[%s3 + $0x20] sm:$0xff]
      %v1008 = vld [vmem:[%s3 + $0x28] sm:$0xff]
      %v1009 = vld [vmem:[%s3 + $0x30] sm:$0xff]
      %v1010 = vld [vmem:[%s3 + $0x38] sm:$0xff]
      %v1011 = vld [vmem:[%s3 + $0x40] sm:$0xff]
      %v1012 = vld [vmem:[%s3 + $0x48] sm:$0xff]
      %v1013 = vld [vmem:[%s3 + $0x50] sm:$0xff]
      %v1014 = vld [vmem:[%s3 + $0x58] sm:$0xff]
      %v1015 = vld [vmem:[%s3 + $0x60] sm:$0xff]
      %v1016 = vld [vmem:[%s3 + $0x68] sm:$0xff]
      %v1017 = vld [vmem:[%s3 + $0x70] sm:$0xff]
      %v1018 = vld [vmem:[%s3 + $0x78] sm:$0xff]
      %v1019 = vld [vmem:[%s3 + $0x80] sm:$0xff]
      %v1020 = vld [vmem:[%s3 + $0x88] sm:$0xff]
      %v1021 = vld [vmem:[%s3 + $0x90] sm:$0xff]
      %v1022 = vld [vmem:[%s3 + $0x98] sm:$0xff]
      %v1023 = vld [vmem:[%s3 + $0xa0] sm:$0xff]
      %v1024 = vld [vmem:[%s3 + $0xa8] sm:$0xff]
      %v1025 = vld [vmem:[%s3 + $0xb0] sm:$0xff]
      %v1026 = vld [vmem:[%s3 + $0xb8] sm:$0xff]
      %v1027 = vld [vmem:[%s3 + $0xc0] sm:$0xff]
      %v1028 = vld [vmem:[%s3 + $0xc8] sm:$0xff]
      %v1029 = vld [vmem:[%s3 + $0xd0] sm:$0xff]
      %v1030 = vld [vmem:[%s3 + $0xd8] sm:$0xff]
      %v1031 = vld [vmem:[%s3 + $0xe0] sm:$0xff]
      %v1032 = vld [vmem:[%s3 + $0xe8] sm:$0xff]
      %v1033 = vld [vmem:[%s3 + $0xf0] sm:$0xff]
      %v1034 = vld [vmem:[%s3 + $0xf8] sm:$0xff]
      %v1035 = vld [vmem:[%s3 + $0x100] sm:$0xff]
      %v1036 = vld [vmem:[%s3 + $0x108] sm:$0xff]
      %v1037 = vld [vmem:[%s3 + $0x110] sm:$0xff]
      %v1038 = vld [vmem:[%s3 + $0x118] sm:$0xff]
      %v1039 = vld [vmem:[%s3 + $0x120] sm:$0xff]
      %v1040 = vld [vmem:[%s3 + $0x128] sm:$0xff]
      %v1041 = vld [vmem:[%s3 + $0x130] sm:$0xff]
      %v1042 = vld [vmem:[%s3 + $0x138] sm:$0xff]
      %v1043 = vld [vmem:[%s3 + $0x140] sm:$0xff]
      %v1044 = vld [vmem:[%s3 + $0x148] sm:$0xff]
      %v1045 = vld [vmem:[%s3 + $0x150] sm:$0xff]
      %v1046 = vld [vmem:[%s3 + $0x158] sm:$0xff]
      %v1047 = vld [vmem:[%s3 + $0x160] sm:$0xff]
      %v1048 = vld [vmem:[%s3 + $0x168] sm:$0xff]
      %v1049 = vld [vmem:[%s3 + $0x170] sm:$0xff]
      %v1050 = vld [vmem:[%s3 + $0x178] sm:$0xff]
      %v1051 = vld [vmem:[%s3 + $0x180] sm:$0xff]
      %v1052 = vld [vmem:[%s3 + $0x188] sm:$0xff]
      %v1053 = vld [vmem:[%s3 + $0x190] sm:$0xff]
      %v1054 = vld [vmem:[%s3 + $0x198] sm:$0xff]
      %v1055 = vld [vmem:[%s3 + $0x1a0] sm:$0xff]
      %v1056 = vld [vmem:[%s3 + $0x1a8] sm:$0xff]
      %v1057 = vld [vmem:[%s3 + $0x1b0] sm:$0xff]
      %v1058 = vld [vmem:[%s3 + $0x1b8] sm:$0xff]
      %v1059 = vld [vmem:[%s3 + $0x1c0] sm:$0xff]
      %v1060 = vld [vmem:[%s3 + $0x1c8] sm:$0xff]
      %v1061 = vld [vmem:[%s3 + $0x1d0] sm:$0xff]
      %v1062 = vld [vmem:[%s3 + $0x1d8] sm:$0xff]
      %v1063 = vld [vmem:[%s3 + $0x1e0] sm:$0xff]
      %v1064 = vld [vmem:[%s3 + $0x1e8] sm:$0xff]
      %v1065 = vld [vmem:[%s3 + $0x1f0] sm:$0xff]
      %v1066 = vld [vmem:[%s3 + $0x1f8] sm:$0xff]
      %v1067 = vld [vmem:[%s3 + $0x200] sm:$0xff]
      %v1068 = vld [vmem:[%s3 + $0x208] sm:$0xff]
      %v1069 = vld [vmem:[%s3 + $0x210] sm:$0xff]
      %v1070 = vld [vmem:[%s3 + $0x218] sm:$0xff]
      %v1071 = vld [vmem:[%s3 + $0x220] sm:$0xff]
      %v1072 = vld [vmem:[%s3 + $0x228] sm:$0xff]
      %v1073 = vld [vmem:[%s3 + $0x230] sm:$0xff]
      %v1074 = vld [vmem:[%s3 + $0x238] sm:$0xff]
      %v1075 = vld [vmem:[%s3 + $0x240] sm:$0xff]
      %v1076 = vld [vmem:[%s3 + $0x248] sm:$0xff]
      %v1077 = vld [vmem:[%s3 + $0x250] sm:$0xff]
      %v1078 = vld [vmem:[%s3 + $0x258] sm:$0xff]
      %v1079 = vld [vmem:[%s3 + $0x260] sm:$0xff]
      %v1080 = vld [vmem:[%s3 + $0x268] sm:$0xff]
      %v1081 = vld [vmem:[%s3 + $0x270] sm:$0xff]
      %v1082 = vld [vmem:[%s3 + $0x278] sm:$0xff]
      %v1083 = vld [vmem:[%s3 + $0x280] sm:$0xff]
      %v1084 = vld [vmem:[%s3 + $0x288] sm:$0xff]
      %v1085 = vld [vmem:[%s3 + $0x290] sm:$0xff]
      %v1086 = vld [vmem:[%s3 + $0x298] sm:$0xff]
      %v1087 = vld [vmem:[%s3 + $0x2a0] sm:$0xff]
      %v1088 = vld [vmem:[%s3 + $0x2a8] sm:$0xff]
      %v1089 = vld [vmem:[%s3 + $0x2b0] sm:$0xff]
      %v1090 = vld [vmem:[%s3 + $0x2b8] sm:$0xff]
      %v1091 = vld [vmem:[%s3 + $0x2c0] sm:$0xff]
      %v1092 = vld [vmem:[%s3 + $0x2c8] sm:$0xff]
      %v1093 = vld [vmem:[%s3 + $0x2d0] sm:$0xff]
      %v1094 = vld [vmem:[%s3 + $0x2d8] sm:$0xff]
      %v1095 = vld [vmem:[%s3 + $0x2e0] sm:$0xff]
      %v1096 = vld [vmem:[%s3 + $0x2e8] sm:$0xff]
      %v1097 = vld [vmem:[%s3 + $0x2f0] sm:$0xff]
      %v1098 = vld [vmem:[%s3 + $0x2f8] sm:$0xff]
      %1099 = vmatprep.subr.mxu0 0.0
      %1100 = vmatpush1.msra.mxu0 %v1066
      %1101 = vmatprep.subr.mxu0 0.0
      %1102 = vmatpush1.msra.mxu0 %v1065
      %1103 = vmatprep.subr.mxu0 0.0
      %1104 = vmatpush1.msra.mxu0 %v1064
      %1105 = vmatprep.subr.mxu0 0.0
      %1106 = vmatpush1.msra.mxu0 %v1063
      %1107 = vmatprep.subr.mxu0 0.0
      %1108 = vmatpush1.msra.mxu0 %v1062
      %1109 = vmatprep.subr.mxu0 0.0
      %1110 = vmatpush1.msra.mxu0 %v1061
      %1111 = vmatprep.subr.mxu0 0.0
      %1112 = vmatpush1.msra.mxu0 %v1060
      %1113 = vmatprep.subr.mxu0 0.0
      %1114 = vmatpush1.msra.mxu0 %v1059
      %1115 = vmatprep.subr.mxu0 0.0
      %1116 = vmatpush1.msra.mxu0 %v1058
      %1117 = vmatprep.subr.mxu0 0.0
      %1118 = vmatpush1.msra.mxu0 %v1057
      %1119 = vmatprep.subr.mxu0 0.0
      %1120 = vmatpush1.msra.mxu0 %v1056
      %1121 = vmatprep.subr.mxu0 0.0
      %1122 = vmatpush1.msra.mxu0 %v1055
      %1123 = vmatprep.subr.mxu0 0.0
      %1124 = vmatpush1.msra.mxu0 %v1054
      %1125 = vmatprep.subr.mxu0 0.0
      %1126 = vmatpush1.msra.mxu0 %v1053
      %1127 = vmatprep.subr.mxu0 0.0
      %1128 = vmatpush1.msra.mxu0 %v1052
      %1129 = vmatprep.subr.mxu0 0.0
      %1130 = vmatpush1.msra.mxu0 %v1051
      %1131 = vmatprep.subr.mxu0 0.0
      %1132 = vmatpush2.msra.mxu0 %v1082
      %1133 = vmatprep.subr.mxu0 0.0
      %1134 = vmatpush2.msra.mxu0 %v1081
      %1135 = vmatprep.subr.mxu0 0.0
      %1136 = vmatpush2.msra.mxu0 %v1080
      %1137 = vmatprep.subr.mxu0 0.0
      %1138 = vmatpush2.msra.mxu0 %v1079
      %1139 = vmatprep.subr.mxu0 0.0
      %1140 = vmatpush2.msra.mxu0 %v1078
      %1141 = vmatprep.subr.mxu0 0.0
      %1142 = vmatpush2.msra.mxu0 %v1077
      %1143 = vmatprep.subr.mxu0 0.0
      %1144 = vmatpush2.msra.mxu0 %v1076
      %1145 = vmatprep.subr.mxu0 0.0
      %1146 = vmatpush2.msra.mxu0 %v1075
      %1147 = vmatprep.subr.mxu0 0.0
      %1148 = vmatpush2.msra.mxu0 %v1074
      %1149 = vmatprep.subr.mxu0 0.0
      %1150 = vmatpush2.msra.mxu0 %v1073
      %1151 = vmatprep.subr.mxu0 0.0
      %1152 = vmatpush2.msra.mxu0 %v1072
      %1153 = vmatprep.subr.mxu0 0.0
      %1154 = vmatpush2.msra.mxu0 %v1071
      %1155 = vmatprep.subr.mxu0 0.0
      %1156 = vmatpush2.msra.mxu0 %v1070
      %1157 = vmatprep.subr.mxu0 0.0
      %1158 = vmatpush2.msra.mxu0 %v1069
      %1159 = vmatprep.subr.mxu0 0.0
      %1160 = vmatpush2.msra.mxu0 %v1068
      %1161 = vmatprep.subr.mxu0 0.0
      %1162 = vmatpush2.msra.mxu0 %v1067
      %1163 = vmatprep.mubr.f32.mxu0 %v468
      %1164 = vmatmul.mubr.f32.gmra.mxu0 %v864
      %v1165 = vpop.f32.mrf.mxu0
      %v1166 = vadd.f32 0.0, %v1165
      %v1167 = vpop.f32.mrf.mxu0
      %1168 = vmatprep.mubr.f32.mxu0 %v469
      %1169 = vmatmul.mubr.f32.gmra.mxu0 %v865
      %v1170 = vpop.f32.mrf.mxu0
      %v1171 = vadd.f32 0.0, %v1170
      %v1172 = vpop.f32.mrf.mxu0
      %1173 = vmatprep.mubr.f32.mxu0 %v470
      %1174 = vmatmul.mubr.f32.gmra.mxu0 %v866
      %v1175 = vpop.f32.mrf.mxu0
      %v1176 = vadd.f32 0.0, %v1175
      %v1177 = vpop.f32.mrf.mxu0
      %1178 = vmatprep.mubr.f32.mxu0 %v471
      %1179 = vmatmul.mubr.f32.gmra.mxu0 %v867
      %v1180 = vpop.f32.mrf.mxu0
      %v1181 = vadd.f32 0.0, %v1180
      %v1182 = vpop.f32.mrf.mxu0
      %1183 = vmatprep.mubr.f32.mxu0 %v472
      %1184 = vmatmul.mubr.f32.gmra.mxu0 %v868
      %v1185 = vpop.f32.mrf.mxu0
      %v1186 = vadd.f32 0.0, %v1185
      %v1187 = vpop.f32.mrf.mxu0
      %1188 = vmatprep.mubr.f32.mxu0 %v473
      %1189 = vmatmul.mubr.f32.gmra.mxu0 %v869
      %v1190 = vpop.f32.mrf.mxu0
      %v1191 = vadd.f32 0.0, %v1190
      %v1192 = vpop.f32.mrf.mxu0
      %1193 = vmatprep.mubr.f32.mxu0 %v474
      %1194 = vmatmul.mubr.f32.gmra.mxu0 %v870
      %v1195 = vpop.f32.mrf.mxu0
      %v1196 = vadd.f32 0.0, %v1195
      %v1197 = vpop.f32.mrf.mxu0
      %1198 = vmatprep.mubr.f32.mxu0 %v475
      %1199 = vmatmul.mubr.f32.gmra.mxu0 %v871
      %v1200 = vpop.f32.mrf.mxu0
      %v1201 = vadd.f32 0.0, %v1200
      %v1202 = vpop.f32.mrf.mxu0
      %1203 = vmatprep.mubr.f32.mxu0 %v476
      %1204 = vmatmul.mubr.f32.gmra.mxu0 %v872
      %v1205 = vpop.f32.mrf.mxu0
      %v1206 = vadd.f32 0.0, %v1205
      %v1207 = vpop.f32.mrf.mxu0
      %1208 = vmatprep.mubr.f32.mxu0 %v477
      %1209 = vmatmul.mubr.f32.gmra.mxu0 %v873
      %v1210 = vpop.f32.mrf.mxu0
      %v1211 = vadd.f32 0.0, %v1210
      %v1212 = vpop.f32.mrf.mxu0
      %1213 = vmatprep.mubr.f32.mxu0 %v478
      %1214 = vmatmul.mubr.f32.gmra.mxu0 %v874
      %v1215 = vpop.f32.mrf.mxu0
      %v1216 = vadd.f32 0.0, %v1215
      %v1217 = vpop.f32.mrf.mxu0
      %1218 = vmatprep.mubr.f32.mxu0 %v479
      %1219 = vmatmul.mubr.f32.gmra.mxu0 %v875
      %v1220 = vpop.f32.mrf.mxu0
      %v1221 = vadd.f32 0.0, %v1220
      %v1222 = vpop.f32.mrf.mxu0
      %1223 = vmatprep.mubr.f32.mxu0 %v480
      %1224 = vmatmul.mubr.f32.gmra.mxu0 %v876
      %v1225 = vpop.f32.mrf.mxu0
      %v1226 = vadd.f32 0.0, %v1225
      %v1227 = vpop.f32.mrf.mxu0
      %1228 = vmatprep.mubr.f32.mxu0 %v481
      %1229 = vmatmul.mubr.f32.gmra.mxu0 %v877
      %v1230 = vpop.f32.mrf.mxu0
      %v1231 = vadd.f32 0.0, %v1230
      %v1232 = vpop.f32.mrf.mxu0
      %1233 = vmatprep.mubr.f32.mxu0 %v482
      %1234 = vmatmul.mubr.f32.gmra.mxu0 %v878
      %v1235 = vpop.f32.mrf.mxu0
      %v1236 = vadd.f32 0.0, %v1235
      %v1237 = vpop.f32.mrf.mxu0
      %1238 = vmatprep.mubr.f32.mxu0 %v483
      %1239 = vmatmul.mubr.f32.gmra.mxu0 %v879
      %v1240 = vpop.f32.mrf.mxu0
      %v1241 = vadd.f32 0.0, %v1240
      %v1242 = vpop.f32.mrf.mxu0
      %1243 = vdwg.mxu0
      %1244 = vmatprep.subr.mxu0 0.0
      %1245 = vmatpush1.msra.mxu0 %v1098
      %1246 = vmatprep.subr.mxu0 0.0
      %1247 = vmatpush1.msra.mxu0 %v1097
      %1248 = vmatprep.subr.mxu0 0.0
      %1249 = vmatpush1.msra.mxu0 %v1096
      %1250 = vmatprep.subr.mxu0 0.0
      %1251 = vmatpush1.msra.mxu0 %v1095
      %1252 = vmatprep.subr.mxu0 0.0
      %1253 = vmatpush1.msra.mxu0 %v1094
      %1254 = vmatprep.subr.mxu0 0.0
      %1255 = vmatpush1.msra.mxu0 %v1093
      %1256 = vmatprep.subr.mxu0 0.0
      %1257 = vmatpush1.msra.mxu0 %v1092
      %1258 = vmatprep.subr.mxu0 0.0
      %1259 = vmatpush1.msra.mxu0 %v1091
      %1260 = vmatprep.subr.mxu0 0.0
      %1261 = vmatpush1.msra.mxu0 %v1090
      %1262 = vmatprep.subr.mxu0 0.0
      %1263 = vmatpush1.msra.mxu0 %v1089
      %1264 = vmatprep.subr.mxu0 0.0
      %1265 = vmatpush1.msra.mxu0 %v1088
      %1266 = vmatprep.subr.mxu0 0.0
      %1267 = vmatpush1.msra.mxu0 %v1087
      %1268 = vmatprep.subr.mxu0 0.0
      %1269 = vmatpush1.msra.mxu0 %v1086
      %1270 = vmatprep.subr.mxu0 0.0
      %1271 = vmatpush1.msra.mxu0 %v1085
      %1272 = vmatprep.subr.mxu0 0.0
      %1273 = vmatpush1.msra.mxu0 %v1084
      %1274 = vmatprep.subr.mxu0 0.0
      %1275 = vmatpush1.msra.mxu0 %v1083
      %1276 = vmatprep.subr.mxu0 0.0
      %1277 = vmatpush2.msra.mxu0 0.0
      %1278 = vmatprep.subr.mxu0 0.0
      %1279 = vmatpush2.msra.mxu0 0.0
      %1280 = vmatprep.subr.mxu0 0.0
      %1281 = vmatpush2.msra.mxu0 0.0
      %1282 = vmatprep.subr.mxu0 0.0
      %1283 = vmatpush2.msra.mxu0 0.0
      %1284 = vmatprep.subr.mxu0 0.0
      %1285 = vmatpush2.msra.mxu0 0.0
      %1286 = vmatprep.subr.mxu0 0.0
      %1287 = vmatpush2.msra.mxu0 0.0
      %1288 = vmatprep.subr.mxu0 0.0
      %1289 = vmatpush2.msra.mxu0 0.0
      %1290 = vmatprep.subr.mxu0 0.0
      %1291 = vmatpush2.msra.mxu0 0.0
      %1292 = vmatprep.subr.mxu0 0.0
      %1293 = vmatpush2.msra.mxu0 0.0
      %1294 = vmatprep.subr.mxu0 0.0
      %1295 = vmatpush2.msra.mxu0 0.0
      %1296 = vmatprep.subr.mxu0 0.0
      %1297 = vmatpush2.msra.mxu0 0.0
      %1298 = vmatprep.subr.mxu0 0.0
      %1299 = vmatpush2.msra.mxu0 0.0
      %1300 = vmatprep.subr.mxu0 0.0
      %1301 = vmatpush2.msra.mxu0 0.0
      %1302 = vmatprep.subr.mxu0 0.0
      %1303 = vmatpush2.msra.mxu0 0.0
      %1304 = vmatprep.subr.mxu0 0.0
      %1305 = vmatpush2.msra.mxu0 0.0
      %1306 = vmatprep.subr.mxu0 0.0
      %1307 = vmatpush2.msra.mxu0 0.0
      %1308 = vmatprep.mubr.f32.mxu0 0.0
      %1309 = vmatmul.mubr.f32.gmra.mxu0 %v985
      %v1310 = vpop.f32.mrf.mxu0
      %v1311 = vadd.f32 %v1166, %v1310
      %v1312 = vpop.f32.mrf.mxu0
      %1313 = vmatprep.mubr.f32.mxu0 0.0
      %1314 = vmatmul.mubr.f32.gmra.mxu0 %v986
      %v1315 = vpop.f32.mrf.mxu0
      %v1316 = vadd.f32 %v1171, %v1315
      %v1317 = vpop.f32.mrf.mxu0
      %1318 = vmatprep.mubr.f32.mxu0 0.0
      %1319 = vmatmul.mubr.f32.gmra.mxu0 %v987
      %v1320 = vpop.f32.mrf.mxu0
      %v1321 = vadd.f32 %v1176, %v1320
      %v1322 = vpop.f32.mrf.mxu0
      %1323 = vmatprep.mubr.f32.mxu0 0.0
      %1324 = vmatmul.mubr.f32.gmra.mxu0 %v988
      %v1325 = vpop.f32.mrf.mxu0
      %v1326 = vadd.f32 %v1181, %v1325
      %v1327 = vpop.f32.mrf.mxu0
      %1328 = vmatprep.mubr.f32.mxu0 0.0
      %1329 = vmatmul.mubr.f32.gmra.mxu0 %v989
      %v1330 = vpop.f32.mrf.mxu0
      %v1331 = vadd.f32 %v1186, %v1330
      %v1332 = vpop.f32.mrf.mxu0
      %1333 = vmatprep.mubr.f32.mxu0 0.0
      %1334 = vmatmul.mubr.f32.gmra.mxu0 %v990
      %v1335 = vpop.f32.mrf.mxu0
      %v1336 = vadd.f32 %v1191, %v1335
      %v1337 = vpop.f32.mrf.mxu0
      %1338 = vmatprep.mubr.f32.mxu0 0.0
      %1339 = vmatmul.mubr.f32.gmra.mxu0 %v991
      %v1340 = vpop.f32.mrf.mxu0
      %v1341 = vadd.f32 %v1196, %v1340
      %v1342 = vpop.f32.mrf.mxu0
      %1343 = vmatprep.mubr.f32.mxu0 0.0
      %1344 = vmatmul.mubr.f32.gmra.mxu0 %v992
      %v1345 = vpop.f32.mrf.mxu0
      %v1346 = vadd.f32 %v1201, %v1345
      %v1347 = vpop.f32.mrf.mxu0
      %1348 = vmatprep.mubr.f32.mxu0 0.0
      %1349 = vmatmul.mubr.f32.gmra.mxu0 %v993
      %v1350 = vpop.f32.mrf.mxu0
      %v1351 = vadd.f32 %v1206, %v1350
      %v1352 = vpop.f32.mrf.mxu0
      %1353 = vmatprep.mubr.f32.mxu0 0.0
      %1354 = vmatmul.mubr.f32.gmra.mxu0 %v994
      %v1355 = vpop.f32.mrf.mxu0
      %v1356 = vadd.f32 %v1211, %v1355
      %v1357 = vpop.f32.mrf.mxu0
      %1358 = vmatprep.mubr.f32.mxu0 0.0
      %1359 = vmatmul.mubr.f32.gmra.mxu0 %v995
      %v1360 = vpop.f32.mrf.mxu0
      %v1361 = vadd.f32 %v1216, %v1360
      %v1362 = vpop.f32.mrf.mxu0
      %1363 = vmatprep.mubr.f32.mxu0 0.0
      %1364 = vmatmul.mubr.f32.gmra.mxu0 %v996
      %v1365 = vpop.f32.mrf.mxu0
      %v1366 = vadd.f32 %v1221, %v1365
      %v1367 = vpop.f32.mrf.mxu0
      %1368 = vmatprep.mubr.f32.mxu0 0.0
      %1369 = vmatmul.mubr.f32.gmra.mxu0 %v997
      %v1370 = vpop.f32.mrf.mxu0
      %v1371 = vadd.f32 %v1226, %v1370
      %v1372 = vpop.f32.mrf.mxu0
      %1373 = vmatprep.mubr.f32.mxu0 0.0
      %1374 = vmatmul.mubr.f32.gmra.mxu0 %v998
      %v1375 = vpop.f32.mrf.mxu0
      %v1376 = vadd.f32 %v1231, %v1375
      %v1377 = vpop.f32.mrf.mxu0
      %1378 = vmatprep.mubr.f32.mxu0 0.0
      %1379 = vmatmul.mubr.f32.gmra.mxu0 %v999
      %v1380 = vpop.f32.mrf.mxu0
      %v1381 = vadd.f32 %v1236, %v1380
      %v1382 = vpop.f32.mrf.mxu0
      %1383 = vmatprep.mubr.f32.mxu0 0.0
      %1384 = vmatmul.mubr.f32.gmra.mxu0 %v1000
      %v1385 = vpop.f32.mrf.mxu0
      %v1386 = vadd.f32 %v1241, %v1385
      %v1387 = vpop.f32.mrf.mxu0
      %1388 = vdwg.mxu0
      %1389 = vmatprep.subr.mxu0 0.0
      %1390 = vmatpush1.msra.mxu0 %v1018
      %1391 = vmatprep.subr.mxu0 0.0
      %1392 = vmatpush1.msra.mxu0 %v1017
      %1393 = vmatprep.subr.mxu0 0.0
      %1394 = vmatpush1.msra.mxu0 %v1016
      %1395 = vmatprep.subr.mxu0 0.0
      %1396 = vmatpush1.msra.mxu0 %v1015
      %1397 = vmatprep.subr.mxu0 0.0
      %1398 = vmatpush1.msra.mxu0 %v1014
      %1399 = vmatprep.subr.mxu0 0.0
      %1400 = vmatpush1.msra.mxu0 %v1013
      %1401 = vmatprep.subr.mxu0 0.0
      %1402 = vmatpush1.msra.mxu0 %v1012
      %1403 = vmatprep.subr.mxu0 0.0
      %1404 = vmatpush1.msra.mxu0 %v1011
      %1405 = vmatprep.subr.mxu0 0.0
      %1406 = vmatpush1.msra.mxu0 %v1010
      %1407 = vmatprep.subr.mxu0 0.0
      %1408 = vmatpush1.msra.mxu0 %v1009
      %1409 = vmatprep.subr.mxu0 0.0
      %1410 = vmatpush1.msra.mxu0 %v1008
      %1411 = vmatprep.subr.mxu0 0.0
      %1412 = vmatpush1.msra.mxu0 %v1007
      %1413 = vmatprep.subr.mxu0 0.0
      %1414 = vmatpush1.msra.mxu0 %v1006
      %1415 = vmatprep.subr.mxu0 0.0
      %1416 = vmatpush1.msra.mxu0 %v1005
      %1417 = vmatprep.subr.mxu0 0.0
      %1418 = vmatpush1.msra.mxu0 %v1004
      %1419 = vmatprep.subr.mxu0 0.0
      %1420 = vmatpush1.msra.mxu0 %v1003
      %1421 = vmatprep.subr.mxu0 0.0
      %1422 = vmatpush2.msra.mxu0 %v1034
      %1423 = vmatprep.subr.mxu0 0.0
      %1424 = vmatpush2.msra.mxu0 %v1033
      %1425 = vmatprep.subr.mxu0 0.0
      %1426 = vmatpush2.msra.mxu0 %v1032
      %1427 = vmatprep.subr.mxu0 0.0
      %1428 = vmatpush2.msra.mxu0 %v1031
      %1429 = vmatprep.subr.mxu0 0.0
      %1430 = vmatpush2.msra.mxu0 %v1030
      %1431 = vmatprep.subr.mxu0 0.0
      %1432 = vmatpush2.msra.mxu0 %v1029
      %1433 = vmatprep.subr.mxu0 0.0
      %1434 = vmatpush2.msra.mxu0 %v1028
      %1435 = vmatprep.subr.mxu0 0.0
      %1436 = vmatpush2.msra.mxu0 %v1027
      %1437 = vmatprep.subr.mxu0 0.0
      %1438 = vmatpush2.msra.mxu0 %v1026
      %1439 = vmatprep.subr.mxu0 0.0
      %1440 = vmatpush2.msra.mxu0 %v1025
      %1441 = vmatprep.subr.mxu0 0.0
      %1442 = vmatpush2.msra.mxu0 %v1024
      %1443 = vmatprep.subr.mxu0 0.0
      %1444 = vmatpush2.msra.mxu0 %v1023
      %1445 = vmatprep.subr.mxu0 0.0
      %1446 = vmatpush2.msra.mxu0 %v1022
      %1447 = vmatprep.subr.mxu0 0.0
      %1448 = vmatpush2.msra.mxu0 %v1021
      %1449 = vmatprep.subr.mxu0 0.0
      %1450 = vmatpush2.msra.mxu0 %v1020
      %1451 = vmatprep.subr.mxu0 0.0
      %1452 = vmatpush2.msra.mxu0 %v1019
      %1453 = vmatprep.mubr.f32.mxu0 %v492
      %1454 = vmatmul.mubr.f32.gmra.mxu0 %v862
      %v1455 = vpop.f32.mrf.mxu0
      %v1456 = vadd.f32 %v1311, %v1455
      %v1457 = vpop.f32.mrf.mxu0
      %1458 = vmatprep.mubr.f32.mxu0 %v493
      %1459 = vmatmul.mubr.f32.gmra.mxu0 %v863
      %v1460 = vpop.f32.mrf.mxu0
      %v1461 = vadd.f32 %v1316, %v1460
      %v1462 = vpop.f32.mrf.mxu0
      %1463 = vmatprep.mubr.f32.mxu0 %v468
      %1464 = vmatmul.mubr.f32.gmra.mxu0 %v864
      %v1465 = vpop.f32.mrf.mxu0
      %v1466 = vadd.f32 %v1321, %v1465
      %v1467 = vpop.f32.mrf.mxu0
      %1468 = vmatprep.mubr.f32.mxu0 %v469
      %1469 = vmatmul.mubr.f32.gmra.mxu0 %v865
      %v1470 = vpop.f32.mrf.mxu0
      %v1471 = vadd.f32 %v1326, %v1470
      %v1472 = vpop.f32.mrf.mxu0
      %1473 = vmatprep.mubr.f32.mxu0 %v470
      %1474 = vmatmul.mubr.f32.gmra.mxu0 %v866
      %v1475 = vpop.f32.mrf.mxu0
      %v1476 = vadd.f32 %v1331, %v1475
      %v1477 = vpop.f32.mrf.mxu0
      %1478 = vmatprep.mubr.f32.mxu0 %v471
      %1479 = vmatmul.mubr.f32.gmra.mxu0 %v867
      %v1480 = vpop.f32.mrf.mxu0
      %v1481 = vadd.f32 %v1336, %v1480
      %v1482 = vpop.f32.mrf.mxu0
      %1483 = vmatprep.mubr.f32.mxu0 %v472
      %1484 = vmatmul.mubr.f32.gmra.mxu0 %v868
      %v1485 = vpop.f32.mrf.mxu0
      %v1486 = vadd.f32 %v1341, %v1485
      %v1487 = vpop.f32.mrf.mxu0
      %1488 = vmatprep.mubr.f32.mxu0 %v473
      %1489 = vmatmul.mubr.f32.gmra.mxu0 %v869
      %v1490 = vpop.f32.mrf.mxu0
      %v1491 = vadd.f32 %v1346, %v1490
      %v1492 = vpop.f32.mrf.mxu0
      %1493 = vmatprep.mubr.f32.mxu0 %v474
      %1494 = vmatmul.mubr.f32.gmra.mxu0 %v870
      %v1495 = vpop.f32.mrf.mxu0
      %v1496 = vadd.f32 %v1351, %v1495
      %v1497 = vpop.f32.mrf.mxu0
      %1498 = vmatprep.mubr.f32.mxu0 %v475
      %1499 = vmatmul.mubr.f32.gmra.mxu0 %v871
      %v1500 = vpop.f32.mrf.mxu0
      %v1501 = vadd.f32 %v1356, %v1500
      %v1502 = vpop.f32.mrf.mxu0
      %1503 = vmatprep.mubr.f32.mxu0 %v476
      %1504 = vmatmul.mubr.f32.gmra.mxu0 %v872
      %v1505 = vpop.f32.mrf.mxu0
      %v1506 = vadd.f32 %v1361, %v1505
      %v1507 = vpop.f32.mrf.mxu0
      %1508 = vmatprep.mubr.f32.mxu0 %v477
      %1509 = vmatmul.mubr.f32.gmra.mxu0 %v873
      %v1510 = vpop.f32.mrf.mxu0
      %v1511 = vadd.f32 %v1366, %v1510
      %v1512 = vpop.f32.mrf.mxu0
      %1513 = vmatprep.mubr.f32.mxu0 %v478
      %1514 = vmatmul.mubr.f32.gmra.mxu0 %v874
      %v1515 = vpop.f32.mrf.mxu0
      %v1516 = vadd.f32 %v1371, %v1515
      %v1517 = vpop.f32.mrf.mxu0
      %1518 = vmatprep.mubr.f32.mxu0 %v479
      %1519 = vmatmul.mubr.f32.gmra.mxu0 %v875
      %v1520 = vpop.f32.mrf.mxu0
      %v1521 = vadd.f32 %v1376, %v1520
      %v1522 = vpop.f32.mrf.mxu0
      %1523 = vmatprep.mubr.f32.mxu0 %v480
      %1524 = vmatmul.mubr.f32.gmra.mxu0 %v876
      %v1525 = vpop.f32.mrf.mxu0
      %v1526 = vadd.f32 %v1381, %v1525
      %v1527 = vpop.f32.mrf.mxu0
      %1528 = vmatprep.mubr.f32.mxu0 %v481
      %1529 = vmatmul.mubr.f32.gmra.mxu0 %v877
      %v1530 = vpop.f32.mrf.mxu0
      %v1531 = vadd.f32 %v1386, %v1530
      %v1532 = vpop.f32.mrf.mxu0
      %1533 = vdwg.mxu0
      %1534 = vmatprep.subr.mxu0 0.0
      %1535 = vmatpush1.msra.mxu0 %v1050
      %1536 = vmatprep.subr.mxu0 0.0
      %1537 = vmatpush1.msra.mxu0 %v1049
      %1538 = vmatprep.subr.mxu0 0.0
      %1539 = vmatpush1.msra.mxu0 %v1048
      %1540 = vmatprep.subr.mxu0 0.0
      %1541 = vmatpush1.msra.mxu0 %v1047
      %1542 = vmatprep.subr.mxu0 0.0
      %1543 = vmatpush1.msra.mxu0 %v1046
      %1544 = vmatprep.subr.mxu0 0.0
      %1545 = vmatpush1.msra.mxu0 %v1045
      %1546 = vmatprep.subr.mxu0 0.0
      %1547 = vmatpush1.msra.mxu0 %v1044
      %1548 = vmatprep.subr.mxu0 0.0
      %1549 = vmatpush1.msra.mxu0 %v1043
      %1550 = vmatprep.subr.mxu0 0.0
      %1551 = vmatpush1.msra.mxu0 %v1042
      %1552 = vmatprep.subr.mxu0 0.0
      %1553 = vmatpush1.msra.mxu0 %v1041
      %1554 = vmatprep.subr.mxu0 0.0
      %1555 = vmatpush1.msra.mxu0 %v1040
      %1556 = vmatprep.subr.mxu0 0.0
      %1557 = vmatpush1.msra.mxu0 %v1039
      %1558 = vmatprep.subr.mxu0 0.0
      %1559 = vmatpush1.msra.mxu0 %v1038
      %1560 = vmatprep.subr.mxu0 0.0
      %1561 = vmatpush1.msra.mxu0 %v1037
      %1562 = vmatprep.subr.mxu0 0.0
      %1563 = vmatpush1.msra.mxu0 %v1036
      %1564 = vmatprep.subr.mxu0 0.0
      %1565 = vmatpush1.msra.mxu0 %v1035
      %1566 = vmatprep.subr.mxu0 0.0
      %1567 = vmatpush2.msra.mxu0 0.0
      %1568 = vmatprep.subr.mxu0 0.0
      %1569 = vmatpush2.msra.mxu0 0.0
      %1570 = vmatprep.subr.mxu0 0.0
      %1571 = vmatpush2.msra.mxu0 0.0
      %1572 = vmatprep.subr.mxu0 0.0
      %1573 = vmatpush2.msra.mxu0 0.0
      %1574 = vmatprep.subr.mxu0 0.0
      %1575 = vmatpush2.msra.mxu0 0.0
      %1576 = vmatprep.subr.mxu0 0.0
      %1577 = vmatpush2.msra.mxu0 0.0
      %1578 = vmatprep.subr.mxu0 0.0
      %1579 = vmatpush2.msra.mxu0 0.0
      %1580 = vmatprep.subr.mxu0 0.0
      %1581 = vmatpush2.msra.mxu0 0.0
      %1582 = vmatprep.subr.mxu0 0.0
      %1583 = vmatpush2.msra.mxu0 0.0
      %1584 = vmatprep.subr.mxu0 0.0
      %1585 = vmatpush2.msra.mxu0 0.0
      %1586 = vmatprep.subr.mxu0 0.0
      %1587 = vmatpush2.msra.mxu0 0.0
      %1588 = vmatprep.subr.mxu0 0.0
      %1589 = vmatpush2.msra.mxu0 0.0
      %1590 = vmatprep.subr.mxu0 0.0
      %1591 = vmatpush2.msra.mxu0 0.0
      %1592 = vmatprep.subr.mxu0 0.0
      %1593 = vmatpush2.msra.mxu0 0.0
      %1594 = vmatprep.subr.mxu0 0.0
      %1595 = vmatpush2.msra.mxu0 0.0
      %1596 = vmatprep.subr.mxu0 0.0
      %1597 = vmatpush2.msra.mxu0 0.0
      %1598 = vmatprep.mubr.f32.mxu0 0.0
      %1599 = vmatmul.mubr.f32.gmra.mxu0 %v983
      %v1600 = vpop.f32.mrf.mxu0
      %v1601 = vadd.f32 %v1456, %v1600
      %v1602 = vpop.f32.mrf.mxu0
      %1603 = vmatprep.mubr.f32.mxu0 0.0
      %1604 = vmatmul.mubr.f32.gmra.mxu0 %v984
      %v1605 = vpop.f32.mrf.mxu0
      %v1606 = vadd.f32 %v1461, %v1605
      %v1607 = vpop.f32.mrf.mxu0
      %1608 = vmatprep.mubr.f32.mxu0 0.0
      %1609 = vmatmul.mubr.f32.gmra.mxu0 %v985
      %v1610 = vpop.f32.mrf.mxu0
      %v1611 = vadd.f32 %v1466, %v1610
      %v1612 = vpop.f32.mrf.mxu0
      %1613 = vmatprep.mubr.f32.mxu0 0.0
      %1614 = vmatmul.mubr.f32.gmra.mxu0 %v986
      %v1615 = vpop.f32.mrf.mxu0
      %v1616 = vadd.f32 %v1471, %v1615
      %v1617 = vpop.f32.mrf.mxu0
      %1618 = vmatprep.mubr.f32.mxu0 0.0
      %1619 = vmatmul.mubr.f32.gmra.mxu0 %v987
      %v1620 = vpop.f32.mrf.mxu0
      %v1621 = vadd.f32 %v1476, %v1620
      %v1622 = vpop.f32.mrf.mxu0
      %1623 = vmatprep.mubr.f32.mxu0 0.0
      %1624 = vmatmul.mubr.f32.gmra.mxu0 %v988
      %v1625 = vpop.f32.mrf.mxu0
      %v1626 = vadd.f32 %v1481, %v1625
      %v1627 = vpop.f32.mrf.mxu0
      %1628 = vmatprep.mubr.f32.mxu0 0.0
      %1629 = vmatmul.mubr.f32.gmra.mxu0 %v989
      %v1630 = vpop.f32.mrf.mxu0
      %v1631 = vadd.f32 %v1486, %v1630
      %v1632 = vpop.f32.mrf.mxu0
      %1633 = vmatprep.mubr.f32.mxu0 0.0
      %1634 = vmatmul.mubr.f32.gmra.mxu0 %v990
      %v1635 = vpop.f32.mrf.mxu0
      %v1636 = vadd.f32 %v1491, %v1635
      %v1637 = vpop.f32.mrf.mxu0
      %1638 = vmatprep.mubr.f32.mxu0 0.0
      %1639 = vmatmul.mubr.f32.gmra.mxu0 %v991
      %v1640 = vpop.f32.mrf.mxu0
      %v1641 = vadd.f32 %v1496, %v1640
      %v1642 = vpop.f32.mrf.mxu0
      %1643 = vmatprep.mubr.f32.mxu0 0.0
      %1644 = vmatmul.mubr.f32.gmra.mxu0 %v992
      %v1645 = vpop.f32.mrf.mxu0
      %v1646 = vadd.f32 %v1501, %v1645
      %v1647 = vpop.f32.mrf.mxu0
      %1648 = vmatprep.mubr.f32.mxu0 0.0
      %1649 = vmatmul.mubr.f32.gmra.mxu0 %v993
      %v1650 = vpop.f32.mrf.mxu0
      %v1651 = vadd.f32 %v1506, %v1650
      %v1652 = vpop.f32.mrf.mxu0
      %1653 = vmatprep.mubr.f32.mxu0 0.0
      %1654 = vmatmul.mubr.f32.gmra.mxu0 %v994
      %v1655 = vpop.f32.mrf.mxu0
      %v1656 = vadd.f32 %v1511, %v1655
      %v1657 = vpop.f32.mrf.mxu0
      %1658 = vmatprep.mubr.f32.mxu0 0.0
      %1659 = vmatmul.mubr.f32.gmra.mxu0 %v995
      %v1660 = vpop.f32.mrf.mxu0
      %v1661 = vadd.f32 %v1516, %v1660
      %v1662 = vpop.f32.mrf.mxu0
      %1663 = vmatprep.mubr.f32.mxu0 0.0
      %1664 = vmatmul.mubr.f32.gmra.mxu0 %v996
      %v1665 = vpop.f32.mrf.mxu0
      %v1666 = vadd.f32 %v1521, %v1665
      %v1667 = vpop.f32.mrf.mxu0
      %1668 = vmatprep.mubr.f32.mxu0 0.0
      %1669 = vmatmul.mubr.f32.gmra.mxu0 %v997
      %v1670 = vpop.f32.mrf.mxu0
      %v1671 = vadd.f32 %v1526, %v1670
      %v1672 = vpop.f32.mrf.mxu0
      %1673 = vmatprep.mubr.f32.mxu0 0.0
      %1674 = vmatmul.mubr.f32.gmra.mxu0 %v998
      %v1675 = vpop.f32.mrf.mxu0
      %v1676 = vadd.f32 %v1531, %v1675
      %v1677 = vpop.f32.mrf.mxu0
      %1678 = vdwg.mxu0
      %v1679 = vld [vmem:[%s3 + $0x300] sm:$0xff]
      %v1680 = vld [vmem:[%s3 + $0x308] sm:$0xff]
      %v1681 = vld [vmem:[%s3 + $0x310] sm:$0xff]
      %v1682 = vld [vmem:[%s3 + $0x318] sm:$0xff]
      %v1683 = vld [vmem:[%s3 + $0x320] sm:$0xff]
      %v1684 = vld [vmem:[%s3 + $0x328] sm:$0xff]
      %v1685 = vld [vmem:[%s3 + $0x330] sm:$0xff]
      %v1686 = vld [vmem:[%s3 + $0x338] sm:$0xff]
      %v1687 = vld [vmem:[%s3 + $0x340] sm:$0xff]
      %v1688 = vld [vmem:[%s3 + $0x348] sm:$0xff]
      %v1689 = vld [vmem:[%s3 + $0x350] sm:$0xff]
      %v1690 = vld [vmem:[%s3 + $0x358] sm:$0xff]
      %v1691 = vld [vmem:[%s3 + $0x360] sm:$0xff]
      %v1692 = vld [vmem:[%s3 + $0x368] sm:$0xff]
      %v1693 = vld [vmem:[%s3 + $0x370] sm:$0xff]
      %v1694 = vld [vmem:[%s3 + $0x378] sm:$0xff]
      %v1695 = vld [vmem:[%s3 + $0x380] sm:$0xff]
      %v1696 = vld [vmem:[%s3 + $0x388] sm:$0xff]
      %v1697 = vld [vmem:[%s3 + $0x390] sm:$0xff]
      %v1698 = vld [vmem:[%s3 + $0x398] sm:$0xff]
      %v1699 = vld [vmem:[%s3 + $0x3a0] sm:$0xff]
      %v1700 = vld [vmem:[%s3 + $0x3a8] sm:$0xff]
      %v1701 = vld [vmem:[%s3 + $0x3b0] sm:$0xff]
      %v1702 = vld [vmem:[%s3 + $0x3b8] sm:$0xff]
      %v1703 = vld [vmem:[%s3 + $0x3c0] sm:$0xff]
      %v1704 = vld [vmem:[%s3 + $0x3c8] sm:$0xff]
      %v1705 = vld [vmem:[%s3 + $0x3d0] sm:$0xff]
      %v1706 = vld [vmem:[%s3 + $0x3d8] sm:$0xff]
      %v1707 = vld [vmem:[%s3 + $0x3e0] sm:$0xff]
      %v1708 = vld [vmem:[%s3 + $0x3e8] sm:$0xff]
      %v1709 = vld [vmem:[%s3 + $0x3f0] sm:$0xff]
      %v1710 = vld [vmem:[%s3 + $0x3f8] sm:$0xff]
      %v1711 = vld [vmem:[%s3 + $0x400] sm:$0xff]
      %v1712 = vld [vmem:[%s3 + $0x408] sm:$0xff]
      %v1713 = vld [vmem:[%s3 + $0x410] sm:$0xff]
      %v1714 = vld [vmem:[%s3 + $0x418] sm:$0xff]
      %v1715 = vld [vmem:[%s3 + $0x420] sm:$0xff]
      %v1716 = vld [vmem:[%s3 + $0x428] sm:$0xff]
      %v1717 = vld [vmem:[%s3 + $0x430] sm:$0xff]
      %v1718 = vld [vmem:[%s3 + $0x438] sm:$0xff]
      %v1719 = vld [vmem:[%s3 + $0x440] sm:$0xff]
      %v1720 = vld [vmem:[%s3 + $0x448] sm:$0xff]
      %v1721 = vld [vmem:[%s3 + $0x450] sm:$0xff]
      %v1722 = vld [vmem:[%s3 + $0x458] sm:$0xff]
      %v1723 = vld [vmem:[%s3 + $0x460] sm:$0xff]
      %v1724 = vld [vmem:[%s3 + $0x468] sm:$0xff]
      %v1725 = vld [vmem:[%s3 + $0x470] sm:$0xff]
      %v1726 = vld [vmem:[%s3 + $0x478] sm:$0xff]
      %1727 = vmatprep.subr.mxu0 0.0
      %1728 = vmatpush1.msra.mxu0 %v1694
      %1729 = vmatprep.subr.mxu0 0.0
      %1730 = vmatpush1.msra.mxu0 %v1693
      %1731 = vmatprep.subr.mxu0 0.0
      %1732 = vmatpush1.msra.mxu0 %v1692
      %1733 = vmatprep.subr.mxu0 0.0
      %1734 = vmatpush1.msra.mxu0 %v1691
      %1735 = vmatprep.subr.mxu0 0.0
      %1736 = vmatpush1.msra.mxu0 %v1690
      %1737 = vmatprep.subr.mxu0 0.0
      %1738 = vmatpush1.msra.mxu0 %v1689
      %1739 = vmatprep.subr.mxu0 0.0
      %1740 = vmatpush1.msra.mxu0 %v1688
      %1741 = vmatprep.subr.mxu0 0.0
      %1742 = vmatpush1.msra.mxu0 %v1687
      %1743 = vmatprep.subr.mxu0 0.0
      %1744 = vmatpush1.msra.mxu0 %v1686
      %1745 = vmatprep.subr.mxu0 0.0
      %1746 = vmatpush1.msra.mxu0 %v1685
      %1747 = vmatprep.subr.mxu0 0.0
      %1748 = vmatpush1.msra.mxu0 %v1684
      %1749 = vmatprep.subr.mxu0 0.0
      %1750 = vmatpush1.msra.mxu0 %v1683
      %1751 = vmatprep.subr.mxu0 0.0
      %1752 = vmatpush1.msra.mxu0 %v1682
      %1753 = vmatprep.subr.mxu0 0.0
      %1754 = vmatpush1.msra.mxu0 %v1681
      %1755 = vmatprep.subr.mxu0 0.0
      %1756 = vmatpush1.msra.mxu0 %v1680
      %1757 = vmatprep.subr.mxu0 0.0
      %1758 = vmatpush1.msra.mxu0 %v1679
      %1759 = vmatprep.subr.mxu0 0.0
      %1760 = vmatpush2.msra.mxu0 %v1710
      %1761 = vmatprep.subr.mxu0 0.0
      %1762 = vmatpush2.msra.mxu0 %v1709
      %1763 = vmatprep.subr.mxu0 0.0
      %1764 = vmatpush2.msra.mxu0 %v1708
      %1765 = vmatprep.subr.mxu0 0.0
      %1766 = vmatpush2.msra.mxu0 %v1707
      %1767 = vmatprep.subr.mxu0 0.0
      %1768 = vmatpush2.msra.mxu0 %v1706
      %1769 = vmatprep.subr.mxu0 0.0
      %1770 = vmatpush2.msra.mxu0 %v1705
      %1771 = vmatprep.subr.mxu0 0.0
      %1772 = vmatpush2.msra.mxu0 %v1704
      %1773 = vmatprep.subr.mxu0 0.0
      %1774 = vmatpush2.msra.mxu0 %v1703
      %1775 = vmatprep.subr.mxu0 0.0
      %1776 = vmatpush2.msra.mxu0 %v1702
      %1777 = vmatprep.subr.mxu0 0.0
      %1778 = vmatpush2.msra.mxu0 %v1701
      %1779 = vmatprep.subr.mxu0 0.0
      %1780 = vmatpush2.msra.mxu0 %v1700
      %1781 = vmatprep.subr.mxu0 0.0
      %1782 = vmatpush2.msra.mxu0 %v1699
      %1783 = vmatprep.subr.mxu0 0.0
      %1784 = vmatpush2.msra.mxu0 %v1698
      %1785 = vmatprep.subr.mxu0 0.0
      %1786 = vmatpush2.msra.mxu0 %v1697
      %1787 = vmatprep.subr.mxu0 0.0
      %1788 = vmatpush2.msra.mxu0 %v1696
      %1789 = vmatprep.subr.mxu0 0.0
      %1790 = vmatpush2.msra.mxu0 %v1695
      %1791 = vmatprep.mubr.f32.mxu0 %v470
      %1792 = vmatmul.mubr.f32.gmra.mxu0 %v866
      %v1793 = vpop.f32.mrf.mxu0
      %v1794 = vadd.f32 0.0, %v1793
      %v1795 = vpop.f32.mrf.mxu0
      %1796 = vmatprep.mubr.f32.mxu0 %v471
      %1797 = vmatmul.mubr.f32.gmra.mxu0 %v867
      %v1798 = vpop.f32.mrf.mxu0
      %v1799 = vadd.f32 0.0, %v1798
      %v1800 = vpop.f32.mrf.mxu0
      %1801 = vmatprep.mubr.f32.mxu0 %v472
      %1802 = vmatmul.mubr.f32.gmra.mxu0 %v868
      %v1803 = vpop.f32.mrf.mxu0
      %v1804 = vadd.f32 0.0, %v1803
      %v1805 = vpop.f32.mrf.mxu0
      %1806 = vmatprep.mubr.f32.mxu0 %v473
      %1807 = vmatmul.mubr.f32.gmra.mxu0 %v869
      %v1808 = vpop.f32.mrf.mxu0
      %v1809 = vadd.f32 0.0, %v1808
      %v1810 = vpop.f32.mrf.mxu0
      %1811 = vmatprep.mubr.f32.mxu0 %v474
      %1812 = vmatmul.mubr.f32.gmra.mxu0 %v870
      %v1813 = vpop.f32.mrf.mxu0
      %v1814 = vadd.f32 0.0, %v1813
      %v1815 = vpop.f32.mrf.mxu0
      %1816 = vmatprep.mubr.f32.mxu0 %v475
      %1817 = vmatmul.mubr.f32.gmra.mxu0 %v871
      %v1818 = vpop.f32.mrf.mxu0
      %v1819 = vadd.f32 0.0, %v1818
      %v1820 = vpop.f32.mrf.mxu0
      %1821 = vmatprep.mubr.f32.mxu0 %v476
      %1822 = vmatmul.mubr.f32.gmra.mxu0 %v872
      %v1823 = vpop.f32.mrf.mxu0
      %v1824 = vadd.f32 0.0, %v1823
      %v1825 = vpop.f32.mrf.mxu0
      %1826 = vmatprep.mubr.f32.mxu0 %v477
      %1827 = vmatmul.mubr.f32.gmra.mxu0 %v873
      %v1828 = vpop.f32.mrf.mxu0
      %v1829 = vadd.f32 0.0, %v1828
      %v1830 = vpop.f32.mrf.mxu0
      %1831 = vmatprep.mubr.f32.mxu0 %v478
      %1832 = vmatmul.mubr.f32.gmra.mxu0 %v874
      %v1833 = vpop.f32.mrf.mxu0
      %v1834 = vadd.f32 0.0, %v1833
      %v1835 = vpop.f32.mrf.mxu0
      %1836 = vmatprep.mubr.f32.mxu0 %v479
      %1837 = vmatmul.mubr.f32.gmra.mxu0 %v875
      %v1838 = vpop.f32.mrf.mxu0
      %v1839 = vadd.f32 0.0, %v1838
      %v1840 = vpop.f32.mrf.mxu0
      %1841 = vmatprep.mubr.f32.mxu0 %v480
      %1842 = vmatmul.mubr.f32.gmra.mxu0 %v876
      %v1843 = vpop.f32.mrf.mxu0
      %v1844 = vadd.f32 0.0, %v1843
      %v1845 = vpop.f32.mrf.mxu0
      %1846 = vmatprep.mubr.f32.mxu0 %v481
      %1847 = vmatmul.mubr.f32.gmra.mxu0 %v877
      %v1848 = vpop.f32.mrf.mxu0
      %v1849 = vadd.f32 0.0, %v1848
      %v1850 = vpop.f32.mrf.mxu0
      %1851 = vmatprep.mubr.f32.mxu0 %v482
      %1852 = vmatmul.mubr.f32.gmra.mxu0 %v878
      %v1853 = vpop.f32.mrf.mxu0
      %v1854 = vadd.f32 0.0, %v1853
      %v1855 = vpop.f32.mrf.mxu0
      %1856 = vmatprep.mubr.f32.mxu0 %v483
      %1857 = vmatmul.mubr.f32.gmra.mxu0 %v879
      %v1858 = vpop.f32.mrf.mxu0
      %v1859 = vadd.f32 0.0, %v1858
      %v1860 = vpop.f32.mrf.mxu0
      %1861 = vmatprep.mubr.f32.mxu0 %v498
      %1862 = vmatmul.mubr.f32.gmra.mxu0 %v880
      %v1863 = vpop.f32.mrf.mxu0
      %v1864 = vadd.f32 0.0, %v1863
      %v1865 = vpop.f32.mrf.mxu0
      %1866 = vmatprep.mubr.f32.mxu0 %v499
      %1867 = vmatmul.mubr.f32.gmra.mxu0 %v881
      %v1868 = vpop.f32.mrf.mxu0
      %v1869 = vadd.f32 0.0, %v1868
      %v1870 = vpop.f32.mrf.mxu0
      %1871 = vdwg.mxu0
      %1872 = vmatprep.subr.mxu0 0.0
      %1873 = vmatpush1.msra.mxu0 %v1726
      %1874 = vmatprep.subr.mxu0 0.0
      %1875 = vmatpush1.msra.mxu0 %v1725
      %1876 = vmatprep.subr.mxu0 0.0
      %1877 = vmatpush1.msra.mxu0 %v1724
      %1878 = vmatprep.subr.mxu0 0.0
      %1879 = vmatpush1.msra.mxu0 %v1723
      %1880 = vmatprep.subr.mxu0 0.0
      %1881 = vmatpush1.msra.mxu0 %v1722
      %1882 = vmatprep.subr.mxu0 0.0
      %1883 = vmatpush1.msra.mxu0 %v1721
      %1884 = vmatprep.subr.mxu0 0.0
      %1885 = vmatpush1.msra.mxu0 %v1720
      %1886 = vmatprep.subr.mxu0 0.0
      %1887 = vmatpush1.msra.mxu0 %v1719
      %1888 = vmatprep.subr.mxu0 0.0
      %1889 = vmatpush1.msra.mxu0 %v1718
      %1890 = vmatprep.subr.mxu0 0.0
      %1891 = vmatpush1.msra.mxu0 %v1717
      %1892 = vmatprep.subr.mxu0 0.0
      %1893 = vmatpush1.msra.mxu0 %v1716
      %1894 = vmatprep.subr.mxu0 0.0
      %1895 = vmatpush1.msra.mxu0 %v1715
      %1896 = vmatprep.subr.mxu0 0.0
      %1897 = vmatpush1.msra.mxu0 %v1714
      %1898 = vmatprep.subr.mxu0 0.0
      %1899 = vmatpush1.msra.mxu0 %v1713
      %1900 = vmatprep.subr.mxu0 0.0
      %1901 = vmatpush1.msra.mxu0 %v1712
      %1902 = vmatprep.subr.mxu0 0.0
      %1903 = vmatpush1.msra.mxu0 %v1711
      %1904 = vmatprep.subr.mxu0 0.0
      %1905 = vmatpush2.msra.mxu0 0.0
      %1906 = vmatprep.subr.mxu0 0.0
      %1907 = vmatpush2.msra.mxu0 0.0
      %1908 = vmatprep.subr.mxu0 0.0
      %1909 = vmatpush2.msra.mxu0 0.0
      %1910 = vmatprep.subr.mxu0 0.0
      %1911 = vmatpush2.msra.mxu0 0.0
      %1912 = vmatprep.subr.mxu0 0.0
      %1913 = vmatpush2.msra.mxu0 0.0
      %1914 = vmatprep.subr.mxu0 0.0
      %1915 = vmatpush2.msra.mxu0 0.0
      %1916 = vmatprep.subr.mxu0 0.0
      %1917 = vmatpush2.msra.mxu0 0.0
      %1918 = vmatprep.subr.mxu0 0.0
      %1919 = vmatpush2.msra.mxu0 0.0
      %1920 = vmatprep.subr.mxu0 0.0
      %1921 = vmatpush2.msra.mxu0 0.0
      %1922 = vmatprep.subr.mxu0 0.0
      %1923 = vmatpush2.msra.mxu0 0.0
      %1924 = vmatprep.subr.mxu0 0.0
      %1925 = vmatpush2.msra.mxu0 0.0
      %1926 = vmatprep.subr.mxu0 0.0
      %1927 = vmatpush2.msra.mxu0 0.0
      %1928 = vmatprep.subr.mxu0 0.0
      %1929 = vmatpush2.msra.mxu0 0.0
      %1930 = vmatprep.subr.mxu0 0.0
      %1931 = vmatpush2.msra.mxu0 0.0
      %1932 = vmatprep.subr.mxu0 0.0
      %1933 = vmatpush2.msra.mxu0 0.0
      %1934 = vmatprep.subr.mxu0 0.0
      %1935 = vmatpush2.msra.mxu0 0.0
      %1936 = vmatprep.mubr.f32.mxu0 0.0
      %1937 = vmatmul.mubr.f32.gmra.mxu0 %v987
      %v1938 = vpop.f32.mrf.mxu0
      %v1939 = vadd.f32 %v1794, %v1938
      %v1940 = vpop.f32.mrf.mxu0
      %1941 = vmatprep.mubr.f32.mxu0 0.0
      %1942 = vmatmul.mubr.f32.gmra.mxu0 %v988
      %v1943 = vpop.f32.mrf.mxu0
      %v1944 = vadd.f32 %v1799, %v1943
      %v1945 = vpop.f32.mrf.mxu0
      %1946 = vmatprep.mubr.f32.mxu0 0.0
      %1947 = vmatmul.mubr.f32.gmra.mxu0 %v989
      %v1948 = vpop.f32.mrf.mxu0
      %v1949 = vadd.f32 %v1804, %v1948
      %v1950 = vpop.f32.mrf.mxu0
      %1951 = vmatprep.mubr.f32.mxu0 0.0
      %1952 = vmatmul.mubr.f32.gmra.mxu0 %v990
      %v1953 = vpop.f32.mrf.mxu0
      %v1954 = vadd.f32 %v1809, %v1953
      %v1955 = vpop.f32.mrf.mxu0
      %1956 = vmatprep.mubr.f32.mxu0 0.0
      %1957 = vmatmul.mubr.f32.gmra.mxu0 %v991
      %v1958 = vpop.f32.mrf.mxu0
      %v1959 = vadd.f32 %v1814, %v1958
      %v1960 = vpop.f32.mrf.mxu0
      %1961 = vmatprep.mubr.f32.mxu0 0.0
      %1962 = vmatmul.mubr.f32.gmra.mxu0 %v992
      %v1963 = vpop.f32.mrf.mxu0
      %v1964 = vadd.f32 %v1819, %v1963
      %v1965 = vpop.f32.mrf.mxu0
      %1966 = vmatprep.mubr.f32.mxu0 0.0
      %1967 = vmatmul.mubr.f32.gmra.mxu0 %v993
      %v1968 = vpop.f32.mrf.mxu0
      %v1969 = vadd.f32 %v1824, %v1968
      %v1970 = vpop.f32.mrf.mxu0
      %1971 = vmatprep.mubr.f32.mxu0 0.0
      %1972 = vmatmul.mubr.f32.gmra.mxu0 %v994
      %v1973 = vpop.f32.mrf.mxu0
      %v1974 = vadd.f32 %v1829, %v1973
      %v1975 = vpop.f32.mrf.mxu0
      %1976 = vmatprep.mubr.f32.mxu0 0.0
      %1977 = vmatmul.mubr.f32.gmra.mxu0 %v995
      %v1978 = vpop.f32.mrf.mxu0
      %v1979 = vadd.f32 %v1834, %v1978
      %v1980 = vpop.f32.mrf.mxu0
      %1981 = vmatprep.mubr.f32.mxu0 0.0
      %1982 = vmatmul.mubr.f32.gmra.mxu0 %v996
      %v1983 = vpop.f32.mrf.mxu0
      %v1984 = vadd.f32 %v1839, %v1983
      %v1985 = vpop.f32.mrf.mxu0
      %1986 = vmatprep.mubr.f32.mxu0 0.0
      %1987 = vmatmul.mubr.f32.gmra.mxu0 %v997
      %v1988 = vpop.f32.mrf.mxu0
      %v1989 = vadd.f32 %v1844, %v1988
      %v1990 = vpop.f32.mrf.mxu0
      %1991 = vmatprep.mubr.f32.mxu0 0.0
      %1992 = vmatmul.mubr.f32.gmra.mxu0 %v998
      %v1993 = vpop.f32.mrf.mxu0
      %v1994 = vadd.f32 %v1849, %v1993
      %v1995 = vpop.f32.mrf.mxu0
      %1996 = vmatprep.mubr.f32.mxu0 0.0
      %1997 = vmatmul.mubr.f32.gmra.mxu0 %v999
      %v1998 = vpop.f32.mrf.mxu0
      %v1999 = vadd.f32 %v1854, %v1998
      %v2000 = vpop.f32.mrf.mxu0
      %2001 = vmatprep.mubr.f32.mxu0 0.0
      %2002 = vmatmul.mubr.f32.gmra.mxu0 %v1000
      %v2003 = vpop.f32.mrf.mxu0
      %v2004 = vadd.f32 %v1859, %v2003
      %v2005 = vpop.f32.mrf.mxu0
      %2006 = vmatprep.mubr.f32.mxu0 0.0
      %2007 = vmatmul.mubr.f32.gmra.mxu0 %v1001
      %v2008 = vpop.f32.mrf.mxu0
      %v2009 = vadd.f32 %v1864, %v2008
      %v2010 = vpop.f32.mrf.mxu0
      %2011 = vmatprep.mubr.f32.mxu0 0.0
      %2012 = vmatmul.mubr.f32.gmra.mxu0 %v1002
      %v2013 = vpop.f32.mrf.mxu0
      %v2014 = vadd.f32 %v1869, %v2013
      %v2015 = vpop.f32.mrf.mxu0
      %2016 = vdwg.mxu0
      %v2017 = vadd.f32 %v1601, %v1939
      %v2018 = vadd.f32 %v1606, %v1944
      %v2019 = vadd.f32 %v1611, %v1949
      %v2020 = vadd.f32 %v1616, %v1954
      %v2021 = vadd.f32 %v1621, %v1959
      %v2022 = vadd.f32 %v1626, %v1964
      %v2023 = vadd.f32 %v1631, %v1969
      %v2024 = vadd.f32 %v1636, %v1974
      %v2025 = vadd.f32 %v1641, %v1979
      %v2026 = vadd.f32 %v1646, %v1984
      %v2027 = vadd.f32 %v1651, %v1989
      %v2028 = vadd.f32 %v1656, %v1994
      %v2029 = vadd.f32 %v1661, %v1999
      %v2030 = vadd.f32 %v1666, %v2004
      %v2031 = vadd.f32 %v1671, %v2009
      %v2032 = vadd.f32 %v1676, %v2014
      %v2033 = vadd.f32 %v2017, %v2018
      %v2034 = vadd.f32 %v2033, %v2019
      %v2035 = vadd.f32 %v2034, %v2020
      %v2036 = vadd.f32 %v2035, %v2021
      %v2037 = vadd.f32 %v2036, %v2022
      %v2038 = vadd.f32 %v2037, %v2023
      %v2039 = vadd.f32 %v2038, %v2024
      %v2040 = vadd.f32 %v2039, %v2025
      %v2041 = vadd.f32 %v2040, %v2026
      %v2042 = vadd.f32 %v2041, %v2027
      %v2043 = vadd.f32 %v2042, %v2028
      %v2044 = vadd.f32 %v2043, %v2029
      %v2045 = vadd.f32 %v2044, %v2030
      %v2046 = vadd.f32 %v2045, %v2031
      %v2047 = vadd.f32 %v2046, %v2032
      %v2048 = vrot.slane %v2047, 4
      %v2049 = vadd.f32 %v2047, %v2048
      %v2050 = vrot.slane %v2049, 2
      %v2051 = vadd.f32 %v2049, %v2050
      %v2052 = vrot.slane %v2051, 1
      %v2053 = vadd.f32 %v2051, %v2052
      %v2054 = vmul.f32 %v2017, %v2017
      %v2055 = vmul.f32 %v2018, %v2018
      %v2056 = vmul.f32 %v2019, %v2019
      %v2057 = vmul.f32 %v2020, %v2020
      %v2058 = vmul.f32 %v2021, %v2021
      %v2059 = vmul.f32 %v2022, %v2022
      %v2060 = vmul.f32 %v2023, %v2023
      %v2061 = vmul.f32 %v2024, %v2024
      %v2062 = vmul.f32 %v2025, %v2025
      %v2063 = vmul.f32 %v2026, %v2026
      %v2064 = vmul.f32 %v2027, %v2027
      %v2065 = vmul.f32 %v2028, %v2028
      %v2066 = vmul.f32 %v2029, %v2029
      %v2067 = vmul.f32 %v2030, %v2030
      %v2068 = vmul.f32 %v2031, %v2031
      %v2069 = vmul.f32 %v2032, %v2032
      %v2070 = vadd.f32 %v2054, %v2055
      %v2071 = vadd.f32 %v2070, %v2056
      %v2072 = vadd.f32 %v2071, %v2057
      %v2073 = vadd.f32 %v2072, %v2058
      %v2074 = vadd.f32 %v2073, %v2059
      %v2075 = vadd.f32 %v2074, %v2060
      %v2076 = vadd.f32 %v2075, %v2061
      %v2077 = vadd.f32 %v2076, %v2062
      %v2078 = vadd.f32 %v2077, %v2063
      %v2079 = vadd.f32 %v2078, %v2064
      %v2080 = vadd.f32 %v2079, %v2065
      %v2081 = vadd.f32 %v2080, %v2066
      %v2082 = vadd.f32 %v2081, %v2067
      %v2083 = vadd.f32 %v2082, %v2068
      %v2084 = vadd.f32 %v2083, %v2069
      %v2085 = vrot.slane %v2084, 4
      %v2086 = vadd.f32 %v2084, %v2085
      %v2087 = vrot.slane %v2086, 2
      %v2088 = vadd.f32 %v2086, %v2087
      %v2089 = vrot.slane %v2088, 1
      %v2090 = vadd.f32 %v2088, %v2089
      %vm2091 = vcmp.eq.s32.totalorder %v501, 0
      %vm2092 = vcmp.eq.s32.totalorder %v501, 1
      %v2093 = vsel %vm2092, %v2090, 0.0
      %v2094 = vsel %vm2091, %v2053, %v2093
      %2095 = vst [vmem:[%s467] sm:$0xff] %v2094
      %2096 = vst [vmem:[%s458] sm:$0xff] %v2017
      %2097 = vst [vmem:[%s458 + $0x8] sm:$0xff] %v2018
      %2098 = vst [vmem:[%s458 + $0x10] sm:$0xff] %v2019
      %2099 = vst [vmem:[%s458 + $0x18] sm:$0xff] %v2020
      %2100 = vst [vmem:[%s458 + $0x20] sm:$0xff] %v2021
      %2101 = vst [vmem:[%s458 + $0x28] sm:$0xff] %v2022
      %2102 = vst [vmem:[%s458 + $0x30] sm:$0xff] %v2023
      %2103 = vst [vmem:[%s458 + $0x38] sm:$0xff] %v2024
      %2104 = vst [vmem:[%s458 + $0x40] sm:$0xff] %v2025
      %2105 = vst [vmem:[%s458 + $0x48] sm:$0xff] %v2026
      %2106 = vst [vmem:[%s458 + $0x50] sm:$0xff] %v2027
      %2107 = vst [vmem:[%s458 + $0x58] sm:$0xff] %v2028
      %2108 = vst [vmem:[%s458 + $0x60] sm:$0xff] %v2029
      %2109 = vst [vmem:[%s458 + $0x68] sm:$0xff] %v2030
      %2110 = vst [vmem:[%s458 + $0x70] sm:$0xff] %v2031
      %2111 = vst [vmem:[%s458 + $0x78] sm:$0xff] %v2032
      %s2112 = smul.u32 8, %s24
      %p2113 = scmp.lt.s32.totalorder %s23, 1
      %s2114 = scalar_select %p2113, %s23, 1
      %p2115 = scmp.lt.s32.totalorder %s2112, 15
      %s2116 = scalar_select %p2115, %s2112, 15
      %s2117 = smul.addr %s2116, 2
      %s2118 = smul.addr %s2114, 32
      %s2119 = sadd.s32 %s2117, %s2118
      %s2120 = smul.addr %s2119, 8
      %s2121 = scalar_lea.vmem %s6, %s2120
      %p2122 = scmp.lt.s32.totalorder %s23, 1
      %s2123 = scalar_select %p2122, %s23, 1
      %p2124 = scmp.lt.s32.totalorder %s24, 1
      %s2125 = scalar_select %p2124, %s24, 1
      %s2126 = smul.addr %s2123, 2
      %s2127 = sadd.s32 %s2125, %s2126
      %s2128 = smul.addr %s2127, 8
      %s2129 = scalar_lea.vmem %s7, %s2128
      // Predicated region
      $region45: #{encoding_block.3} parent=43 // pred_check
        %p2130 = pneg %p214
      $region46: #{encoding_block.3} parent=43 // pred_check_branch
        %2132 = sbr.rel (%p2130) target = $region48
      $region47: #{encoding_block.3} parent=43 // pred_region
        %s2133 = smul.u32 8, %s24
      $region48: #{encoding_block.3} parent=43 // pred_fallthru
        _
      // Predicated region
      $region49: #{encoding_block.3} parent=43 // pred_check
        %p2134 = pneg %p242
      $region50: #{encoding_block.3} parent=43 // pred_check_branch
        %2136 = sbr.rel (%p2134) target = $region52
      $region51: #{encoding_block.3} parent=43 // pred_region
        _
      $region52: #{encoding_block.3} parent=43 // pred_fallthru
        _
    $region44: #{encoding_block.3} parent=5 // pred_fallthru
      _
    %p2137 = scmp.le.s32.totalorder 2, %s14
    // Predicated region
    $region53: #{encoding_block.3} parent=5 // pred_check
      %p2138 = pneg %p2137
    $region54: #{encoding_block.3} parent=5 // pred_check_branch
      %2140 = sbr.rel (%p2138) target = $region56
    $region55: #{encoding_block.3} parent=5 // pred_region
      %s2141 = ssub.s32 %s14, 2
      // Predicated region
      $region57: #{encoding_block.3} parent=55 // pred_check
        %p2142 = pneg %p220
      $region58: #{encoding_block.3} parent=55 // pred_check_branch
        %2144 = sbr.rel (%p2142) target = $region60
      $region59: #{encoding_block.3} parent=55 // pred_region
        %s2145 = smul.u32 8, %s26
        %p2146 = scmp.lt.s32.totalorder %s25, 1
        %s2147 = scalar_select %p2146, %s25, 1
        %p2148 = scmp.lt.s32.totalorder %s2145, 15
        %s2149 = scalar_select %p2148, %s2145, 15
        %s2150 = smul.addr %s2149, 2
        %s2151 = smul.addr %s2147, 32
        %s2152 = sadd.s32 %s2150, %s2151
        %s2153 = smul.addr %s2152, 8
        %s2154 = scalar_lea.vmem %s6, %s2153
      $region60: #{encoding_block.3} parent=55 // pred_fallthru
        _
      // Predicated region
      $region61: #{encoding_block.3} parent=55 // pred_check
        %p2155 = pneg %p248
      $region62: #{encoding_block.3} parent=55 // pred_check_branch
        %2157 = sbr.rel (%p2155) target = $region64
      $region63: #{encoding_block.3} parent=55 // pred_region
        %p2158 = scmp.lt.s32.totalorder %s25, 1
        %s2159 = scalar_select %p2158, %s25, 1
        %p2160 = scmp.lt.s32.totalorder %s26, 1
        %s2161 = scalar_select %p2160, %s26, 1
        %s2162 = smul.addr %s2159, 2
        %s2163 = sadd.s32 %s2161, %s2162
        %s2164 = smul.addr %s2163, 8
        %s2165 = scalar_lea.vmem %s7, %s2164
      $region64: #{encoding_block.3} parent=55 // pred_fallthru
        _
    $region56: #{encoding_block.3} parent=5 // pred_fallthru
      _
  $region6: #{encoding_block.3} parent=0 // loop_footer
    %s18 = sadd.s32 1, %s14
  $region7: #{encoding_block.3} parent=0 // loop_footer_branch
    %13 = sbr.rel target = $region3
  $region8: #{encoding_block.3} parent=0 // loop_exit
    _

// kernel: encoding_block.4
$region0: #{encoding_block.4}
  #allocation0 [shape = 'u32[]', space=smem, size = 0x4, offset = 0x4, fixed_abs, tag = 'smem constant byte address 0x4 - core index']
  #allocation1 [shape = 'u32[144,128]{1,0:T(1,128)}', space=vmem, size = 0x12000, scoped, tag = 'internal scratch']
  %s0 = inlined_call_operand.vmem [shape: f32[2,16,16,128], index: 0, kind: input, shape index: {}, may-alias: {0,1,2}]
  %s1 = inlined_call_operand.vmem [shape: f32[2,16,16,128], index: 1, kind: input, shape index: {}, may-alias: {0,1,2}]
  %s2 = inlined_call_operand.vmem [shape: f32[2,16,16,128], index: 2, kind: input, shape index: {}, may-alias: {0,1,2}]
  %s3 = inlined_call_operand.vmem [shape: f32[1152,128], index: 3, kind: input, shape index: {}]
  %s4 = inlined_call_operand.vmem [shape: f32[1,128], index: 4, kind: input, shape index: {}]
  %s5 = inlined_call_operand.vmem [shape: f32[1,128], index: 5, kind: input, shape index: {}]
  %s6 = inlined_call_operand.vmem [shape: f32[2,16,16,128], index: 6, kind: output, shape index: {0}]
  %s7 = inlined_call_operand.vmem [shape: f32[2,2,8,128], index: 7, kind: output, shape index: {1}]
  %8 = xla_tuple %s6, %s7
  %s9 = sld [smem:[#allocation0]]
  $region65: #{encoding_block.4} parent=0
    _
  %s11 = ssub.s32 1, %s9
  %s12 = scalar_select 0, %s11, %s9
  loop: start=0, step=1, limit=6
  $region2: #{encoding_block.4} parent=0 // loop_pre_header
    _
  $region3: #{encoding_block.4} parent=0 // loop_header
    %s14 = sphi 0, %s18
    %p15 = scmp.ge.s32.totalorder %s14, 6
    %s21 = sphi 0, %s33
    %s22 = sphi 0, %s29
    %s23 = sphi 0, %s21
    %s24 = sphi 0, %s22
    %s25 = sphi 0, %s23
    %s26 = sphi 0, %s24
    %s38 = sphi 0, %s40
    %s41 = sphi 0, %s38
    %s42 = sphi 0, %s41
    %s58 = sphi 0, %s42
    %s74 = sphi 0, %s76
    %s77 = sphi 0, %s74
    %s78 = sphi 0, %s77
    %s94 = sphi 0, %s78
    %s110 = sphi 0, %s112
    %s113 = sphi 0, %s110
    %s114 = sphi 0, %s113
    %s130 = sphi 0, %s114
    %s134 = sphi 0, %s134
    %s136 = sphi 0, %s134
    %s137 = sphi 0, %s136
    %s151 = sphi 0, %s137
    %s155 = sphi 0, %s155
    %s157 = sphi 0, %s155
    %s158 = sphi 0, %s157
    %s172 = sphi 0, %s158
    %s176 = sphi 0, %s176
    %s178 = sphi 0, %s176
    %s179 = sphi 0, %s178
    %s193 = sphi 0, %s179
    %s201 = sphi 0, %s203
    %s204 = sphi 0, %s201
    %s205 = sphi 0, %s204
    %s221 = sphi 0, %s205
    %s229 = sphi 0, %s231
    %s232 = sphi 0, %s229
    %s233 = sphi 0, %s232
    %s249 = sphi 0, %s233
  $region4: #{encoding_block.4} parent=0 // loop_header_branch
    %17 = sbr.rel (%p15) target = $region8
  $region5: #{encoding_block.4} parent=0 // loop_body
    %s19 = ssub.s32 %s14, 1
    %s20 = ssub.s32 %s14, 2
    %s27 = sadd.s32 1, %s22
    %p28 = scmp.ge.s32.totalorder %s27, 2
    %s29 = scalar_select %p28, 0, %s27
    %s30 = sadd.s32 1, %s21
    %s31 = scalar_select %p28, %s30, %s21
    %p32 = scmp.ge.s32.totalorder %s31, 2
    %s33 = scalar_select %p32, 0, %s31
    %s34 = ssub.s32 %s21, %s33
    %s35 = ssub.s32 %s22, %s29
    %s36 = sor.u32 %s34, %s35
    %p37 = scmp.eq.s32.totalorder %s36, 0
    %s39 = sadd.s32 %s38, 1
    %s40 = scalar_select %p37, %s38, %s39
    %p43 = pneg %p37
    %p44 = scmp.eq.s32.totalorder %s14, 3
    %p45 = por %p43, %p44
    %p46 = scmp.ne.s32.totalorder %s38, %s41
    %p47 = scmp.eq.s32.totalorder %s14, 0
    %p48 = por %p46, %p47
    %p49 = scmp.ne.s32.totalorder %s38, %s41
    %p50 = scmp.eq.s32.totalorder %s19, 3
    %p51 = por %p49, %p50
    %p52 = scmp.ne.s32.totalorder %s41, %s42
    %p53 = scmp.eq.s32.totalorder %s19, 0
    %p54 = por %p52, %p53
    %p55 = scmp.ne.s32.totalorder %s41, %s42
    %p56 = scmp.eq.s32.totalorder %s20, 3
    %p57 = por %p55, %p56
    %p59 = scmp.ne.s32.totalorder %s42, %s58
    %p60 = scmp.eq.s32.totalorder %s20, 0
    %p61 = por %p59, %p60
    %s62 = smul.u32 %s22, 8
    %s63 = ssub.s32 %s62, 1
    %p64 = scmp.gt.s32.totalorder %s63, 0
    %s65 = scalar_select %p64, %s63, 0
    %s66 = smul.u32 %s29, 8
    %s67 = ssub.s32 %s66, 1
    %p68 = scmp.gt.s32.totalorder %s67, 0
    %s69 = scalar_select %p68, %s67, 0
    %s70 = ssub.s32 %s21, %s33
    %s71 = ssub.s32 %s65, %s69
    %s72 = sor.u32 %s70, %s71
    %p73 = scmp.eq.s32.totalorder %s72, 0
    %s75 = sadd.s32 %s74, 1
    %s76 = scalar_select %p73, %s74, %s75
    %p79 = pneg %p73
    %p80 = scmp.eq.s32.totalorder %s14, 3
    %p81 = por %p79, %p80
    %p82 = scmp.ne.s32.totalorder %s74, %s77
    %p83 = scmp.eq.s32.totalorder %s14, 0
    %p84 = por %p82, %p83
    %p85 = scmp.ne.s32.totalorder %s74, %s77
    %p86 = scmp.eq.s32.totalorder %s19, 3
    %p87 = por %p85, %p86
    %p88 = scmp.ne.s32.totalorder %s77, %s78
    %p89 = scmp.eq.s32.totalorder %s19, 0
    %p90 = por %p88, %p89
    %p91 = scmp.ne.s32.totalorder %s77, %s78
    %p92 = scmp.eq.s32.totalorder %s20, 3
    %p93 = por %p91, %p92
    %p95 = scmp.ne.s32.totalorder %s78, %s94
    %p96 = scmp.eq.s32.totalorder %s20, 0
    %p97 = por %p95, %p96
    %s98 = sadd.s32 %s22, 1
    %s99 = smul.u32 %s98, 8
    %p100 = scmp.lt.s32.totalorder %s99, 15
    %s101 = scalar_select %p100, %s99, 15
    %s102 = sadd.s32 %s29, 1
    %s103 = smul.u32 %s102, 8
    %p104 = scmp.lt.s32.totalorder %s103, 15
    %s105 = scalar_select %p104, %s103, 15
    %s106 = ssub.s32 %s21, %s33
    %s107 = ssub.s32 %s101, %s105
    %s108 = sor.u32 %s106, %s107
    %p109 = scmp.eq.s32.totalorder %s108, 0
    %s111 = sadd.s32 %s110, 1
    %s112 = scalar_select %p109, %s110, %s111
    %p115 = pneg %p109
    %p116 = scmp.eq.s32.totalorder %s14, 3
    %p117 = por %p115, %p116
    %p118 = scmp.ne.s32.totalorder %s110, %s113
    %p119 = scmp.eq.s32.totalorder %s14, 0
    %p120 = por %p118, %p119
    %p121 = scmp.ne.s32.totalorder %s110, %s113
    %p122 = scmp.eq.s32.totalorder %s19, 3
    %p123 = por %p121, %p122
    %p124 = scmp.ne.s32.totalorder %s113, %s114
    %p125 = scmp.eq.s32.totalorder %s19, 0
    %p126 = por %p124, %p125
    %p127 = scmp.ne.s32.totalorder %s113, %s114
    %p128 = scmp.eq.s32.totalorder %s20, 3
    %p129 = por %p127, %p128
    %p131 = scmp.ne.s32.totalorder %s114, %s130
    %p132 = scmp.eq.s32.totalorder %s20, 0
    %p133 = por %p131, %p132
    %s135 = sadd.s32 %s134, 1
    %p138 = scmp.eq.s32.totalorder %s14, 3
    %p139 = scmp.ne.s32.totalorder %s134, %s136
    %p140 = scmp.eq.s32.totalorder %s14, 0
    %p141 = por %p139, %p140
    %p142 = scmp.ne.s32.totalorder %s134, %s136
    %p143 = scmp.eq.s32.totalorder %s19, 3
    %p144 = por %p142, %p143
    %p145 = scmp.ne.s32.totalorder %s136, %s137
    %p146 = scmp.eq.s32.totalorder %s19, 0
    %p147 = por %p145, %p146
    %p148 = scmp.ne.s32.totalorder %s136, %s137
    %p149 = scmp.eq.s32.totalorder %s20, 3
    %p150 = por %p148, %p149
    %p152 = scmp.ne.s32.totalorder %s137, %s151
    %p153 = scmp.eq.s32.totalorder %s20, 0
    %p154 = por %p152, %p153
    %s156 = sadd.s32 %s155, 1
    %p159 = scmp.eq.s32.totalorder %s14, 3
    %p160 = scmp.ne.s32.totalorder %s155, %s157
    %p161 = scmp.eq.s32.totalorder %s14, 0
    %p162 = por %p160, %p161
    %p163 = scmp.ne.s32.totalorder %s155, %s157
    %p164 = scmp.eq.s32.totalorder %s19, 3
    %p165 = por %p163, %p164
    %p166 = scmp.ne.s32.totalorder %s157, %s158
    %p167 = scmp.eq.s32.totalorder %s19, 0
    %p168 = por %p166, %p167
    %p169 = scmp.ne.s32.totalorder %s157, %s158
    %p170 = scmp.eq.s32.totalorder %s20, 3
    %p171 = por %p169, %p170
    %p173 = scmp.ne.s32.totalorder %s158, %s172
    %p174 = scmp.eq.s32.totalorder %s20, 0
    %p175 = por %p173, %p174
    %s177 = sadd.s32 %s176, 1
    %p180 = scmp.eq.s32.totalorder %s14, 3
    %p181 = scmp.ne.s32.totalorder %s176, %s178
    %p182 = scmp.eq.s32.totalorder %s14, 0
    %p183 = por %p181, %p182
    %p184 = scmp.ne.s32.totalorder %s176, %s178
    %p185 = scmp.eq.s32.totalorder %s19, 3
    %p186 = por %p184, %p185
    %p187 = scmp.ne.s32.totalorder %s178, %s179
    %p188 = scmp.eq.s32.totalorder %s19, 0
    %p189 = por %p187, %p188
    %p190 = scmp.ne.s32.totalorder %s178, %s179
    %p191 = scmp.eq.s32.totalorder %s20, 3
    %p192 = por %p190, %p191
    %p194 = scmp.ne.s32.totalorder %s179, %s193
    %p195 = scmp.eq.s32.totalorder %s20, 0
    %p196 = por %p194, %p195
    %s197 = ssub.s32 %s21, %s33
    %s198 = ssub.s32 %s22, %s29
    %s199 = sor.u32 %s197, %s198
    %p200 = scmp.eq.s32.totalorder %s199, 0
    %s202 = sadd.s32 %s201, 1
    %s203 = scalar_select %p200, %s201, %s202
    %p206 = pneg %p200
    %p207 = scmp.eq.s32.totalorder %s14, 3
    %p208 = por %p206, %p207
    %p209 = scmp.ne.s32.totalorder %s201, %s204
    %p210 = scmp.eq.s32.totalorder %s14, 0
    %p211 = por %p209, %p210
    %p212 = scmp.ne.s32.totalorder %s201, %s204
    %p213 = scmp.eq.s32.totalorder %s19, 3
    %p214 = por %p212, %p213
    %p215 = scmp.ne.s32.totalorder %s204, %s205
    %p216 = scmp.eq.s32.totalorder %s19, 0
    %p217 = por %p215, %p216
    %p218 = scmp.ne.s32.totalorder %s204, %s205
    %p219 = scmp.eq.s32.totalorder %s20, 3
    %p220 = por %p218, %p219
    %p222 = scmp.ne.s32.totalorder %s205, %s221
    %p223 = scmp.eq.s32.totalorder %s20, 0
    %p224 = por %p222, %p223
    %s225 = ssub.s32 %s21, %s33
    %s226 = ssub.s32 %s22, %s29
    %s227 = sor.u32 %s225, %s226
    %p228 = scmp.eq.s32.totalorder %s227, 0
    %s230 = sadd.s32 %s229, 1
    %s231 = scalar_select %p228, %s229, %s230
    %p234 = pneg %p228
    %p235 = scmp.eq.s32.totalorder %s14, 3
    %p236 = por %p234, %p235
    %p237 = scmp.ne.s32.totalorder %s229, %s232
    %p238 = scmp.eq.s32.totalorder %s14, 0
    %p239 = por %p237, %p238
    %p240 = scmp.ne.s32.totalorder %s229, %s232
    %p241 = scmp.eq.s32.totalorder %s19, 3
    %p242 = por %p240, %p241
    %p243 = scmp.ne.s32.totalorder %s232, %s233
    %p244 = scmp.eq.s32.totalorder %s19, 0
    %p245 = por %p243, %p244
    %p246 = scmp.ne.s32.totalorder %s232, %s233
    %p247 = scmp.eq.s32.totalorder %s20, 3
    %p248 = por %p246, %p247
    %p250 = scmp.ne.s32.totalorder %s233, %s249
    %p251 = scmp.eq.s32.totalorder %s20, 0
    %p252 = por %p250, %p251
    %p253 = scmp.le.s32.totalorder 1, %s14
    %p254 = scmp.lt.s32.totalorder %s14, 5
    %p255 = pnand %p253, %p254
    %p256 = pneg %p255
    // Predicated region
    $region9: #{encoding_block.4} parent=5 // pred_check
      _
    $region10: #{encoding_block.4} parent=5 // pred_check_branch
      %258 = sbr.rel (%p255) target = $region12
    $region11: #{encoding_block.4} parent=5 // pred_region
      %s259 = ssub.s32 %s14, 1
      // Predicated region
      $region13: #{encoding_block.4} parent=11 // pred_check
        %p260 = pneg %p147
      $region14: #{encoding_block.4} parent=11 // pred_check_branch
        %262 = sbr.rel (%p260) target = $region16
      $region15: #{encoding_block.4} parent=11 // pred_region
        _
      $region16: #{encoding_block.4} parent=11 // pred_fallthru
        _
      // Predicated region
      $region17: #{encoding_block.4} parent=11 // pred_check
        %p263 = pneg %p168
      $region18: #{encoding_block.4} parent=11 // pred_check_branch
        %265 = sbr.rel (%p263) target = $region20
      $region19: #{encoding_block.4} parent=11 // pred_region
        _
      $region20: #{encoding_block.4} parent=11 // pred_fallthru
        _
      // Predicated region
      $region21: #{encoding_block.4} parent=11 // pred_check
        %p266 = pneg %p189
      $region22: #{encoding_block.4} parent=11 // pred_check_branch
        %268 = sbr.rel (%p266) target = $region24
      $region23: #{encoding_block.4} parent=11 // pred_region
        _
      $region24: #{encoding_block.4} parent=11 // pred_fallthru
        _
    $region12: #{encoding_block.4} parent=5 // pred_fallthru
      _
    %p269 = scmp.lt.s32.totalorder %s14, 4
    // Predicated region
    $region25: #{encoding_block.4} parent=5 // pred_check
      %p270 = pneg %p269
    $region26: #{encoding_block.4} parent=5 // pred_check_branch
      %272 = sbr.rel (%p270) target = $region28
    $region27: #{encoding_block.4} parent=5 // pred_region
      // Predicated region
      $region29: #{encoding_block.4} parent=27 // pred_check
        %p273 = pneg %p48
      $region30: #{encoding_block.4} parent=27 // pred_check_branch
        %275 = sbr.rel (%p273) target = $region32
      $region31: #{encoding_block.4} parent=27 // pred_region
        %s276 = smul.u32 8, %s22
        %p277 = scmp.lt.s32.totalorder %s21, 1
        %s278 = scalar_select %p277, %s21, 1
        %p279 = scmp.lt.s32.totalorder %s276, 15
        %s280 = scalar_select %p279, %s276, 15
        %s281 = smul.addr %s280, 2
        %s282 = smul.addr %s278, 32
        %s283 = sadd.s32 %s281, %s282
        %s284 = smul.addr %s283, 8
        %s285 = scalar_lea.vmem %s0, %s284
        %s286 = smul.u32 8, %s22
      $region32: #{encoding_block.4} parent=27 // pred_fallthru
        _
      // Predicated region
      $region33: #{encoding_block.4} parent=27 // pred_check
        %p287 = pneg %p84
      $region34: #{encoding_block.4} parent=27 // pred_check_branch
        %289 = sbr.rel (%p287) target = $region36
      $region35: #{encoding_block.4} parent=27 // pred_region
        %s290 = smul.u32 %s22, 8
        %s291 = ssub.s32 %s290, 1
        %p292 = scmp.gt.s32.totalorder %s291, 0
        %s293 = scalar_select %p292, %s291, 0
        %p294 = scmp.lt.s32.totalorder %s21, 1
        %s295 = scalar_select %p294, %s21, 1
        %p296 = scmp.lt.s32.totalorder %s293, 15
        %s297 = scalar_select %p296, %s293, 15
        %s298 = smul.addr %s297, 2
        %s299 = smul.addr %s295, 32
        %s300 = sadd.s32 %s298, %s299
        %s301 = smul.addr %s300, 8
        %s302 = scalar_lea.vmem %s1, %s301
        %s303 = smul.u32 %s22, 8
        %s304 = ssub.s32 %s303, 1
        %p305 = scmp.gt.s32.totalorder %s304, 0
        %s306 = scalar_select %p305, %s304, 0
      $region36: #{encoding_block.4} parent=27 // pred_fallthru
        _
      // Predicated region
      $region37: #{encoding_block.4} parent=27 // pred_check
        %p307 = pneg %p120
      $region38: #{encoding_block.4} parent=27 // pred_check_branch
        %309 = sbr.rel (%p307) target = $region40
      $region39: #{encoding_block.4} parent=27 // pred_region
        %s310 = sadd.s32 %s22, 1
        %s311 = smul.u32 %s310, 8
        %p312 = scmp.lt.s32.totalorder %s311, 15
        %s313 = scalar_select %p312, %s311, 15
        %p314 = scmp.lt.s32.totalorder %s21, 1
        %s315 = scalar_select %p314, %s21, 1
        %p316 = scmp.lt.s32.totalorder %s313, 15
        %s317 = scalar_select %p316, %s313, 15
        %s318 = smul.addr %s317, 2
        %s319 = smul.addr %s315, 32
        %s320 = sadd.s32 %s318, %s319
        %s321 = smul.addr %s320, 8
        %s322 = scalar_lea.vmem %s2, %s321
        %s323 = sadd.s32 %s22, 1
        %s324 = smul.u32 %s323, 8
        %p325 = scmp.lt.s32.totalorder %s324, 15
        %s326 = scalar_select %p325, %s324, 15
      $region40: #{encoding_block.4} parent=27 // pred_fallthru
        _
    $region28: #{encoding_block.4} parent=5 // pred_fallthru
      _
    %p327 = scmp.le.s32.totalorder 1, %s14
    %p328 = scmp.lt.s32.totalorder %s14, 5
    %p329 = pnand %p327, %p328
    %p330 = pneg %p329
    // Predicated region
    $region41: #{encoding_block.4} parent=5 // pred_check
      _
    $region42: #{encoding_block.4} parent=5 // pred_check_branch
      %332 = sbr.rel (%p329) target = $region44
    $region43: #{encoding_block.4} parent=5 // pred_region
      %s333 = ssub.s32 %s14, 1
      %s334 = smul.u32 8, %s24
      %p335 = scmp.lt.s32.totalorder %s23, 1
      %s336 = scalar_select %p335, %s23, 1
      %p337 = scmp.lt.s32.totalorder %s334, 15
      %s338 = scalar_select %p337, %s334, 15
      %s339 = smul.addr %s338, 2
      %s340 = smul.addr %s336, 32
      %s341 = sadd.s32 %s339, %s340
      %s342 = smul.addr %s341, 8
      %s343 = scalar_lea.vmem %s0, %s342
      %p344 = pneg %p54
      %p345 = pneg %p51
      %s346 = smul.u32 %s24, 8
      %s347 = ssub.s32 %s346, 1
      %p348 = scmp.gt.s32.totalorder %s347, 0
      %s349 = scalar_select %p348, %s347, 0
      %p350 = scmp.lt.s32.totalorder %s23, 1
      %s351 = scalar_select %p350, %s23, 1
      %p352 = scmp.lt.s32.totalorder %s349, 15
      %s353 = scalar_select %p352, %s349, 15
      %s354 = smul.addr %s353, 2
      %s355 = smul.addr %s351, 32
      %s356 = sadd.s32 %s354, %s355
      %s357 = smul.addr %s356, 8
      %s358 = scalar_lea.vmem %s1, %s357
      %p359 = pneg %p90
      %p360 = pneg %p87
      %s361 = sadd.s32 %s24, 1
      %s362 = smul.u32 %s361, 8
      %p363 = scmp.lt.s32.totalorder %s362, 15
      %s364 = scalar_select %p363, %s362, 15
      %p365 = scmp.lt.s32.totalorder %s23, 1
      %s366 = scalar_select %p365, %s23, 1
      %p367 = scmp.lt.s32.totalorder %s364, 15
      %s368 = scalar_select %p367, %s364, 15
      %s369 = smul.addr %s368, 2
      %s370 = smul.addr %s366, 32
      %s371 = sadd.s32 %s369, %s370
      %s372 = smul.addr %s371, 8
      %s373 = scalar_lea.vmem %s2, %s372
      %p374 = pneg %p126
      %p375 = pneg %p123
      %p376 = pneg %p147
      %p377 = pneg %p144
      %p378 = pneg %p168
      %p379 = pneg %p165
      %p380 = pneg %p189
      %p381 = pneg %p186
      %p382 = pneg %p217
      %p383 = pneg %p214
      %s384 = smul.u32 8, %s24
      %p385 = scmp.lt.s32.totalorder %s23, 1
      %s386 = scalar_select %p385, %s23, 1
      %p387 = scmp.lt.s32.totalorder %s384, 15
      %s388 = scalar_select %p387, %s384, 15
      %s389 = smul.addr %s388, 2
      %s390 = smul.addr %s386, 32
      %s391 = sadd.s32 %s389, %s390
      %s392 = smul.addr %s391, 8
      %s393 = scalar_lea.vmem %s6, %s392
      %p394 = pneg %p245
      %p395 = pneg %p242
      %p396 = scmp.lt.s32.totalorder %s23, 1
      %s397 = scalar_select %p396, %s23, 1
      %p398 = scmp.lt.s32.totalorder %s24, 1
      %s399 = scalar_select %p398, %s24, 1
      %s400 = smul.addr %s397, 2
      %s401 = sadd.s32 %s399, %s400
      %s402 = smul.addr %s401, 8
      %s403 = scalar_lea.vmem %s7, %s402
      %s404 = smul.u32 8, %s24
      %p405 = scmp.lt.s32.totalorder %s23, 1
      %s406 = scalar_select %p405, %s23, 1
      %p407 = scmp.lt.s32.totalorder %s404, 15
      %s408 = scalar_select %p407, %s404, 15
      %s409 = smul.addr %s408, 2
      %s410 = smul.addr %s406, 32
      %s411 = sadd.s32 %s409, %s410
      %s412 = smul.addr %s411, 8
      %s413 = scalar_lea.vmem %s0, %s412
      %s414 = smul.u32 8, %s24
      %s415 = smul.u32 %s24, 8
      %s416 = ssub.s32 %s415, 1
      %p417 = scmp.gt.s32.totalorder %s416, 0
      %s418 = scalar_select %p417, %s416, 0
      %p419 = scmp.lt.s32.totalorder %s23, 1
      %s420 = scalar_select %p419, %s23, 1
      %p421 = scmp.lt.s32.totalorder %s418, 15
      %s422 = scalar_select %p421, %s418, 15
      %s423 = smul.addr %s422, 2
      %s424 = smul.addr %s420, 32
      %s425 = sadd.s32 %s423, %s424
      %s426 = smul.addr %s425, 8
      %s427 = scalar_lea.vmem %s1, %s426
      %s428 = smul.u32 %s24, 8
      %s429 = ssub.s32 %s428, 1
      %p430 = scmp.gt.s32.totalorder %s429, 0
      %s431 = scalar_select %p430, %s429, 0
      %s432 = sadd.s32 %s24, 1
      %s433 = smul.u32 %s432, 8
      %p434 = scmp.lt.s32.totalorder %s433, 15
      %s435 = scalar_select %p434, %s433, 15
      %p436 = scmp.lt.s32.totalorder %s23, 1
      %s437 = scalar_select %p436, %s23, 1
      %p438 = scmp.lt.s32.totalorder %s435, 15
      %s439 = scalar_select %p438, %s435, 15
      %s440 = smul.addr %s439, 2
      %s441 = smul.addr %s437, 32
      %s442 = sadd.s32 %s440, %s441
      %s443 = smul.addr %s442, 8
      %s444 = scalar_lea.vmem %s2, %s443
      %s445 = sadd.s32 %s24, 1
      %s446 = smul.u32 %s445, 8
      %p447 = scmp.lt.s32.totalorder %s446, 15
      %s448 = scalar_select %p447, %s446, 15
      %s449 = smul.u32 8, %s24
      %p450 = scmp.lt.s32.totalorder %s23, 1
      %s451 = scalar_select %p450, %s23, 1
      %p452 = scmp.lt.s32.totalorder %s449, 15
      %s453 = scalar_select %p452, %s449, 15
      %s454 = smul.addr %s453, 2
      %s455 = smul.addr %s451, 32
      %s456 = sadd.s32 %s454, %s455
      %s457 = smul.addr %s456, 8
      %s458 = scalar_lea.vmem %s6, %s457
      %s459 = smul.u32 8, %s24
      %p460 = scmp.lt.s32.totalorder %s23, 1
      %s461 = scalar_select %p460, %s23, 1
      %p462 = scmp.lt.s32.totalorder %s24, 1
      %s463 = scalar_select %p462, %s24, 1
      %s464 = smul.addr %s461, 2
      %s465 = sadd.s32 %s463, %s464
      %s466 = smul.addr %s465, 8
      %s467 = scalar_lea.vmem %s7, %s466
      %v468 = vld [vmem:[%s413] sm:$0xff]
      %v469 = vld [vmem:[%s413 + $0x8] sm:$0xff]
      %v470 = vld [vmem:[%s413 + $0x10] sm:$0xff]
      %v471 = vld [vmem:[%s413 + $0x18] sm:$0xff]
      %v472 = vld [vmem:[%s413 + $0x20] sm:$0xff]
      %v473 = vld [vmem:[%s413 + $0x28] sm:$0xff]
      %v474 = vld [vmem:[%s413 + $0x30] sm:$0xff]
      %v475 = vld [vmem:[%s413 + $0x38] sm:$0xff]
      %v476 = vld [vmem:[%s413 + $0x40] sm:$0xff]
      %v477 = vld [vmem:[%s413 + $0x48] sm:$0xff]
      %v478 = vld [vmem:[%s413 + $0x50] sm:$0xff]
      %v479 = vld [vmem:[%s413 + $0x58] sm:$0xff]
      %v480 = vld [vmem:[%s413 + $0x60] sm:$0xff]
      %v481 = vld [vmem:[%s413 + $0x68] sm:$0xff]
      %v482 = vld [vmem:[%s413 + $0x70] sm:$0xff]
      %v483 = vld [vmem:[%s413 + $0x78] sm:$0xff]
      %v484 = vld [vmem:[%s427] sm:$0xff]
      %v485 = vld [vmem:[%s427 + $0x8] sm:$0xff]
      %v486 = vld [vmem:[%s444] sm:$0xff]
      %v487 = vld [vmem:[%s444 + $0x8] sm:$0xff]
      %v488 = vld [vmem:[%s4] sm:$0x1]
      %v490 = vlaneseq
      %v491 = vshrl.u32 %v490, 7
      %v492 = vsub.s32 0, %v491
      %v493 = vrot.slane %v488, %v492
      %v495 = vmul.f32 %v468, %v493
      %v496 = vmul.f32 %v469, %v493
      %v497 = vmul.f32 %v470, %v493
      %v498 = vmul.f32 %v471, %v493
      %v499 = vmul.f32 %v472, %v493
      %v500 = vmul.f32 %v473, %v493
      %v501 = vmul.f32 %v474, %v493
      %v502 = vmul.f32 %v475, %v493
      %v503 = vmul.f32 %v476, %v493
      %v504 = vmul.f32 %v477, %v493
      %v505 = vmul.f32 %v478, %v493
      %v506 = vmul.f32 %v479, %v493
      %v507 = vmul.f32 %v480, %v493
      %v508 = vmul.f32 %v481, %v493
      %v509 = vmul.f32 %v482, %v493
      %v510 = vmul.f32 %v483, %v493
      %v511 = vld [vmem:[%s5] sm:$0x1]
      %v513 = vlaneseq
      %v514 = vshrl.u32 %v513, 7
      %v515 = vsub.s32 0, %v514
      %v516 = vrot.slane %v511, %v515
      %v518 = vadd.f32 %v495, %v516
      %v519 = vadd.f32 %v496, %v516
      %v520 = vadd.f32 %v497, %v516
      %v521 = vadd.f32 %v498, %v516
      %v522 = vadd.f32 %v499, %v516
      %v523 = vadd.f32 %v500, %v516
      %v524 = vadd.f32 %v501, %v516
      %v525 = vadd.f32 %v502, %v516
      %v526 = vadd.f32 %v503, %v516
      %v527 = vadd.f32 %v504, %v516
      %v528 = vadd.f32 %v505, %v516
      %v529 = vadd.f32 %v506, %v516
      %v530 = vadd.f32 %v507, %v516
      %v531 = vadd.f32 %v508, %v516
      %v532 = vadd.f32 %v509, %v516
      %v533 = vadd.f32 %v510, %v516
      %v534 = vmax.f32 %v518, 0.0
      %v535 = vmax.f32 %v519, 0.0
      %v536 = vmax.f32 %v520, 0.0
      %v537 = vmax.f32 %v521, 0.0
      %v538 = vmax.f32 %v522, 0.0
      %v539 = vmax.f32 %v523, 0.0
      %v540 = vmax.f32 %v524, 0.0
      %v541 = vmax.f32 %v525, 0.0
      %v542 = vmax.f32 %v526, 0.0
      %v543 = vmax.f32 %v527, 0.0
      %v544 = vmax.f32 %v528, 0.0
      %v545 = vmax.f32 %v529, 0.0
      %v546 = vmax.f32 %v530, 0.0
      %v547 = vmax.f32 %v531, 0.0
      %v548 = vmax.f32 %v532, 0.0
      %v549 = vmax.f32 %v533, 0.0
      %v550 = vmul.f32 %v484, %v493
      %v551 = vmul.f32 %v485, %v493
      %v552 = vadd.f32 %v550, %v516
      %v553 = vadd.f32 %v551, %v516
      %v554 = vmax.f32 %v552, 0.0
      %v555 = vmax.f32 %v553, 0.0
      %v556 = vmul.f32 %v486, %v493
      %v557 = vmul.f32 %v487, %v493
      %v558 = vadd.f32 %v556, %v516
      %v559 = vadd.f32 %v557, %v516
      %v560 = vmax.f32 %v558, 0.0
      %v561 = vmax.f32 %v559, 0.0
      %p562 = scmp.eq.s32.totalorder %s24, 0
      %s563 = scalar_select %p562, 1, 0
      %v564 = vstv %s563
      %vm565 = vcmp.eq.s32.totalorder %v564, 1
      %v566 = vsel %vm565, 0.0, %v554
      %v567 = vsel %vm565, 0.0, %v555
      %p568 = scmp.eq.s32.totalorder %s24, 1
      %s569 = scalar_select %p568, 1, 0
      %v570 = vstv %s569
      %vm571 = vcmp.eq.s32.totalorder %v570, 1
      %v572 = vsel %vm571, 0.0, %v560
      %v573 = vsel %vm571, 0.0, %v561
      %v574 = vlaneseq
      %v575 = vshrl.u32 %v574, 7
      %v576 = vadd.s32 %v575, 8
      %v577 = vadd.s32 %v575, 16
      %v578 = vadd.s32 %v575, 24
      %v579 = vadd.s32 %v575, 32
      %v580 = vadd.s32 %v575, 40
      %v581 = vadd.s32 %v575, 48
      %v582 = vadd.s32 %v575, 56
      %v583 = vadd.s32 %v575, 64
      %v584 = vadd.s32 %v575, 72
      %v585 = vadd.s32 %v575, 80
      %v586 = vadd.s32 %v575, 88
      %v587 = vadd.s32 %v575, 96
      %v588 = vadd.s32 %v575, 104
      %v589 = vadd.s32 %v575, 112
      %v590 = vadd.s32 %v575, 120
      %v591 = vadd.s32 %v575, 128
      %v592 = vadd.s32 %v575, 136
      %v593 = vadd.s32 %v575, 144
      %v594 = vadd.s32 %v575, 152
      %vm595 = vcmp.lt.s32.totalorder %v575, 0
      %v596 = vsub.s32 0, %v575
      %v597 = vsel %vm595, %v596, %v575
      %v598 = vshrl.u32 %v597, 4
      %v599 = vand.u32 %v597, 15
      %v600 = vsub.s32 0, %v599
      %v601 = vsel %vm595, %v600, %v599
      %vm602 = vcmp.lt.s32.totalorder %v576, 0
      %v603 = vsub.s32 0, %v576
      %v604 = vsel %vm602, %v603, %v576
      %v605 = vshrl.u32 %v604, 4
      %v606 = vand.u32 %v604, 15
      %v607 = vsub.s32 0, %v606
      %v608 = vsel %vm602, %v607, %v606
      %vm609 = vcmp.lt.s32.totalorder %v577, 0
      %v610 = vsub.s32 0, %v577
      %v611 = vsel %vm609, %v610, %v577
      %v612 = vshrl.u32 %v611, 4
      %v613 = vand.u32 %v611, 15
      %v614 = vsub.s32 0, %v613
      %v615 = vsel %vm609, %v614, %v613
      %vm616 = vcmp.lt.s32.totalorder %v578, 0
      %v617 = vsub.s32 0, %v578
      %v618 = vsel %vm616, %v617, %v578
      %v619 = vshrl.u32 %v618, 4
      %v620 = vand.u32 %v618, 15
      %v621 = vsub.s32 0, %v620
      %v622 = vsel %vm616, %v621, %v620
      %vm623 = vcmp.lt.s32.totalorder %v579, 0
      %v624 = vsub.s32 0, %v579
      %v625 = vsel %vm623, %v624, %v579
      %v626 = vshrl.u32 %v625, 4
      %v627 = vand.u32 %v625, 15
      %v628 = vsub.s32 0, %v627
      %v629 = vsel %vm623, %v628, %v627
      %vm630 = vcmp.lt.s32.totalorder %v580, 0
      %v631 = vsub.s32 0, %v580
      %v632 = vsel %vm630, %v631, %v580
      %v633 = vshrl.u32 %v632, 4
      %v634 = vand.u32 %v632, 15
      %v635 = vsub.s32 0, %v634
      %v636 = vsel %vm630, %v635, %v634
      %vm637 = vcmp.lt.s32.totalorder %v581, 0
      %v638 = vsub.s32 0, %v581
      %v639 = vsel %vm637, %v638, %v581
      %v640 = vshrl.u32 %v639, 4
      %v641 = vand.u32 %v639, 15
      %v642 = vsub.s32 0, %v641
      %v643 = vsel %vm637, %v642, %v641
      %vm644 = vcmp.lt.s32.totalorder %v582, 0
      %v645 = vsub.s32 0, %v582
      %v646 = vsel %vm644, %v645, %v582
      %v647 = vshrl.u32 %v646, 4
      %v648 = vand.u32 %v646, 15
      %v649 = vsub.s32 0, %v648
      %v650 = vsel %vm644, %v649, %v648
      %vm651 = vcmp.lt.s32.totalorder %v583, 0
      %v652 = vsub.s32 0, %v583
      %v653 = vsel %vm651, %v652, %v583
      %v654 = vshrl.u32 %v653, 4
      %v655 = vand.u32 %v653, 15
      %v656 = vsub.s32 0, %v655
      %v657 = vsel %vm651, %v656, %v655
      %vm658 = vcmp.lt.s32.totalorder %v584, 0
      %v659 = vsub.s32 0, %v584
      %v660 = vsel %vm658, %v659, %v584
      %v661 = vshrl.u32 %v660, 4
      %v662 = vand.u32 %v660, 15
      %v663 = vsub.s32 0, %v662
      %v664 = vsel %vm658, %v663, %v662
      %vm665 = vcmp.lt.s32.totalorder %v585, 0
      %v666 = vsub.s32 0, %v585
      %v667 = vsel %vm665, %v666, %v585
      %v668 = vshrl.u32 %v667, 4
      %v669 = vand.u32 %v667, 15
      %v670 = vsub.s32 0, %v669
      %v671 = vsel %vm665, %v670, %v669
      %vm672 = vcmp.lt.s32.totalorder %v586, 0
      %v673 = vsub.s32 0, %v586
      %v674 = vsel %vm672, %v673, %v586
      %v675 = vshrl.u32 %v674, 4
      %v676 = vand.u32 %v674, 15
      %v677 = vsub.s32 0, %v676
      %v678 = vsel %vm672, %v677, %v676
      %vm679 = vcmp.lt.s32.totalorder %v587, 0
      %v680 = vsub.s32 0, %v587
      %v681 = vsel %vm679, %v680, %v587
      %v682 = vshrl.u32 %v681, 4
      %v683 = vand.u32 %v681, 15
      %v684 = vsub.s32 0, %v683
      %v685 = vsel %vm679, %v684, %v683
      %vm686 = vcmp.lt.s32.totalorder %v588, 0
      %v687 = vsub.s32 0, %v588
      %v688 = vsel %vm686, %v687, %v588
      %v689 = vshrl.u32 %v688, 4
      %v690 = vand.u32 %v688, 15
      %v691 = vsub.s32 0, %v690
      %v692 = vsel %vm686, %v691, %v690
      %vm693 = vcmp.lt.s32.totalorder %v589, 0
      %v694 = vsub.s32 0, %v589
      %v695 = vsel %vm693, %v694, %v589
      %v696 = vshrl.u32 %v695, 4
      %v697 = vand.u32 %v695, 15
      %v698 = vsub.s32 0, %v697
      %v699 = vsel %vm693, %v698, %v697
      %vm700 = vcmp.lt.s32.totalorder %v590, 0
      %v701 = vsub.s32 0, %v590
      %v702 = vsel %vm700, %v701, %v590
      %v703 = vshrl.u32 %v702, 4
      %v704 = vand.u32 %v702, 15
      %v705 = vsub.s32 0, %v704
      %v706 = vsel %vm700, %v705, %v704
      %vm707 = vcmp.lt.s32.totalorder %v591, 0
      %v708 = vsub.s32 0, %v591
      %v709 = vsel %vm707, %v708, %v591
      %v710 = vshrl.u32 %v709, 4
      %v711 = vand.u32 %v709, 15
      %v712 = vsub.s32 0, %v711
      %v713 = vsel %vm707, %v712, %v711
      %vm714 = vcmp.lt.s32.totalorder %v592, 0
      %v715 = vsub.s32 0, %v592
      %v716 = vsel %vm714, %v715, %v592
      %v717 = vshrl.u32 %v716, 4
      %v718 = vand.u32 %v716, 15
      %v719 = vsub.s32 0, %v718
      %v720 = vsel %vm714, %v719, %v718
      %vm721 = vcmp.lt.s32.totalorder %v593, 0
      %v722 = vsub.s32 0, %v593
      %v723 = vsel %vm721, %v722, %v593
      %v724 = vshrl.u32 %v723, 4
      %v725 = vand.u32 %v723, 15
      %v726 = vsub.s32 0, %v725
      %v727 = vsel %vm721, %v726, %v725
      %vm728 = vcmp.lt.s32.totalorder %v594, 0
      %v729 = vsub.s32 0, %v594
      %v730 = vsel %vm728, %v729, %v594
      %v731 = vshrl.u32 %v730, 4
      %v732 = vand.u32 %v730, 15
      %v733 = vsub.s32 0, %v732
      %v734 = vsel %vm728, %v733, %v732
      %vm735 = vcmp.ne.s32.totalorder %v601, 0
      %vm736 = vcmp.ne.s32.totalorder %v608, 0
      %vm737 = vcmp.ne.s32.totalorder %v615, 0
      %vm738 = vcmp.ne.s32.totalorder %v622, 0
      %vm739 = vcmp.ne.s32.totalorder %v629, 0
      %vm740 = vcmp.ne.s32.totalorder %v636, 0
      %vm741 = vcmp.ne.s32.totalorder %v643, 0
      %vm742 = vcmp.ne.s32.totalorder %v650, 0
      %vm743 = vcmp.ne.s32.totalorder %v657, 0
      %vm744 = vcmp.ne.s32.totalorder %v664, 0
      %vm745 = vcmp.ne.s32.totalorder %v671, 0
      %vm746 = vcmp.ne.s32.totalorder %v678, 0
      %vm747 = vcmp.ne.s32.totalorder %v685, 0
      %vm748 = vcmp.ne.s32.totalorder %v692, 0
      %vm749 = vcmp.ne.s32.totalorder %v699, 0
      %vm750 = vcmp.ne.s32.totalorder %v706, 0
      %vm751 = vcmp.ne.s32.totalorder %v713, 0
      %vm752 = vcmp.ne.s32.totalorder %v720, 0
      %vm753 = vcmp.ne.s32.totalorder %v727, 0
      %vm754 = vcmp.ne.s32.totalorder %v734, 0
      %vm755 = vcmp.lt.s32.totalorder %v601, 0
      %vm756 = vcmp.lt.s32.totalorder %v608, 0
      %vm757 = vcmp.lt.s32.totalorder %v615, 0
      %vm758 = vcmp.lt.s32.totalorder %v622, 0
      %vm759 = vcmp.lt.s32.totalorder %v629, 0
      %vm760 = vcmp.lt.s32.totalorder %v636, 0
      %vm761 = vcmp.lt.s32.totalorder %v643, 0
      %vm762 = vcmp.lt.s32.totalorder %v650, 0
      %vm763 = vcmp.lt.s32.totalorder %v657, 0
      %vm764 = vcmp.lt.s32.totalorder %v664, 0
      %vm765 = vcmp.lt.s32.totalorder %v671, 0
      %vm766 = vcmp.lt.s32.totalorder %v678, 0
      %vm767 = vcmp.lt.s32.totalorder %v685, 0
      %vm768 = vcmp.lt.s32.totalorder %v692, 0
      %vm769 = vcmp.lt.s32.totalorder %v699, 0
      %vm770 = vcmp.lt.s32.totalorder %v706, 0
      %vm771 = vcmp.lt.s32.totalorder %v713, 0
      %vm772 = vcmp.lt.s32.totalorder %v720, 0
      %vm773 = vcmp.lt.s32.totalorder %v727, 0
      %vm774 = vcmp.lt.s32.totalorder %v734, 0
      %vm775 = vmand %vm755, %vm735
      %vm776 = vmand %vm756, %vm736
      %vm777 = vmand %vm757, %vm737
      %vm778 = vmand %vm758, %vm738
      %vm779 = vmand %vm759, %vm739
      %vm780 = vmand %vm760, %vm740
      %vm781 = vmand %vm761, %vm741
      %vm782 = vmand %vm762, %vm742
      %vm783 = vmand %vm763, %vm743
      %vm784 = vmand %vm764, %vm744
      %vm785 = vmand %vm765, %vm745
      %vm786 = vmand %vm766, %vm746
      %vm787 = vmand %vm767, %vm747
      %vm788 = vmand %vm768, %vm748
      %vm789 = vmand %vm769, %vm749
      %vm790 = vmand %vm770, %vm750
      %vm791 = vmand %vm771, %vm751
      %vm792 = vmand %vm772, %vm752
      %vm793 = vmand %vm773, %vm753
      %vm794 = vmand %vm774, %vm754
      %v795 = vadd.s32 %v601, 16
      %v796 = vadd.s32 %v608, 16
      %v797 = vadd.s32 %v615, 16
      %v798 = vadd.s32 %v622, 16
      %v799 = vadd.s32 %v629, 16
      %v800 = vadd.s32 %v636, 16
      %v801 = vadd.s32 %v643, 16
      %v802 = vadd.s32 %v650, 16
      %v803 = vadd.s32 %v657, 16
      %v804 = vadd.s32 %v664, 16
      %v805 = vadd.s32 %v671, 16
      %v806 = vadd.s32 %v678, 16
      %v807 = vadd.s32 %v685, 16
      %v808 = vadd.s32 %v692, 16
      %v809 = vadd.s32 %v699, 16
      %v810 = vadd.s32 %v706, 16
      %v811 = vadd.s32 %v713, 16
      %v812 = vadd.s32 %v720, 16
      %v813 = vadd.s32 %v727, 16
      %v814 = vadd.s32 %v734, 16
      %v815 = vsel %vm775, %v795, %v601
      %v816 = vsel %vm776, %v796, %v608
      %v817 = vsel %vm777, %v797, %v615
      %v818 = vsel %vm778, %v798, %v622
      %v819 = vsel %vm779, %v799, %v629
      %v820 = vsel %vm780, %v800, %v636
      %v821 = vsel %vm781, %v801, %v643
      %v822 = vsel %vm782, %v802, %v650
      %v823 = vsel %vm783, %v803, %v657
      %v824 = vsel %vm784, %v804, %v664
      %v825 = vsel %vm785, %v805, %v671
      %v826 = vsel %vm786, %v806, %v678
      %v827 = vsel %vm787, %v807, %v685
      %v828 = vsel %vm788, %v808, %v692
      %v829 = vsel %vm789, %v809, %v699
      %v830 = vsel %vm790, %v810, %v706
      %v831 = vsel %vm791, %v811, %v713
      %v832 = vsel %vm792, %v812, %v720
      %v833 = vsel %vm793, %v813, %v727
      %v834 = vsel %vm794, %v814, %v734
      %vm835 = vcmp.eq.s32.totalorder %v815, 0
      %vm836 = vcmp.eq.s32.totalorder %v816, 0
      %vm837 = vcmp.eq.s32.totalorder %v817, 0
      %vm838 = vcmp.eq.s32.totalorder %v818, 0
      %vm839 = vcmp.eq.s32.totalorder %v819, 0
      %vm840 = vcmp.eq.s32.totalorder %v820, 0
      %vm841 = vcmp.eq.s32.totalorder %v821, 0
      %vm842 = vcmp.eq.s32.totalorder %v822, 0
      %vm843 = vcmp.eq.s32.totalorder %v823, 0
      %vm844 = vcmp.eq.s32.totalorder %v824, 0
      %vm845 = vcmp.eq.s32.totalorder %v825, 0
      %vm846 = vcmp.eq.s32.totalorder %v826, 0
      %vm847 = vcmp.eq.s32.totalorder %v827, 0
      %vm848 = vcmp.eq.s32.totalorder %v828, 0
      %vm849 = vcmp.eq.s32.totalorder %v829, 0
      %vm850 = vcmp.eq.s32.totalorder %v830, 0
      %vm851 = vcmp.eq.s32.totalorder %v831, 0
      %vm852 = vcmp.eq.s32.totalorder %v832, 0
      %vm853 = vcmp.eq.s32.totalorder %v833, 0
      %vm854 = vcmp.eq.s32.totalorder %v834, 0
      %v855 = vrot.slane %v566, 7
      %v856 = vrot.slane %v567, 7
      %v857 = vrot.slane %v534, 7
      %v858 = vrot.slane %v535, 7
      %v859 = vrot.slane %v536, 7
      %v860 = vrot.slane %v537, 7
      %v861 = vrot.slane %v538, 7
      %v862 = vrot.slane %v539, 7
      %v863 = vrot.slane %v540, 7
      %v864 = vrot.slane %v541, 7
      %v865 = vrot.slane %v542, 7
      %v866 = vrot.slane %v543, 7
      %v867 = vrot.slane %v544, 7
      %v868 = vrot.slane %v545, 7
      %v869 = vrot.slane %v546, 7
      %v870 = vrot.slane %v547, 7
      %v871 = vrot.slane %v548, 7
      %v872 = vrot.slane %v549, 7
      %v873 = vrot.slane %v572, 7
      %v874 = vrot.slane %v573, 7
      %vm875 = vcmp.lt.s32.totalorder %v575, 1
      %v876 = vsel %vm875, %v873, %v874
      %v877 = vsel %vm875, %v872, %v873
      %v878 = vsel %vm875, %v871, %v872
      %v879 = vsel %vm875, %v870, %v871
      %v880 = vsel %vm875, %v869, %v870
      %v881 = vsel %vm875, %v868, %v869
      %v882 = vsel %vm875, %v867, %v868
      %v883 = vsel %vm875, %v866, %v867
      %v884 = vsel %vm875, %v865, %v866
      %v885 = vsel %vm875, %v864, %v865
      %v886 = vsel %vm875, %v863, %v864
      %v887 = vsel %vm875, %v862, %v863
      %v888 = vsel %vm875, %v861, %v862
      %v889 = vsel %vm875, %v860, %v861
      %v890 = vsel %vm875, %v859, %v860
      %v891 = vsel %vm875, %v858, %v859
      %v892 = vsel %vm875, %v857, %v858
      %v893 = vsel %vm875, %v856, %v857
      %v894 = vsel %vm875, %v855, %v856
      %v895 = vsel %vm875, %v874, %v855
      %v896 = vsel %vm835, 1, 0
      %v897 = vsel %vm836, 1, 0
      %v898 = vsel %vm837, 1, 0
      %v899 = vsel %vm838, 1, 0
      %v900 = vsel %vm839, 1, 0
      %v901 = vsel %vm840, 1, 0
      %v902 = vsel %vm841, 1, 0
      %v903 = vsel %vm842, 1, 0
      %v904 = vsel %vm843, 1, 0
      %v905 = vsel %vm844, 1, 0
      %v906 = vsel %vm845, 1, 0
      %v907 = vsel %vm846, 1, 0
      %v908 = vsel %vm847, 1, 0
      %v909 = vsel %vm848, 1, 0
      %v910 = vsel %vm849, 1, 0
      %v911 = vsel %vm850, 1, 0
      %v912 = vsel %vm851, 1, 0
      %v913 = vsel %vm852, 1, 0
      %v914 = vsel %vm853, 1, 0
      %v915 = vsel %vm854, 1, 0
      %vm916 = vcmp.eq.s32.totalorder %v896, 1
      %vm917 = vcmp.eq.s32.totalorder %v897, 1
      %vm918 = vcmp.eq.s32.totalorder %v898, 1
      %vm919 = vcmp.eq.s32.totalorder %v899, 1
      %vm920 = vcmp.eq.s32.totalorder %v900, 1
      %vm921 = vcmp.eq.s32.totalorder %v901, 1
      %vm922 = vcmp.eq.s32.totalorder %v902, 1
      %vm923 = vcmp.eq.s32.totalorder %v903, 1
      %vm924 = vcmp.eq.s32.totalorder %v904, 1
      %vm925 = vcmp.eq.s32.totalorder %v905, 1
      %vm926 = vcmp.eq.s32.totalorder %v906, 1
      %vm927 = vcmp.eq.s32.totalorder %v907, 1
      %vm928 = vcmp.eq.s32.totalorder %v908, 1
      %vm929 = vcmp.eq.s32.totalorder %v909, 1
      %vm930 = vcmp.eq.s32.totalorder %v910, 1
      %vm931 = vcmp.eq.s32.totalorder %v911, 1
      %vm932 = vcmp.eq.s32.totalorder %v912, 1
      %vm933 = vcmp.eq.s32.totalorder %v913, 1
      %vm934 = vcmp.eq.s32.totalorder %v914, 1
      %vm935 = vcmp.eq.s32.totalorder %v915, 1
      %v936 = vsel %vm916, 0.0, %v895
      %v937 = vsel %vm917, 0.0, %v894
      %v938 = vsel %vm918, 0.0, %v893
      %v939 = vsel %vm919, 0.0, %v892
      %v940 = vsel %vm920, 0.0, %v891
      %v941 = vsel %vm921, 0.0, %v890
      %v942 = vsel %vm922, 0.0, %v889
      %v943 = vsel %vm923, 0.0, %v888
      %v944 = vsel %vm924, 0.0, %v887
      %v945 = vsel %vm925, 0.0, %v886
      %v946 = vsel %vm926, 0.0, %v885
      %v947 = vsel %vm927, 0.0, %v884
      %v948 = vsel %vm928, 0.0, %v883
      %v949 = vsel %vm929, 0.0, %v882
      %v950 = vsel %vm930, 0.0, %v881
      %v951 = vsel %vm931, 0.0, %v880
      %v952 = vsel %vm932, 0.0, %v879
      %v953 = vsel %vm933, 0.0, %v878
      %v954 = vsel %vm934, 0.0, %v877
      %v955 = vsel %vm935, 0.0, %v876
      %vm956 = vcmp.eq.s32.totalorder %v815, 15
      %vm957 = vcmp.eq.s32.totalorder %v816, 15
      %vm958 = vcmp.eq.s32.totalorder %v817, 15
      %vm959 = vcmp.eq.s32.totalorder %v818, 15
      %vm960 = vcmp.eq.s32.totalorder %v819, 15
      %vm961 = vcmp.eq.s32.totalorder %v820, 15
      %vm962 = vcmp.eq.s32.totalorder %v821, 15
      %vm963 = vcmp.eq.s32.totalorder %v822, 15
      %vm964 = vcmp.eq.s32.totalorder %v823, 15
      %vm965 = vcmp.eq.s32.totalorder %v824, 15
      %vm966 = vcmp.eq.s32.totalorder %v825, 15
      %vm967 = vcmp.eq.s32.totalorder %v826, 15
      %vm968 = vcmp.eq.s32.totalorder %v827, 15
      %vm969 = vcmp.eq.s32.totalorder %v828, 15
      %vm970 = vcmp.eq.s32.totalorder %v829, 15
      %vm971 = vcmp.eq.s32.totalorder %v830, 15
      %vm972 = vcmp.eq.s32.totalorder %v831, 15
      %vm973 = vcmp.eq.s32.totalorder %v832, 15
      %vm974 = vcmp.eq.s32.totalorder %v833, 15
      %vm975 = vcmp.eq.s32.totalorder %v834, 15
      %v976 = vrot.slane %v566, 1
      %v977 = vrot.slane %v567, 1
      %v978 = vrot.slane %v534, 1
      %v979 = vrot.slane %v535, 1
      %v980 = vrot.slane %v536, 1
      %v981 = vrot.slane %v537, 1
      %v982 = vrot.slane %v538, 1
      %v983 = vrot.slane %v539, 1
      %v984 = vrot.slane %v540, 1
      %v985 = vrot.slane %v541, 1
      %v986 = vrot.slane %v542, 1
      %v987 = vrot.slane %v543, 1
      %v988 = vrot.slane %v544, 1
      %v989 = vrot.slane %v545, 1
      %v990 = vrot.slane %v546, 1
      %v991 = vrot.slane %v547, 1
      %v992 = vrot.slane %v548, 1
      %v993 = vrot.slane %v549, 1
      %v994 = vrot.slane %v572, 1
      %v995 = vrot.slane %v573, 1
      %vm996 = vcmp.lt.s32.totalorder %v575, 7
      %v997 = vsel %vm996, %v994, %v995
      %v998 = vsel %vm996, %v993, %v994
      %v999 = vsel %vm996, %v992, %v993
      %v1000 = vsel %vm996, %v991, %v992
      %v1001 = vsel %vm996, %v990, %v991
      %v1002 = vsel %vm996, %v989, %v990
      %v1003 = vsel %vm996, %v988, %v989
      %v1004 = vsel %vm996, %v987, %v988
      %v1005 = vsel %vm996, %v986, %v987
      %v1006 = vsel %vm996, %v985, %v986
      %v1007 = vsel %vm996, %v984, %v985
      %v1008 = vsel %vm996, %v983, %v984
      %v1009 = vsel %vm996, %v982, %v983
      %v1010 = vsel %vm996, %v981, %v982
      %v1011 = vsel %vm996, %v980, %v981
      %v1012 = vsel %vm996, %v979, %v980
      %v1013 = vsel %vm996, %v978, %v979
      %v1014 = vsel %vm996, %v977, %v978
      %v1015 = vsel %vm996, %v976, %v977
      %v1016 = vsel %vm996, %v995, %v976
      %v1017 = vsel %vm956, 1, 0
      %v1018 = vsel %vm957, 1, 0
      %v1019 = vsel %vm958, 1, 0
      %v1020 = vsel %vm959, 1, 0
      %v1021 = vsel %vm960, 1, 0
      %v1022 = vsel %vm961, 1, 0
      %v1023 = vsel %vm962, 1, 0
      %v1024 = vsel %vm963, 1, 0
      %v1025 = vsel %vm964, 1, 0
      %v1026 = vsel %vm965, 1, 0
      %v1027 = vsel %vm966, 1, 0
      %v1028 = vsel %vm967, 1, 0
      %v1029 = vsel %vm968, 1, 0
      %v1030 = vsel %vm969, 1, 0
      %v1031 = vsel %vm970, 1, 0
      %v1032 = vsel %vm971, 1, 0
      %v1033 = vsel %vm972, 1, 0
      %v1034 = vsel %vm973, 1, 0
      %v1035 = vsel %vm974, 1, 0
      %v1036 = vsel %vm975, 1, 0
      %vm1037 = vcmp.eq.s32.totalorder %v1017, 1
      %vm1038 = vcmp.eq.s32.totalorder %v1018, 1
      %vm1039 = vcmp.eq.s32.totalorder %v1019, 1
      %vm1040 = vcmp.eq.s32.totalorder %v1020, 1
      %vm1041 = vcmp.eq.s32.totalorder %v1021, 1
      %vm1042 = vcmp.eq.s32.totalorder %v1022, 1
      %vm1043 = vcmp.eq.s32.totalorder %v1023, 1
      %vm1044 = vcmp.eq.s32.totalorder %v1024, 1
      %vm1045 = vcmp.eq.s32.totalorder %v1025, 1
      %vm1046 = vcmp.eq.s32.totalorder %v1026, 1
      %vm1047 = vcmp.eq.s32.totalorder %v1027, 1
      %vm1048 = vcmp.eq.s32.totalorder %v1028, 1
      %vm1049 = vcmp.eq.s32.totalorder %v1029, 1
      %vm1050 = vcmp.eq.s32.totalorder %v1030, 1
      %vm1051 = vcmp.eq.s32.totalorder %v1031, 1
      %vm1052 = vcmp.eq.s32.totalorder %v1032, 1
      %vm1053 = vcmp.eq.s32.totalorder %v1033, 1
      %vm1054 = vcmp.eq.s32.totalorder %v1034, 1
      %vm1055 = vcmp.eq.s32.totalorder %v1035, 1
      %vm1056 = vcmp.eq.s32.totalorder %v1036, 1
      %v1057 = vsel %vm1037, 0.0, %v1015
      %v1058 = vsel %vm1038, 0.0, %v1014
      %v1059 = vsel %vm1039, 0.0, %v1013
      %v1060 = vsel %vm1040, 0.0, %v1012
      %v1061 = vsel %vm1041, 0.0, %v1011
      %v1062 = vsel %vm1042, 0.0, %v1010
      %v1063 = vsel %vm1043, 0.0, %v1009
      %v1064 = vsel %vm1044, 0.0, %v1008
      %v1065 = vsel %vm1045, 0.0, %v1007
      %v1066 = vsel %vm1046, 0.0, %v1006
      %v1067 = vsel %vm1047, 0.0, %v1005
      %v1068 = vsel %vm1048, 0.0, %v1004
      %v1069 = vsel %vm1049, 0.0, %v1003
      %v1070 = vsel %vm1050, 0.0, %v1002
      %v1071 = vsel %vm1051, 0.0, %v1001
      %v1072 = vsel %vm1052, 0.0, %v1000
      %v1073 = vsel %vm1053, 0.0, %v999
      %v1074 = vsel %vm1054, 0.0, %v998
      %v1075 = vsel %vm1055, 0.0, %v997
      %v1076 = vsel %vm1056, 0.0, %v1016
      %v1077 = vld [vmem:[%s3] sm:$0xff]
      %v1078 = vld [vmem:[%s3 + $0x8] sm:$0xff]
      %v1079 = vld [vmem:[%s3 + $0x10] sm:$0xff]
      %v1080 = vld [vmem:[%s3 + $0x18] sm:$0xff]
      %v1081 = vld [vmem:[%s3 + $0x20] sm:$0xff]
      %v1082 = vld [vmem:[%s3 + $0x28] sm:$0xff]
      %v1083 = vld [vmem:[%s3 + $0x30] sm:$0xff]
      %v1084 = vld [vmem:[%s3 + $0x38] sm:$0xff]
      %v1085 = vld [vmem:[%s3 + $0x40] sm:$0xff]
      %v1086 = vld [vmem:[%s3 + $0x48] sm:$0xff]
      %v1087 = vld [vmem:[%s3 + $0x50] sm:$0xff]
      %v1088 = vld [vmem:[%s3 + $0x58] sm:$0xff]
      %v1089 = vld [vmem:[%s3 + $0x60] sm:$0xff]
      %v1090 = vld [vmem:[%s3 + $0x68] sm:$0xff]
      %v1091 = vld [vmem:[%s3 + $0x70] sm:$0xff]
      %v1092 = vld [vmem:[%s3 + $0x78] sm:$0xff]
      %v1093 = vld [vmem:[%s3 + $0x80] sm:$0xff]
      %v1094 = vld [vmem:[%s3 + $0x88] sm:$0xff]
      %v1095 = vld [vmem:[%s3 + $0x90] sm:$0xff]
      %v1096 = vld [vmem:[%s3 + $0x98] sm:$0xff]
      %v1097 = vld [vmem:[%s3 + $0xa0] sm:$0xff]
      %v1098 = vld [vmem:[%s3 + $0xa8] sm:$0xff]
      %v1099 = vld [vmem:[%s3 + $0xb0] sm:$0xff]
      %v1100 = vld [vmem:[%s3 + $0xb8] sm:$0xff]
      %v1101 = vld [vmem:[%s3 + $0xc0] sm:$0xff]
      %v1102 = vld [vmem:[%s3 + $0xc8] sm:$0xff]
      %v1103 = vld [vmem:[%s3 + $0xd0] sm:$0xff]
      %v1104 = vld [vmem:[%s3 + $0xd8] sm:$0xff]
      %v1105 = vld [vmem:[%s3 + $0xe0] sm:$0xff]
      %v1106 = vld [vmem:[%s3 + $0xe8] sm:$0xff]
      %v1107 = vld [vmem:[%s3 + $0xf0] sm:$0xff]
      %v1108 = vld [vmem:[%s3 + $0xf8] sm:$0xff]
      %v1109 = vld [vmem:[%s3 + $0x100] sm:$0xff]
      %v1110 = vld [vmem:[%s3 + $0x108] sm:$0xff]
      %v1111 = vld [vmem:[%s3 + $0x110] sm:$0xff]
      %v1112 = vld [vmem:[%s3 + $0x118] sm:$0xff]
      %v1113 = vld [vmem:[%s3 + $0x120] sm:$0xff]
      %v1114 = vld [vmem:[%s3 + $0x128] sm:$0xff]
      %v1115 = vld [vmem:[%s3 + $0x130] sm:$0xff]
      %v1116 = vld [vmem:[%s3 + $0x138] sm:$0xff]
      %v1117 = vld [vmem:[%s3 + $0x140] sm:$0xff]
      %v1118 = vld [vmem:[%s3 + $0x148] sm:$0xff]
      %v1119 = vld [vmem:[%s3 + $0x150] sm:$0xff]
      %v1120 = vld [vmem:[%s3 + $0x158] sm:$0xff]
      %v1121 = vld [vmem:[%s3 + $0x160] sm:$0xff]
      %v1122 = vld [vmem:[%s3 + $0x168] sm:$0xff]
      %v1123 = vld [vmem:[%s3 + $0x170] sm:$0xff]
      %v1124 = vld [vmem:[%s3 + $0x178] sm:$0xff]
      %v1125 = vld [vmem:[%s3 + $0x180] sm:$0xff]
      %v1126 = vld [vmem:[%s3 + $0x188] sm:$0xff]
      %v1127 = vld [vmem:[%s3 + $0x190] sm:$0xff]
      %v1128 = vld [vmem:[%s3 + $0x198] sm:$0xff]
      %v1129 = vld [vmem:[%s3 + $0x1a0] sm:$0xff]
      %v1130 = vld [vmem:[%s3 + $0x1a8] sm:$0xff]
      %v1131 = vld [vmem:[%s3 + $0x1b0] sm:$0xff]
      %v1132 = vld [vmem:[%s3 + $0x1b8] sm:$0xff]
      %v1133 = vld [vmem:[%s3 + $0x1c0] sm:$0xff]
      %v1134 = vld [vmem:[%s3 + $0x1c8] sm:$0xff]
      %v1135 = vld [vmem:[%s3 + $0x1d0] sm:$0xff]
      %v1136 = vld [vmem:[%s3 + $0x1d8] sm:$0xff]
      %v1137 = vld [vmem:[%s3 + $0x1e0] sm:$0xff]
      %v1138 = vld [vmem:[%s3 + $0x1e8] sm:$0xff]
      %v1139 = vld [vmem:[%s3 + $0x1f0] sm:$0xff]
      %v1140 = vld [vmem:[%s3 + $0x1f8] sm:$0xff]
      %v1141 = vld [vmem:[%s3 + $0x200] sm:$0xff]
      %v1142 = vld [vmem:[%s3 + $0x208] sm:$0xff]
      %v1143 = vld [vmem:[%s3 + $0x210] sm:$0xff]
      %v1144 = vld [vmem:[%s3 + $0x218] sm:$0xff]
      %v1145 = vld [vmem:[%s3 + $0x220] sm:$0xff]
      %v1146 = vld [vmem:[%s3 + $0x228] sm:$0xff]
      %v1147 = vld [vmem:[%s3 + $0x230] sm:$0xff]
      %v1148 = vld [vmem:[%s3 + $0x238] sm:$0xff]
      %v1149 = vld [vmem:[%s3 + $0x240] sm:$0xff]
      %v1150 = vld [vmem:[%s3 + $0x248] sm:$0xff]
      %v1151 = vld [vmem:[%s3 + $0x250] sm:$0xff]
      %v1152 = vld [vmem:[%s3 + $0x258] sm:$0xff]
      %v1153 = vld [vmem:[%s3 + $0x260] sm:$0xff]
      %v1154 = vld [vmem:[%s3 + $0x268] sm:$0xff]
      %v1155 = vld [vmem:[%s3 + $0x270] sm:$0xff]
      %v1156 = vld [vmem:[%s3 + $0x278] sm:$0xff]
      %v1157 = vld [vmem:[%s3 + $0x280] sm:$0xff]
      %v1158 = vld [vmem:[%s3 + $0x288] sm:$0xff]
      %v1159 = vld [vmem:[%s3 + $0x290] sm:$0xff]
      %v1160 = vld [vmem:[%s3 + $0x298] sm:$0xff]
      %v1161 = vld [vmem:[%s3 + $0x2a0] sm:$0xff]
      %v1162 = vld [vmem:[%s3 + $0x2a8] sm:$0xff]
      %v1163 = vld [vmem:[%s3 + $0x2b0] sm:$0xff]
      %v1164 = vld [vmem:[%s3 + $0x2b8] sm:$0xff]
      %v1165 = vld [vmem:[%s3 + $0x2c0] sm:$0xff]
      %v1166 = vld [vmem:[%s3 + $0x2c8] sm:$0xff]
      %v1167 = vld [vmem:[%s3 + $0x2d0] sm:$0xff]
      %v1168 = vld [vmem:[%s3 + $0x2d8] sm:$0xff]
      %v1169 = vld [vmem:[%s3 + $0x2e0] sm:$0xff]
      %v1170 = vld [vmem:[%s3 + $0x2e8] sm:$0xff]
      %v1171 = vld [vmem:[%s3 + $0x2f0] sm:$0xff]
      %v1172 = vld [vmem:[%s3 + $0x2f8] sm:$0xff]
      %1173 = vmatprep.subr.mxu0 0.0
      %1174 = vmatpush1.msra.mxu0 %v1140
      %1175 = vmatprep.subr.mxu0 0.0
      %1176 = vmatpush1.msra.mxu0 %v1139
      %1177 = vmatprep.subr.mxu0 0.0
      %1178 = vmatpush1.msra.mxu0 %v1138
      %1179 = vmatprep.subr.mxu0 0.0
      %1180 = vmatpush1.msra.mxu0 %v1137
      %1181 = vmatprep.subr.mxu0 0.0
      %1182 = vmatpush1.msra.mxu0 %v1136
      %1183 = vmatprep.subr.mxu0 0.0
      %1184 = vmatpush1.msra.mxu0 %v1135
      %1185 = vmatprep.subr.mxu0 0.0
      %1186 = vmatpush1.msra.mxu0 %v1134
      %1187 = vmatprep.subr.mxu0 0.0
      %1188 = vmatpush1.msra.mxu0 %v1133
      %1189 = vmatprep.subr.mxu0 0.0
      %1190 = vmatpush1.msra.mxu0 %v1132
      %1191 = vmatprep.subr.mxu0 0.0
      %1192 = vmatpush1.msra.mxu0 %v1131
      %1193 = vmatprep.subr.mxu0 0.0
      %1194 = vmatpush1.msra.mxu0 %v1130
      %1195 = vmatprep.subr.mxu0 0.0
      %1196 = vmatpush1.msra.mxu0 %v1129
      %1197 = vmatprep.subr.mxu0 0.0
      %1198 = vmatpush1.msra.mxu0 %v1128
      %1199 = vmatprep.subr.mxu0 0.0
      %1200 = vmatpush1.msra.mxu0 %v1127
      %1201 = vmatprep.subr.mxu0 0.0
      %1202 = vmatpush1.msra.mxu0 %v1126
      %1203 = vmatprep.subr.mxu0 0.0
      %1204 = vmatpush1.msra.mxu0 %v1125
      %1205 = vmatprep.subr.mxu0 0.0
      %1206 = vmatpush2.msra.mxu0 %v1156
      %1207 = vmatprep.subr.mxu0 0.0
      %1208 = vmatpush2.msra.mxu0 %v1155
      %1209 = vmatprep.subr.mxu0 0.0
      %1210 = vmatpush2.msra.mxu0 %v1154
      %1211 = vmatprep.subr.mxu0 0.0
      %1212 = vmatpush2.msra.mxu0 %v1153
      %1213 = vmatprep.subr.mxu0 0.0
      %1214 = vmatpush2.msra.mxu0 %v1152
      %1215 = vmatprep.subr.mxu0 0.0
      %1216 = vmatpush2.msra.mxu0 %v1151
      %1217 = vmatprep.subr.mxu0 0.0
      %1218 = vmatpush2.msra.mxu0 %v1150
      %1219 = vmatprep.subr.mxu0 0.0
      %1220 = vmatpush2.msra.mxu0 %v1149
      %1221 = vmatprep.subr.mxu0 0.0
      %1222 = vmatpush2.msra.mxu0 %v1148
      %1223 = vmatprep.subr.mxu0 0.0
      %1224 = vmatpush2.msra.mxu0 %v1147
      %1225 = vmatprep.subr.mxu0 0.0
      %1226 = vmatpush2.msra.mxu0 %v1146
      %1227 = vmatprep.subr.mxu0 0.0
      %1228 = vmatpush2.msra.mxu0 %v1145
      %1229 = vmatprep.subr.mxu0 0.0
      %1230 = vmatpush2.msra.mxu0 %v1144
      %1231 = vmatprep.subr.mxu0 0.0
      %1232 = vmatpush2.msra.mxu0 %v1143
      %1233 = vmatprep.subr.mxu0 0.0
      %1234 = vmatpush2.msra.mxu0 %v1142
      %1235 = vmatprep.subr.mxu0 0.0
      %1236 = vmatpush2.msra.mxu0 %v1141
      %1237 = vmatprep.mubr.f32.mxu0 %v534
      %1238 = vmatmul.mubr.f32.gmra.mxu0 %v938
      %v1239 = vpop.f32.mrf.mxu0
      %v1240 = vadd.f32 0.0, %v1239
      %v1241 = vpop.f32.mrf.mxu0
      %1242 = vmatprep.mubr.f32.mxu0 %v535
      %1243 = vmatmul.mubr.f32.gmra.mxu0 %v939
      %v1244 = vpop.f32.mrf.mxu0
      %v1245 = vadd.f32 0.0, %v1244
      %v1246 = vpop.f32.mrf.mxu0
      %1247 = vmatprep.mubr.f32.mxu0 %v536
      %1248 = vmatmul.mubr.f32.gmra.mxu0 %v940
      %v1249 = vpop.f32.mrf.mxu0
      %v1250 = vadd.f32 0.0, %v1249
      %v1251 = vpop.f32.mrf.mxu0
      %1252 = vmatprep.mubr.f32.mxu0 %v537
      %1253 = vmatmul.mubr.f32.gmra.mxu0 %v941
      %v1254 = vpop.f32.mrf.mxu0
      %v1255 = vadd.f32 0.0, %v1254
      %v1256 = vpop.f32.mrf.mxu0
      %1257 = vmatprep.mubr.f32.mxu0 %v538
      %1258 = vmatmul.mubr.f32.gmra.mxu0 %v942
      %v1259 = vpop.f32.mrf.mxu0
      %v1260 = vadd.f32 0.0, %v1259
      %v1261 = vpop.f32.mrf.mxu0
      %1262 = vmatprep.mubr.f32.mxu0 %v539
      %1263 = vmatmul.mubr.f32.gmra.mxu0 %v943
      %v1264 = vpop.f32.mrf.mxu0
      %v1265 = vadd.f32 0.0, %v1264
      %v1266 = vpop.f32.mrf.mxu0
      %1267 = vmatprep.mubr.f32.mxu0 %v540
      %1268 = vmatmul.mubr.f32.gmra.mxu0 %v944
      %v1269 = vpop.f32.mrf.mxu0
      %v1270 = vadd.f32 0.0, %v1269
      %v1271 = vpop.f32.mrf.mxu0
      %1272 = vmatprep.mubr.f32.mxu0 %v541
      %1273 = vmatmul.mubr.f32.gmra.mxu0 %v945
      %v1274 = vpop.f32.mrf.mxu0
      %v1275 = vadd.f32 0.0, %v1274
      %v1276 = vpop.f32.mrf.mxu0
      %1277 = vmatprep.mubr.f32.mxu0 %v542
      %1278 = vmatmul.mubr.f32.gmra.mxu0 %v946
      %v1279 = vpop.f32.mrf.mxu0
      %v1280 = vadd.f32 0.0, %v1279
      %v1281 = vpop.f32.mrf.mxu0
      %1282 = vmatprep.mubr.f32.mxu0 %v543
      %1283 = vmatmul.mubr.f32.gmra.mxu0 %v947
      %v1284 = vpop.f32.mrf.mxu0
      %v1285 = vadd.f32 0.0, %v1284
      %v1286 = vpop.f32.mrf.mxu0
      %1287 = vmatprep.mubr.f32.mxu0 %v544
      %1288 = vmatmul.mubr.f32.gmra.mxu0 %v948
      %v1289 = vpop.f32.mrf.mxu0
      %v1290 = vadd.f32 0.0, %v1289
      %v1291 = vpop.f32.mrf.mxu0
      %1292 = vmatprep.mubr.f32.mxu0 %v545
      %1293 = vmatmul.mubr.f32.gmra.mxu0 %v949
      %v1294 = vpop.f32.mrf.mxu0
      %v1295 = vadd.f32 0.0, %v1294
      %v1296 = vpop.f32.mrf.mxu0
      %1297 = vmatprep.mubr.f32.mxu0 %v546
      %1298 = vmatmul.mubr.f32.gmra.mxu0 %v950
      %v1299 = vpop.f32.mrf.mxu0
      %v1300 = vadd.f32 0.0, %v1299
      %v1301 = vpop.f32.mrf.mxu0
      %1302 = vmatprep.mubr.f32.mxu0 %v547
      %1303 = vmatmul.mubr.f32.gmra.mxu0 %v951
      %v1304 = vpop.f32.mrf.mxu0
      %v1305 = vadd.f32 0.0, %v1304
      %v1306 = vpop.f32.mrf.mxu0
      %1307 = vmatprep.mubr.f32.mxu0 %v548
      %1308 = vmatmul.mubr.f32.gmra.mxu0 %v952
      %v1309 = vpop.f32.mrf.mxu0
      %v1310 = vadd.f32 0.0, %v1309
      %v1311 = vpop.f32.mrf.mxu0
      %1312 = vmatprep.mubr.f32.mxu0 %v549
      %1313 = vmatmul.mubr.f32.gmra.mxu0 %v953
      %v1314 = vpop.f32.mrf.mxu0
      %v1315 = vadd.f32 0.0, %v1314
      %v1316 = vpop.f32.mrf.mxu0
      %1317 = vdwg.mxu0
      %1318 = vmatprep.subr.mxu0 0.0
      %1319 = vmatpush1.msra.mxu0 %v1172
      %1320 = vmatprep.subr.mxu0 0.0
      %1321 = vmatpush1.msra.mxu0 %v1171
      %1322 = vmatprep.subr.mxu0 0.0
      %1323 = vmatpush1.msra.mxu0 %v1170
      %1324 = vmatprep.subr.mxu0 0.0
      %1325 = vmatpush1.msra.mxu0 %v1169
      %1326 = vmatprep.subr.mxu0 0.0
      %1327 = vmatpush1.msra.mxu0 %v1168
      %1328 = vmatprep.subr.mxu0 0.0
      %1329 = vmatpush1.msra.mxu0 %v1167
      %1330 = vmatprep.subr.mxu0 0.0
      %1331 = vmatpush1.msra.mxu0 %v1166
      %1332 = vmatprep.subr.mxu0 0.0
      %1333 = vmatpush1.msra.mxu0 %v1165
      %1334 = vmatprep.subr.mxu0 0.0
      %1335 = vmatpush1.msra.mxu0 %v1164
      %1336 = vmatprep.subr.mxu0 0.0
      %1337 = vmatpush1.msra.mxu0 %v1163
      %1338 = vmatprep.subr.mxu0 0.0
      %1339 = vmatpush1.msra.mxu0 %v1162
      %1340 = vmatprep.subr.mxu0 0.0
      %1341 = vmatpush1.msra.mxu0 %v1161
      %1342 = vmatprep.subr.mxu0 0.0
      %1343 = vmatpush1.msra.mxu0 %v1160
      %1344 = vmatprep.subr.mxu0 0.0
      %1345 = vmatpush1.msra.mxu0 %v1159
      %1346 = vmatprep.subr.mxu0 0.0
      %1347 = vmatpush1.msra.mxu0 %v1158
      %1348 = vmatprep.subr.mxu0 0.0
      %1349 = vmatpush1.msra.mxu0 %v1157
      %1350 = vmatprep.subr.mxu0 0.0
      %1351 = vmatpush2.msra.mxu0 0.0
      %1352 = vmatprep.subr.mxu0 0.0
      %1353 = vmatpush2.msra.mxu0 0.0
      %1354 = vmatprep.subr.mxu0 0.0
      %1355 = vmatpush2.msra.mxu0 0.0
      %1356 = vmatprep.subr.mxu0 0.0
      %1357 = vmatpush2.msra.mxu0 0.0
      %1358 = vmatprep.subr.mxu0 0.0
      %1359 = vmatpush2.msra.mxu0 0.0
      %1360 = vmatprep.subr.mxu0 0.0
      %1361 = vmatpush2.msra.mxu0 0.0
      %1362 = vmatprep.subr.mxu0 0.0
      %1363 = vmatpush2.msra.mxu0 0.0
      %1364 = vmatprep.subr.mxu0 0.0
      %1365 = vmatpush2.msra.mxu0 0.0
      %1366 = vmatprep.subr.mxu0 0.0
      %1367 = vmatpush2.msra.mxu0 0.0
      %1368 = vmatprep.subr.mxu0 0.0
      %1369 = vmatpush2.msra.mxu0 0.0
      %1370 = vmatprep.subr.mxu0 0.0
      %1371 = vmatpush2.msra.mxu0 0.0
      %1372 = vmatprep.subr.mxu0 0.0
      %1373 = vmatpush2.msra.mxu0 0.0
      %1374 = vmatprep.subr.mxu0 0.0
      %1375 = vmatpush2.msra.mxu0 0.0
      %1376 = vmatprep.subr.mxu0 0.0
      %1377 = vmatpush2.msra.mxu0 0.0
      %1378 = vmatprep.subr.mxu0 0.0
      %1379 = vmatpush2.msra.mxu0 0.0
      %1380 = vmatprep.subr.mxu0 0.0
      %1381 = vmatpush2.msra.mxu0 0.0
      %1382 = vmatprep.mubr.f32.mxu0 0.0
      %1383 = vmatmul.mubr.f32.gmra.mxu0 %v1059
      %v1384 = vpop.f32.mrf.mxu0
      %v1385 = vadd.f32 %v1240, %v1384
      %v1386 = vpop.f32.mrf.mxu0
      %1387 = vmatprep.mubr.f32.mxu0 0.0
      %1388 = vmatmul.mubr.f32.gmra.mxu0 %v1060
      %v1389 = vpop.f32.mrf.mxu0
      %v1390 = vadd.f32 %v1245, %v1389
      %v1391 = vpop.f32.mrf.mxu0
      %1392 = vmatprep.mubr.f32.mxu0 0.0
      %1393 = vmatmul.mubr.f32.gmra.mxu0 %v1061
      %v1394 = vpop.f32.mrf.mxu0
      %v1395 = vadd.f32 %v1250, %v1394
      %v1396 = vpop.f32.mrf.mxu0
      %1397 = vmatprep.mubr.f32.mxu0 0.0
      %1398 = vmatmul.mubr.f32.gmra.mxu0 %v1062
      %v1399 = vpop.f32.mrf.mxu0
      %v1400 = vadd.f32 %v1255, %v1399
      %v1401 = vpop.f32.mrf.mxu0
      %1402 = vmatprep.mubr.f32.mxu0 0.0
      %1403 = vmatmul.mubr.f32.gmra.mxu0 %v1063
      %v1404 = vpop.f32.mrf.mxu0
      %v1405 = vadd.f32 %v1260, %v1404
      %v1406 = vpop.f32.mrf.mxu0
      %1407 = vmatprep.mubr.f32.mxu0 0.0
      %1408 = vmatmul.mubr.f32.gmra.mxu0 %v1064
      %v1409 = vpop.f32.mrf.mxu0
      %v1410 = vadd.f32 %v1265, %v1409
      %v1411 = vpop.f32.mrf.mxu0
      %1412 = vmatprep.mubr.f32.mxu0 0.0
      %1413 = vmatmul.mubr.f32.gmra.mxu0 %v1065
      %v1414 = vpop.f32.mrf.mxu0
      %v1415 = vadd.f32 %v1270, %v1414
      %v1416 = vpop.f32.mrf.mxu0
      %1417 = vmatprep.mubr.f32.mxu0 0.0
      %1418 = vmatmul.mubr.f32.gmra.mxu0 %v1066
      %v1419 = vpop.f32.mrf.mxu0
      %v1420 = vadd.f32 %v1275, %v1419
      %v1421 = vpop.f32.mrf.mxu0
      %1422 = vmatprep.mubr.f32.mxu0 0.0
      %1423 = vmatmul.mubr.f32.gmra.mxu0 %v1067
      %v1424 = vpop.f32.mrf.mxu0
      %v1425 = vadd.f32 %v1280, %v1424
      %v1426 = vpop.f32.mrf.mxu0
      %1427 = vmatprep.mubr.f32.mxu0 0.0
      %1428 = vmatmul.mubr.f32.gmra.mxu0 %v1068
      %v1429 = vpop.f32.mrf.mxu0
      %v1430 = vadd.f32 %v1285, %v1429
      %v1431 = vpop.f32.mrf.mxu0
      %1432 = vmatprep.mubr.f32.mxu0 0.0
      %1433 = vmatmul.mubr.f32.gmra.mxu0 %v1069
      %v1434 = vpop.f32.mrf.mxu0
      %v1435 = vadd.f32 %v1290, %v1434
      %v1436 = vpop.f32.mrf.mxu0
      %1437 = vmatprep.mubr.f32.mxu0 0.0
      %1438 = vmatmul.mubr.f32.gmra.mxu0 %v1070
      %v1439 = vpop.f32.mrf.mxu0
      %v1440 = vadd.f32 %v1295, %v1439
      %v1441 = vpop.f32.mrf.mxu0
      %1442 = vmatprep.mubr.f32.mxu0 0.0
      %1443 = vmatmul.mubr.f32.gmra.mxu0 %v1071
      %v1444 = vpop.f32.mrf.mxu0
      %v1445 = vadd.f32 %v1300, %v1444
      %v1446 = vpop.f32.mrf.mxu0
      %1447 = vmatprep.mubr.f32.mxu0 0.0
      %1448 = vmatmul.mubr.f32.gmra.mxu0 %v1072
      %v1449 = vpop.f32.mrf.mxu0
      %v1450 = vadd.f32 %v1305, %v1449
      %v1451 = vpop.f32.mrf.mxu0
      %1452 = vmatprep.mubr.f32.mxu0 0.0
      %1453 = vmatmul.mubr.f32.gmra.mxu0 %v1073
      %v1454 = vpop.f32.mrf.mxu0
      %v1455 = vadd.f32 %v1310, %v1454
      %v1456 = vpop.f32.mrf.mxu0
      %1457 = vmatprep.mubr.f32.mxu0 0.0
      %1458 = vmatmul.mubr.f32.gmra.mxu0 %v1074
      %v1459 = vpop.f32.mrf.mxu0
      %v1460 = vadd.f32 %v1315, %v1459
      %v1461 = vpop.f32.mrf.mxu0
      %1462 = vdwg.mxu0
      %1463 = vmatprep.subr.mxu0 0.0
      %1464 = vmatpush1.msra.mxu0 %v1092
      %1465 = vmatprep.subr.mxu0 0.0
      %1466 = vmatpush1.msra.mxu0 %v1091
      %1467 = vmatprep.subr.mxu0 0.0
      %1468 = vmatpush1.msra.mxu0 %v1090
      %1469 = vmatprep.subr.mxu0 0.0
      %1470 = vmatpush1.msra.mxu0 %v1089
      %1471 = vmatprep.subr.mxu0 0.0
      %1472 = vmatpush1.msra.mxu0 %v1088
      %1473 = vmatprep.subr.mxu0 0.0
      %1474 = vmatpush1.msra.mxu0 %v1087
      %1475 = vmatprep.subr.mxu0 0.0
      %1476 = vmatpush1.msra.mxu0 %v1086
      %1477 = vmatprep.subr.mxu0 0.0
      %1478 = vmatpush1.msra.mxu0 %v1085
      %1479 = vmatprep.subr.mxu0 0.0
      %1480 = vmatpush1.msra.mxu0 %v1084
      %1481 = vmatprep.subr.mxu0 0.0
      %1482 = vmatpush1.msra.mxu0 %v1083
      %1483 = vmatprep.subr.mxu0 0.0
      %1484 = vmatpush1.msra.mxu0 %v1082
      %1485 = vmatprep.subr.mxu0 0.0
      %1486 = vmatpush1.msra.mxu0 %v1081
      %1487 = vmatprep.subr.mxu0 0.0
      %1488 = vmatpush1.msra.mxu0 %v1080
      %1489 = vmatprep.subr.mxu0 0.0
      %1490 = vmatpush1.msra.mxu0 %v1079
      %1491 = vmatprep.subr.mxu0 0.0
      %1492 = vmatpush1.msra.mxu0 %v1078
      %1493 = vmatprep.subr.mxu0 0.0
      %1494 = vmatpush1.msra.mxu0 %v1077
      %1495 = vmatprep.subr.mxu0 0.0
      %1496 = vmatpush2.msra.mxu0 %v1108
      %1497 = vmatprep.subr.mxu0 0.0
      %1498 = vmatpush2.msra.mxu0 %v1107
      %1499 = vmatprep.subr.mxu0 0.0
      %1500 = vmatpush2.msra.mxu0 %v1106
      %1501 = vmatprep.subr.mxu0 0.0
      %1502 = vmatpush2.msra.mxu0 %v1105
      %1503 = vmatprep.subr.mxu0 0.0
      %1504 = vmatpush2.msra.mxu0 %v1104
      %1505 = vmatprep.subr.mxu0 0.0
      %1506 = vmatpush2.msra.mxu0 %v1103
      %1507 = vmatprep.subr.mxu0 0.0
      %1508 = vmatpush2.msra.mxu0 %v1102
      %1509 = vmatprep.subr.mxu0 0.0
      %1510 = vmatpush2.msra.mxu0 %v1101
      %1511 = vmatprep.subr.mxu0 0.0
      %1512 = vmatpush2.msra.mxu0 %v1100
      %1513 = vmatprep.subr.mxu0 0.0
      %1514 = vmatpush2.msra.mxu0 %v1099
      %1515 = vmatprep.subr.mxu0 0.0
      %1516 = vmatpush2.msra.mxu0 %v1098
      %1517 = vmatprep.subr.mxu0 0.0
      %1518 = vmatpush2.msra.mxu0 %v1097
      %1519 = vmatprep.subr.mxu0 0.0
      %1520 = vmatpush2.msra.mxu0 %v1096
      %1521 = vmatprep.subr.mxu0 0.0
      %1522 = vmatpush2.msra.mxu0 %v1095
      %1523 = vmatprep.subr.mxu0 0.0
      %1524 = vmatpush2.msra.mxu0 %v1094
      %1525 = vmatprep.subr.mxu0 0.0
      %1526 = vmatpush2.msra.mxu0 %v1093
      %1527 = vmatprep.mubr.f32.mxu0 %v566
      %1528 = vmatmul.mubr.f32.gmra.mxu0 %v936
      %v1529 = vpop.f32.mrf.mxu0
      %v1530 = vadd.f32 %v1385, %v1529
      %v1531 = vpop.f32.mrf.mxu0
      %1532 = vmatprep.mubr.f32.mxu0 %v567
      %1533 = vmatmul.mubr.f32.gmra.mxu0 %v937
      %v1534 = vpop.f32.mrf.mxu0
      %v1535 = vadd.f32 %v1390, %v1534
      %v1536 = vpop.f32.mrf.mxu0
      %1537 = vmatprep.mubr.f32.mxu0 %v534
      %1538 = vmatmul.mubr.f32.gmra.mxu0 %v938
      %v1539 = vpop.f32.mrf.mxu0
      %v1540 = vadd.f32 %v1395, %v1539
      %v1541 = vpop.f32.mrf.mxu0
      %1542 = vmatprep.mubr.f32.mxu0 %v535
      %1543 = vmatmul.mubr.f32.gmra.mxu0 %v939
      %v1544 = vpop.f32.mrf.mxu0
      %v1545 = vadd.f32 %v1400, %v1544
      %v1546 = vpop.f32.mrf.mxu0
      %1547 = vmatprep.mubr.f32.mxu0 %v536
      %1548 = vmatmul.mubr.f32.gmra.mxu0 %v940
      %v1549 = vpop.f32.mrf.mxu0
      %v1550 = vadd.f32 %v1405, %v1549
      %v1551 = vpop.f32.mrf.mxu0
      %1552 = vmatprep.mubr.f32.mxu0 %v537
      %1553 = vmatmul.mubr.f32.gmra.mxu0 %v941
      %v1554 = vpop.f32.mrf.mxu0
      %v1555 = vadd.f32 %v1410, %v1554
      %v1556 = vpop.f32.mrf.mxu0
      %1557 = vmatprep.mubr.f32.mxu0 %v538
      %1558 = vmatmul.mubr.f32.gmra.mxu0 %v942
      %v1559 = vpop.f32.mrf.mxu0
      %v1560 = vadd.f32 %v1415, %v1559
      %v1561 = vpop.f32.mrf.mxu0
      %1562 = vmatprep.mubr.f32.mxu0 %v539
      %1563 = vmatmul.mubr.f32.gmra.mxu0 %v943
      %v1564 = vpop.f32.mrf.mxu0
      %v1565 = vadd.f32 %v1420, %v1564
      %v1566 = vpop.f32.mrf.mxu0
      %1567 = vmatprep.mubr.f32.mxu0 %v540
      %1568 = vmatmul.mubr.f32.gmra.mxu0 %v944
      %v1569 = vpop.f32.mrf.mxu0
      %v1570 = vadd.f32 %v1425, %v1569
      %v1571 = vpop.f32.mrf.mxu0
      %1572 = vmatprep.mubr.f32.mxu0 %v541
      %1573 = vmatmul.mubr.f32.gmra.mxu0 %v945
      %v1574 = vpop.f32.mrf.mxu0
      %v1575 = vadd.f32 %v1430, %v1574
      %v1576 = vpop.f32.mrf.mxu0
      %1577 = vmatprep.mubr.f32.mxu0 %v542
      %1578 = vmatmul.mubr.f32.gmra.mxu0 %v946
      %v1579 = vpop.f32.mrf.mxu0
      %v1580 = vadd.f32 %v1435, %v1579
      %v1581 = vpop.f32.mrf.mxu0
      %1582 = vmatprep.mubr.f32.mxu0 %v543
      %1583 = vmatmul.mubr.f32.gmra.mxu0 %v947
      %v1584 = vpop.f32.mrf.mxu0
      %v1585 = vadd.f32 %v1440, %v1584
      %v1586 = vpop.f32.mrf.mxu0
      %1587 = vmatprep.mubr.f32.mxu0 %v544
      %1588 = vmatmul.mubr.f32.gmra.mxu0 %v948
      %v1589 = vpop.f32.mrf.mxu0
      %v1590 = vadd.f32 %v1445, %v1589
      %v1591 = vpop.f32.mrf.mxu0
      %1592 = vmatprep.mubr.f32.mxu0 %v545
      %1593 = vmatmul.mubr.f32.gmra.mxu0 %v949
      %v1594 = vpop.f32.mrf.mxu0
      %v1595 = vadd.f32 %v1450, %v1594
      %v1596 = vpop.f32.mrf.mxu0
      %1597 = vmatprep.mubr.f32.mxu0 %v546
      %1598 = vmatmul.mubr.f32.gmra.mxu0 %v950
      %v1599 = vpop.f32.mrf.mxu0
      %v1600 = vadd.f32 %v1455, %v1599
      %v1601 = vpop.f32.mrf.mxu0
      %1602 = vmatprep.mubr.f32.mxu0 %v547
      %1603 = vmatmul.mubr.f32.gmra.mxu0 %v951
      %v1604 = vpop.f32.mrf.mxu0
      %v1605 = vadd.f32 %v1460, %v1604
      %v1606 = vpop.f32.mrf.mxu0
      %1607 = vdwg.mxu0
      %1608 = vmatprep.subr.mxu0 0.0
      %1609 = vmatpush1.msra.mxu0 %v1124
      %1610 = vmatprep.subr.mxu0 0.0
      %1611 = vmatpush1.msra.mxu0 %v1123
      %1612 = vmatprep.subr.mxu0 0.0
      %1613 = vmatpush1.msra.mxu0 %v1122
      %1614 = vmatprep.subr.mxu0 0.0
      %1615 = vmatpush1.msra.mxu0 %v1121
      %1616 = vmatprep.subr.mxu0 0.0
      %1617 = vmatpush1.msra.mxu0 %v1120
      %1618 = vmatprep.subr.mxu0 0.0
      %1619 = vmatpush1.msra.mxu0 %v1119
      %1620 = vmatprep.subr.mxu0 0.0
      %1621 = vmatpush1.msra.mxu0 %v1118
      %1622 = vmatprep.subr.mxu0 0.0
      %1623 = vmatpush1.msra.mxu0 %v1117
      %1624 = vmatprep.subr.mxu0 0.0
      %1625 = vmatpush1.msra.mxu0 %v1116
      %1626 = vmatprep.subr.mxu0 0.0
      %1627 = vmatpush1.msra.mxu0 %v1115
      %1628 = vmatprep.subr.mxu0 0.0
      %1629 = vmatpush1.msra.mxu0 %v1114
      %1630 = vmatprep.subr.mxu0 0.0
      %1631 = vmatpush1.msra.mxu0 %v1113
      %1632 = vmatprep.subr.mxu0 0.0
      %1633 = vmatpush1.msra.mxu0 %v1112
      %1634 = vmatprep.subr.mxu0 0.0
      %1635 = vmatpush1.msra.mxu0 %v1111
      %1636 = vmatprep.subr.mxu0 0.0
      %1637 = vmatpush1.msra.mxu0 %v1110
      %1638 = vmatprep.subr.mxu0 0.0
      %1639 = vmatpush1.msra.mxu0 %v1109
      %1640 = vmatprep.subr.mxu0 0.0
      %1641 = vmatpush2.msra.mxu0 0.0
      %1642 = vmatprep.subr.mxu0 0.0
      %1643 = vmatpush2.msra.mxu0 0.0
      %1644 = vmatprep.subr.mxu0 0.0
      %1645 = vmatpush2.msra.mxu0 0.0
      %1646 = vmatprep.subr.mxu0 0.0
      %1647 = vmatpush2.msra.mxu0 0.0
      %1648 = vmatprep.subr.mxu0 0.0
      %1649 = vmatpush2.msra.mxu0 0.0
      %1650 = vmatprep.subr.mxu0 0.0
      %1651 = vmatpush2.msra.mxu0 0.0
      %1652 = vmatprep.subr.mxu0 0.0
      %1653 = vmatpush2.msra.mxu0 0.0
      %1654 = vmatprep.subr.mxu0 0.0
      %1655 = vmatpush2.msra.mxu0 0.0
      %1656 = vmatprep.subr.mxu0 0.0
      %1657 = vmatpush2.msra.mxu0 0.0
      %1658 = vmatprep.subr.mxu0 0.0
      %1659 = vmatpush2.msra.mxu0 0.0
      %1660 = vmatprep.subr.mxu0 0.0
      %1661 = vmatpush2.msra.mxu0 0.0
      %1662 = vmatprep.subr.mxu0 0.0
      %1663 = vmatpush2.msra.mxu0 0.0
      %1664 = vmatprep.subr.mxu0 0.0
      %1665 = vmatpush2.msra.mxu0 0.0
      %1666 = vmatprep.subr.mxu0 0.0
      %1667 = vmatpush2.msra.mxu0 0.0
      %1668 = vmatprep.subr.mxu0 0.0
      %1669 = vmatpush2.msra.mxu0 0.0
      %1670 = vmatprep.subr.mxu0 0.0
      %1671 = vmatpush2.msra.mxu0 0.0
      %1672 = vmatprep.mubr.f32.mxu0 0.0
      %1673 = vmatmul.mubr.f32.gmra.mxu0 %v1057
      %v1674 = vpop.f32.mrf.mxu0
      %v1675 = vadd.f32 %v1530, %v1674
      %v1676 = vpop.f32.mrf.mxu0
      %1677 = vmatprep.mubr.f32.mxu0 0.0
      %1678 = vmatmul.mubr.f32.gmra.mxu0 %v1058
      %v1679 = vpop.f32.mrf.mxu0
      %v1680 = vadd.f32 %v1535, %v1679
      %v1681 = vpop.f32.mrf.mxu0
      %1682 = vmatprep.mubr.f32.mxu0 0.0
      %1683 = vmatmul.mubr.f32.gmra.mxu0 %v1059
      %v1684 = vpop.f32.mrf.mxu0
      %v1685 = vadd.f32 %v1540, %v1684
      %v1686 = vpop.f32.mrf.mxu0
      %1687 = vmatprep.mubr.f32.mxu0 0.0
      %1688 = vmatmul.mubr.f32.gmra.mxu0 %v1060
      %v1689 = vpop.f32.mrf.mxu0
      %v1690 = vadd.f32 %v1545, %v1689
      %v1691 = vpop.f32.mrf.mxu0
      %1692 = vmatprep.mubr.f32.mxu0 0.0
      %1693 = vmatmul.mubr.f32.gmra.mxu0 %v1061
      %v1694 = vpop.f32.mrf.mxu0
      %v1695 = vadd.f32 %v1550, %v1694
      %v1696 = vpop.f32.mrf.mxu0
      %1697 = vmatprep.mubr.f32.mxu0 0.0
      %1698 = vmatmul.mubr.f32.gmra.mxu0 %v1062
      %v1699 = vpop.f32.mrf.mxu0
      %v1700 = vadd.f32 %v1555, %v1699
      %v1701 = vpop.f32.mrf.mxu0
      %1702 = vmatprep.mubr.f32.mxu0 0.0
      %1703 = vmatmul.mubr.f32.gmra.mxu0 %v1063
      %v1704 = vpop.f32.mrf.mxu0
      %v1705 = vadd.f32 %v1560, %v1704
      %v1706 = vpop.f32.mrf.mxu0
      %1707 = vmatprep.mubr.f32.mxu0 0.0
      %1708 = vmatmul.mubr.f32.gmra.mxu0 %v1064
      %v1709 = vpop.f32.mrf.mxu0
      %v1710 = vadd.f32 %v1565, %v1709
      %v1711 = vpop.f32.mrf.mxu0
      %1712 = vmatprep.mubr.f32.mxu0 0.0
      %1713 = vmatmul.mubr.f32.gmra.mxu0 %v1065
      %v1714 = vpop.f32.mrf.mxu0
      %v1715 = vadd.f32 %v1570, %v1714
      %v1716 = vpop.f32.mrf.mxu0
      %1717 = vmatprep.mubr.f32.mxu0 0.0
      %1718 = vmatmul.mubr.f32.gmra.mxu0 %v1066
      %v1719 = vpop.f32.mrf.mxu0
      %v1720 = vadd.f32 %v1575, %v1719
      %v1721 = vpop.f32.mrf.mxu0
      %1722 = vmatprep.mubr.f32.mxu0 0.0
      %1723 = vmatmul.mubr.f32.gmra.mxu0 %v1067
      %v1724 = vpop.f32.mrf.mxu0
      %v1725 = vadd.f32 %v1580, %v1724
      %v1726 = vpop.f32.mrf.mxu0
      %1727 = vmatprep.mubr.f32.mxu0 0.0
      %1728 = vmatmul.mubr.f32.gmra.mxu0 %v1068
      %v1729 = vpop.f32.mrf.mxu0
      %v1730 = vadd.f32 %v1585, %v1729
      %v1731 = vpop.f32.mrf.mxu0
      %1732 = vmatprep.mubr.f32.mxu0 0.0
      %1733 = vmatmul.mubr.f32.gmra.mxu0 %v1069
      %v1734 = vpop.f32.mrf.mxu0
      %v1735 = vadd.f32 %v1590, %v1734
      %v1736 = vpop.f32.mrf.mxu0
      %1737 = vmatprep.mubr.f32.mxu0 0.0
      %1738 = vmatmul.mubr.f32.gmra.mxu0 %v1070
      %v1739 = vpop.f32.mrf.mxu0
      %v1740 = vadd.f32 %v1595, %v1739
      %v1741 = vpop.f32.mrf.mxu0
      %1742 = vmatprep.mubr.f32.mxu0 0.0
      %1743 = vmatmul.mubr.f32.gmra.mxu0 %v1071
      %v1744 = vpop.f32.mrf.mxu0
      %v1745 = vadd.f32 %v1600, %v1744
      %v1746 = vpop.f32.mrf.mxu0
      %1747 = vmatprep.mubr.f32.mxu0 0.0
      %1748 = vmatmul.mubr.f32.gmra.mxu0 %v1072
      %v1749 = vpop.f32.mrf.mxu0
      %v1750 = vadd.f32 %v1605, %v1749
      %v1751 = vpop.f32.mrf.mxu0
      %1752 = vdwg.mxu0
      %v1753 = vld [vmem:[%s3 + $0x300] sm:$0xff]
      %v1754 = vld [vmem:[%s3 + $0x308] sm:$0xff]
      %v1755 = vld [vmem:[%s3 + $0x310] sm:$0xff]
      %v1756 = vld [vmem:[%s3 + $0x318] sm:$0xff]
      %v1757 = vld [vmem:[%s3 + $0x320] sm:$0xff]
      %v1758 = vld [vmem:[%s3 + $0x328] sm:$0xff]
      %v1759 = vld [vmem:[%s3 + $0x330] sm:$0xff]
      %v1760 = vld [vmem:[%s3 + $0x338] sm:$0xff]
      %v1761 = vld [vmem:[%s3 + $0x340] sm:$0xff]
      %v1762 = vld [vmem:[%s3 + $0x348] sm:$0xff]
      %v1763 = vld [vmem:[%s3 + $0x350] sm:$0xff]
      %v1764 = vld [vmem:[%s3 + $0x358] sm:$0xff]
      %v1765 = vld [vmem:[%s3 + $0x360] sm:$0xff]
      %v1766 = vld [vmem:[%s3 + $0x368] sm:$0xff]
      %v1767 = vld [vmem:[%s3 + $0x370] sm:$0xff]
      %v1768 = vld [vmem:[%s3 + $0x378] sm:$0xff]
      %v1769 = vld [vmem:[%s3 + $0x380] sm:$0xff]
      %v1770 = vld [vmem:[%s3 + $0x388] sm:$0xff]
      %v1771 = vld [vmem:[%s3 + $0x390] sm:$0xff]
      %v1772 = vld [vmem:[%s3 + $0x398] sm:$0xff]
      %v1773 = vld [vmem:[%s3 + $0x3a0] sm:$0xff]
      %v1774 = vld [vmem:[%s3 + $0x3a8] sm:$0xff]
      %v1775 = vld [vmem:[%s3 + $0x3b0] sm:$0xff]
      %v1776 = vld [vmem:[%s3 + $0x3b8] sm:$0xff]
      %v1777 = vld [vmem:[%s3 + $0x3c0] sm:$0xff]
      %v1778 = vld [vmem:[%s3 + $0x3c8] sm:$0xff]
      %v1779 = vld [vmem:[%s3 + $0x3d0] sm:$0xff]
      %v1780 = vld [vmem:[%s3 + $0x3d8] sm:$0xff]
      %v1781 = vld [vmem:[%s3 + $0x3e0] sm:$0xff]
      %v1782 = vld [vmem:[%s3 + $0x3e8] sm:$0xff]
      %v1783 = vld [vmem:[%s3 + $0x3f0] sm:$0xff]
      %v1784 = vld [vmem:[%s3 + $0x3f8] sm:$0xff]
      %v1785 = vld [vmem:[%s3 + $0x400] sm:$0xff]
      %v1786 = vld [vmem:[%s3 + $0x408] sm:$0xff]
      %v1787 = vld [vmem:[%s3 + $0x410] sm:$0xff]
      %v1788 = vld [vmem:[%s3 + $0x418] sm:$0xff]
      %v1789 = vld [vmem:[%s3 + $0x420] sm:$0xff]
      %v1790 = vld [vmem:[%s3 + $0x428] sm:$0xff]
      %v1791 = vld [vmem:[%s3 + $0x430] sm:$0xff]
      %v1792 = vld [vmem:[%s3 + $0x438] sm:$0xff]
      %v1793 = vld [vmem:[%s3 + $0x440] sm:$0xff]
      %v1794 = vld [vmem:[%s3 + $0x448] sm:$0xff]
      %v1795 = vld [vmem:[%s3 + $0x450] sm:$0xff]
      %v1796 = vld [vmem:[%s3 + $0x458] sm:$0xff]
      %v1797 = vld [vmem:[%s3 + $0x460] sm:$0xff]
      %v1798 = vld [vmem:[%s3 + $0x468] sm:$0xff]
      %v1799 = vld [vmem:[%s3 + $0x470] sm:$0xff]
      %v1800 = vld [vmem:[%s3 + $0x478] sm:$0xff]
      %1801 = vmatprep.subr.mxu0 0.0
      %1802 = vmatpush1.msra.mxu0 %v1768
      %1803 = vmatprep.subr.mxu0 0.0
      %1804 = vmatpush1.msra.mxu0 %v1767
      %1805 = vmatprep.subr.mxu0 0.0
      %1806 = vmatpush1.msra.mxu0 %v1766
      %1807 = vmatprep.subr.mxu0 0.0
      %1808 = vmatpush1.msra.mxu0 %v1765
      %1809 = vmatprep.subr.mxu0 0.0
      %1810 = vmatpush1.msra.mxu0 %v1764
      %1811 = vmatprep.subr.mxu0 0.0
      %1812 = vmatpush1.msra.mxu0 %v1763
      %1813 = vmatprep.subr.mxu0 0.0
      %1814 = vmatpush1.msra.mxu0 %v1762
      %1815 = vmatprep.subr.mxu0 0.0
      %1816 = vmatpush1.msra.mxu0 %v1761
      %1817 = vmatprep.subr.mxu0 0.0
      %1818 = vmatpush1.msra.mxu0 %v1760
      %1819 = vmatprep.subr.mxu0 0.0
      %1820 = vmatpush1.msra.mxu0 %v1759
      %1821 = vmatprep.subr.mxu0 0.0
      %1822 = vmatpush1.msra.mxu0 %v1758
      %1823 = vmatprep.subr.mxu0 0.0
      %1824 = vmatpush1.msra.mxu0 %v1757
      %1825 = vmatprep.subr.mxu0 0.0
      %1826 = vmatpush1.msra.mxu0 %v1756
      %1827 = vmatprep.subr.mxu0 0.0
      %1828 = vmatpush1.msra.mxu0 %v1755
      %1829 = vmatprep.subr.mxu0 0.0
      %1830 = vmatpush1.msra.mxu0 %v1754
      %1831 = vmatprep.subr.mxu0 0.0
      %1832 = vmatpush1.msra.mxu0 %v1753
      %1833 = vmatprep.subr.mxu0 0.0
      %1834 = vmatpush2.msra.mxu0 %v1784
      %1835 = vmatprep.subr.mxu0 0.0
      %1836 = vmatpush2.msra.mxu0 %v1783
      %1837 = vmatprep.subr.mxu0 0.0
      %1838 = vmatpush2.msra.mxu0 %v1782
      %1839 = vmatprep.subr.mxu0 0.0
      %1840 = vmatpush2.msra.mxu0 %v1781
      %1841 = vmatprep.subr.mxu0 0.0
      %1842 = vmatpush2.msra.mxu0 %v1780
      %1843 = vmatprep.subr.mxu0 0.0
      %1844 = vmatpush2.msra.mxu0 %v1779
      %1845 = vmatprep.subr.mxu0 0.0
      %1846 = vmatpush2.msra.mxu0 %v1778
      %1847 = vmatprep.subr.mxu0 0.0
      %1848 = vmatpush2.msra.mxu0 %v1777
      %1849 = vmatprep.subr.mxu0 0.0
      %1850 = vmatpush2.msra.mxu0 %v1776
      %1851 = vmatprep.subr.mxu0 0.0
      %1852 = vmatpush2.msra.mxu0 %v1775
      %1853 = vmatprep.subr.mxu0 0.0
      %1854 = vmatpush2.msra.mxu0 %v1774
      %1855 = vmatprep.subr.mxu0 0.0
      %1856 = vmatpush2.msra.mxu0 %v1773
      %1857 = vmatprep.subr.mxu0 0.0
      %1858 = vmatpush2.msra.mxu0 %v1772
      %1859 = vmatprep.subr.mxu0 0.0
      %1860 = vmatpush2.msra.mxu0 %v1771
      %1861 = vmatprep.subr.mxu0 0.0
      %1862 = vmatpush2.msra.mxu0 %v1770
      %1863 = vmatprep.subr.mxu0 0.0
      %1864 = vmatpush2.msra.mxu0 %v1769
      %1865 = vmatprep.mubr.f32.mxu0 %v536
      %1866 = vmatmul.mubr.f32.gmra.mxu0 %v940
      %v1867 = vpop.f32.mrf.mxu0
      %v1868 = vadd.f32 0.0, %v1867
      %v1869 = vpop.f32.mrf.mxu0
      %1870 = vmatprep.mubr.f32.mxu0 %v537
      %1871 = vmatmul.mubr.f32.gmra.mxu0 %v941
      %v1872 = vpop.f32.mrf.mxu0
      %v1873 = vadd.f32 0.0, %v1872
      %v1874 = vpop.f32.mrf.mxu0
      %1875 = vmatprep.mubr.f32.mxu0 %v538
      %1876 = vmatmul.mubr.f32.gmra.mxu0 %v942
      %v1877 = vpop.f32.mrf.mxu0
      %v1878 = vadd.f32 0.0, %v1877
      %v1879 = vpop.f32.mrf.mxu0
      %1880 = vmatprep.mubr.f32.mxu0 %v539
      %1881 = vmatmul.mubr.f32.gmra.mxu0 %v943
      %v1882 = vpop.f32.mrf.mxu0
      %v1883 = vadd.f32 0.0, %v1882
      %v1884 = vpop.f32.mrf.mxu0
      %1885 = vmatprep.mubr.f32.mxu0 %v540
      %1886 = vmatmul.mubr.f32.gmra.mxu0 %v944
      %v1887 = vpop.f32.mrf.mxu0
      %v1888 = vadd.f32 0.0, %v1887
      %v1889 = vpop.f32.mrf.mxu0
      %1890 = vmatprep.mubr.f32.mxu0 %v541
      %1891 = vmatmul.mubr.f32.gmra.mxu0 %v945
      %v1892 = vpop.f32.mrf.mxu0
      %v1893 = vadd.f32 0.0, %v1892
      %v1894 = vpop.f32.mrf.mxu0
      %1895 = vmatprep.mubr.f32.mxu0 %v542
      %1896 = vmatmul.mubr.f32.gmra.mxu0 %v946
      %v1897 = vpop.f32.mrf.mxu0
      %v1898 = vadd.f32 0.0, %v1897
      %v1899 = vpop.f32.mrf.mxu0
      %1900 = vmatprep.mubr.f32.mxu0 %v543
      %1901 = vmatmul.mubr.f32.gmra.mxu0 %v947
      %v1902 = vpop.f32.mrf.mxu0
      %v1903 = vadd.f32 0.0, %v1902
      %v1904 = vpop.f32.mrf.mxu0
      %1905 = vmatprep.mubr.f32.mxu0 %v544
      %1906 = vmatmul.mubr.f32.gmra.mxu0 %v948
      %v1907 = vpop.f32.mrf.mxu0
      %v1908 = vadd.f32 0.0, %v1907
      %v1909 = vpop.f32.mrf.mxu0
      %1910 = vmatprep.mubr.f32.mxu0 %v545
      %1911 = vmatmul.mubr.f32.gmra.mxu0 %v949
      %v1912 = vpop.f32.mrf.mxu0
      %v1913 = vadd.f32 0.0, %v1912
      %v1914 = vpop.f32.mrf.mxu0
      %1915 = vmatprep.mubr.f32.mxu0 %v546
      %1916 = vmatmul.mubr.f32.gmra.mxu0 %v950
      %v1917 = vpop.f32.mrf.mxu0
      %v1918 = vadd.f32 0.0, %v1917
      %v1919 = vpop.f32.mrf.mxu0
      %1920 = vmatprep.mubr.f32.mxu0 %v547
      %1921 = vmatmul.mubr.f32.gmra.mxu0 %v951
      %v1922 = vpop.f32.mrf.mxu0
      %v1923 = vadd.f32 0.0, %v1922
      %v1924 = vpop.f32.mrf.mxu0
      %1925 = vmatprep.mubr.f32.mxu0 %v548
      %1926 = vmatmul.mubr.f32.gmra.mxu0 %v952
      %v1927 = vpop.f32.mrf.mxu0
      %v1928 = vadd.f32 0.0, %v1927
      %v1929 = vpop.f32.mrf.mxu0
      %1930 = vmatprep.mubr.f32.mxu0 %v549
      %1931 = vmatmul.mubr.f32.gmra.mxu0 %v953
      %v1932 = vpop.f32.mrf.mxu0
      %v1933 = vadd.f32 0.0, %v1932
      %v1934 = vpop.f32.mrf.mxu0
      %1935 = vmatprep.mubr.f32.mxu0 %v572
      %1936 = vmatmul.mubr.f32.gmra.mxu0 %v954
      %v1937 = vpop.f32.mrf.mxu0
      %v1938 = vadd.f32 0.0, %v1937
      %v1939 = vpop.f32.mrf.mxu0
      %1940 = vmatprep.mubr.f32.mxu0 %v573
      %1941 = vmatmul.mubr.f32.gmra.mxu0 %v955
      %v1942 = vpop.f32.mrf.mxu0
      %v1943 = vadd.f32 0.0, %v1942
      %v1944 = vpop.f32.mrf.mxu0
      %1945 = vdwg.mxu0
      %1946 = vmatprep.subr.mxu0 0.0
      %1947 = vmatpush1.msra.mxu0 %v1800
      %1948 = vmatprep.subr.mxu0 0.0
      %1949 = vmatpush1.msra.mxu0 %v1799
      %1950 = vmatprep.subr.mxu0 0.0
      %1951 = vmatpush1.msra.mxu0 %v1798
      %1952 = vmatprep.subr.mxu0 0.0
      %1953 = vmatpush1.msra.mxu0 %v1797
      %1954 = vmatprep.subr.mxu0 0.0
      %1955 = vmatpush1.msra.mxu0 %v1796
      %1956 = vmatprep.subr.mxu0 0.0
      %1957 = vmatpush1.msra.mxu0 %v1795
      %1958 = vmatprep.subr.mxu0 0.0
      %1959 = vmatpush1.msra.mxu0 %v1794
      %1960 = vmatprep.subr.mxu0 0.0
      %1961 = vmatpush1.msra.mxu0 %v1793
      %1962 = vmatprep.subr.mxu0 0.0
      %1963 = vmatpush1.msra.mxu0 %v1792
      %1964 = vmatprep.subr.mxu0 0.0
      %1965 = vmatpush1.msra.mxu0 %v1791
      %1966 = vmatprep.subr.mxu0 0.0
      %1967 = vmatpush1.msra.mxu0 %v1790
      %1968 = vmatprep.subr.mxu0 0.0
      %1969 = vmatpush1.msra.mxu0 %v1789
      %1970 = vmatprep.subr.mxu0 0.0
      %1971 = vmatpush1.msra.mxu0 %v1788
      %1972 = vmatprep.subr.mxu0 0.0
      %1973 = vmatpush1.msra.mxu0 %v1787
      %1974 = vmatprep.subr.mxu0 0.0
      %1975 = vmatpush1.msra.mxu0 %v1786
      %1976 = vmatprep.subr.mxu0 0.0
      %1977 = vmatpush1.msra.mxu0 %v1785
      %1978 = vmatprep.subr.mxu0 0.0
      %1979 = vmatpush2.msra.mxu0 0.0
      %1980 = vmatprep.subr.mxu0 0.0
      %1981 = vmatpush2.msra.mxu0 0.0
      %1982 = vmatprep.subr.mxu0 0.0
      %1983 = vmatpush2.msra.mxu0 0.0
      %1984 = vmatprep.subr.mxu0 0.0
      %1985 = vmatpush2.msra.mxu0 0.0
      %1986 = vmatprep.subr.mxu0 0.0
      %1987 = vmatpush2.msra.mxu0 0.0
      %1988 = vmatprep.subr.mxu0 0.0
      %1989 = vmatpush2.msra.mxu0 0.0
      %1990 = vmatprep.subr.mxu0 0.0
      %1991 = vmatpush2.msra.mxu0 0.0
      %1992 = vmatprep.subr.mxu0 0.0
      %1993 = vmatpush2.msra.mxu0 0.0
      %1994 = vmatprep.subr.mxu0 0.0
      %1995 = vmatpush2.msra.mxu0 0.0
      %1996 = vmatprep.subr.mxu0 0.0
      %1997 = vmatpush2.msra.mxu0 0.0
      %1998 = vmatprep.subr.mxu0 0.0
      %1999 = vmatpush2.msra.mxu0 0.0
      %2000 = vmatprep.subr.mxu0 0.0
      %2001 = vmatpush2.msra.mxu0 0.0
      %2002 = vmatprep.subr.mxu0 0.0
      %2003 = vmatpush2.msra.mxu0 0.0
      %2004 = vmatprep.subr.mxu0 0.0
      %2005 = vmatpush2.msra.mxu0 0.0
      %2006 = vmatprep.subr.mxu0 0.0
      %2007 = vmatpush2.msra.mxu0 0.0
      %2008 = vmatprep.subr.mxu0 0.0
      %2009 = vmatpush2.msra.mxu0 0.0
      %2010 = vmatprep.mubr.f32.mxu0 0.0
      %2011 = vmatmul.mubr.f32.gmra.mxu0 %v1061
      %v2012 = vpop.f32.mrf.mxu0
      %v2013 = vadd.f32 %v1868, %v2012
      %v2014 = vpop.f32.mrf.mxu0
      %2015 = vmatprep.mubr.f32.mxu0 0.0
      %2016 = vmatmul.mubr.f32.gmra.mxu0 %v1062
      %v2017 = vpop.f32.mrf.mxu0
      %v2018 = vadd.f32 %v1873, %v2017
      %v2019 = vpop.f32.mrf.mxu0
      %2020 = vmatprep.mubr.f32.mxu0 0.0
      %2021 = vmatmul.mubr.f32.gmra.mxu0 %v1063
      %v2022 = vpop.f32.mrf.mxu0
      %v2023 = vadd.f32 %v1878, %v2022
      %v2024 = vpop.f32.mrf.mxu0
      %2025 = vmatprep.mubr.f32.mxu0 0.0
      %2026 = vmatmul.mubr.f32.gmra.mxu0 %v1064
      %v2027 = vpop.f32.mrf.mxu0
      %v2028 = vadd.f32 %v1883, %v2027
      %v2029 = vpop.f32.mrf.mxu0
      %2030 = vmatprep.mubr.f32.mxu0 0.0
      %2031 = vmatmul.mubr.f32.gmra.mxu0 %v1065
      %v2032 = vpop.f32.mrf.mxu0
      %v2033 = vadd.f32 %v1888, %v2032
      %v2034 = vpop.f32.mrf.mxu0
      %2035 = vmatprep.mubr.f32.mxu0 0.0
      %2036 = vmatmul.mubr.f32.gmra.mxu0 %v1066
      %v2037 = vpop.f32.mrf.mxu0
      %v2038 = vadd.f32 %v1893, %v2037
      %v2039 = vpop.f32.mrf.mxu0
      %2040 = vmatprep.mubr.f32.mxu0 0.0
      %2041 = vmatmul.mubr.f32.gmra.mxu0 %v1067
      %v2042 = vpop.f32.mrf.mxu0
      %v2043 = vadd.f32 %v1898, %v2042
      %v2044 = vpop.f32.mrf.mxu0
      %2045 = vmatprep.mubr.f32.mxu0 0.0
      %2046 = vmatmul.mubr.f32.gmra.mxu0 %v1068
      %v2047 = vpop.f32.mrf.mxu0
      %v2048 = vadd.f32 %v1903, %v2047
      %v2049 = vpop.f32.mrf.mxu0
      %2050 = vmatprep.mubr.f32.mxu0 0.0
      %2051 = vmatmul.mubr.f32.gmra.mxu0 %v1069
      %v2052 = vpop.f32.mrf.mxu0
      %v2053 = vadd.f32 %v1908, %v2052
      %v2054 = vpop.f32.mrf.mxu0
      %2055 = vmatprep.mubr.f32.mxu0 0.0
      %2056 = vmatmul.mubr.f32.gmra.mxu0 %v1070
      %v2057 = vpop.f32.mrf.mxu0
      %v2058 = vadd.f32 %v1913, %v2057
      %v2059 = vpop.f32.mrf.mxu0
      %2060 = vmatprep.mubr.f32.mxu0 0.0
      %2061 = vmatmul.mubr.f32.gmra.mxu0 %v1071
      %v2062 = vpop.f32.mrf.mxu0
      %v2063 = vadd.f32 %v1918, %v2062
      %v2064 = vpop.f32.mrf.mxu0
      %2065 = vmatprep.mubr.f32.mxu0 0.0
      %2066 = vmatmul.mubr.f32.gmra.mxu0 %v1072
      %v2067 = vpop.f32.mrf.mxu0
      %v2068 = vadd.f32 %v1923, %v2067
      %v2069 = vpop.f32.mrf.mxu0
      %2070 = vmatprep.mubr.f32.mxu0 0.0
      %2071 = vmatmul.mubr.f32.gmra.mxu0 %v1073
      %v2072 = vpop.f32.mrf.mxu0
      %v2073 = vadd.f32 %v1928, %v2072
      %v2074 = vpop.f32.mrf.mxu0
      %2075 = vmatprep.mubr.f32.mxu0 0.0
      %2076 = vmatmul.mubr.f32.gmra.mxu0 %v1074
      %v2077 = vpop.f32.mrf.mxu0
      %v2078 = vadd.f32 %v1933, %v2077
      %v2079 = vpop.f32.mrf.mxu0
      %2080 = vmatprep.mubr.f32.mxu0 0.0
      %2081 = vmatmul.mubr.f32.gmra.mxu0 %v1075
      %v2082 = vpop.f32.mrf.mxu0
      %v2083 = vadd.f32 %v1938, %v2082
      %v2084 = vpop.f32.mrf.mxu0
      %2085 = vmatprep.mubr.f32.mxu0 0.0
      %2086 = vmatmul.mubr.f32.gmra.mxu0 %v1076
      %v2087 = vpop.f32.mrf.mxu0
      %v2088 = vadd.f32 %v1943, %v2087
      %v2089 = vpop.f32.mrf.mxu0
      %2090 = vdwg.mxu0
      %v2091 = vadd.f32 %v1675, %v2013
      %v2092 = vadd.f32 %v1680, %v2018
      %v2093 = vadd.f32 %v1685, %v2023
      %v2094 = vadd.f32 %v1690, %v2028
      %v2095 = vadd.f32 %v1695, %v2033
      %v2096 = vadd.f32 %v1700, %v2038
      %v2097 = vadd.f32 %v1705, %v2043
      %v2098 = vadd.f32 %v1710, %v2048
      %v2099 = vadd.f32 %v1715, %v2053
      %v2100 = vadd.f32 %v1720, %v2058
      %v2101 = vadd.f32 %v1725, %v2063
      %v2102 = vadd.f32 %v1730, %v2068
      %v2103 = vadd.f32 %v1735, %v2073
      %v2104 = vadd.f32 %v1740, %v2078
      %v2105 = vadd.f32 %v1745, %v2083
      %v2106 = vadd.f32 %v1750, %v2088
      %v2107 = vadd.f32 %v2091, %v2092
      %v2108 = vadd.f32 %v2107, %v2093
      %v2109 = vadd.f32 %v2108, %v2094
      %v2110 = vadd.f32 %v2109, %v2095
      %v2111 = vadd.f32 %v2110, %v2096
      %v2112 = vadd.f32 %v2111, %v2097
      %v2113 = vadd.f32 %v2112, %v2098
      %v2114 = vadd.f32 %v2113, %v2099
      %v2115 = vadd.f32 %v2114, %v2100
      %v2116 = vadd.f32 %v2115, %v2101
      %v2117 = vadd.f32 %v2116, %v2102
      %v2118 = vadd.f32 %v2117, %v2103
      %v2119 = vadd.f32 %v2118, %v2104
      %v2120 = vadd.f32 %v2119, %v2105
      %v2121 = vadd.f32 %v2120, %v2106
      %v2122 = vrot.slane %v2121, 4
      %v2123 = vadd.f32 %v2121, %v2122
      %v2124 = vrot.slane %v2123, 2
      %v2125 = vadd.f32 %v2123, %v2124
      %v2126 = vrot.slane %v2125, 1
      %v2127 = vadd.f32 %v2125, %v2126
      %v2128 = vmul.f32 %v2091, %v2091
      %v2129 = vmul.f32 %v2092, %v2092
      %v2130 = vmul.f32 %v2093, %v2093
      %v2131 = vmul.f32 %v2094, %v2094
      %v2132 = vmul.f32 %v2095, %v2095
      %v2133 = vmul.f32 %v2096, %v2096
      %v2134 = vmul.f32 %v2097, %v2097
      %v2135 = vmul.f32 %v2098, %v2098
      %v2136 = vmul.f32 %v2099, %v2099
      %v2137 = vmul.f32 %v2100, %v2100
      %v2138 = vmul.f32 %v2101, %v2101
      %v2139 = vmul.f32 %v2102, %v2102
      %v2140 = vmul.f32 %v2103, %v2103
      %v2141 = vmul.f32 %v2104, %v2104
      %v2142 = vmul.f32 %v2105, %v2105
      %v2143 = vmul.f32 %v2106, %v2106
      %v2144 = vadd.f32 %v2128, %v2129
      %v2145 = vadd.f32 %v2144, %v2130
      %v2146 = vadd.f32 %v2145, %v2131
      %v2147 = vadd.f32 %v2146, %v2132
      %v2148 = vadd.f32 %v2147, %v2133
      %v2149 = vadd.f32 %v2148, %v2134
      %v2150 = vadd.f32 %v2149, %v2135
      %v2151 = vadd.f32 %v2150, %v2136
      %v2152 = vadd.f32 %v2151, %v2137
      %v2153 = vadd.f32 %v2152, %v2138
      %v2154 = vadd.f32 %v2153, %v2139
      %v2155 = vadd.f32 %v2154, %v2140
      %v2156 = vadd.f32 %v2155, %v2141
      %v2157 = vadd.f32 %v2156, %v2142
      %v2158 = vadd.f32 %v2157, %v2143
      %v2159 = vrot.slane %v2158, 4
      %v2160 = vadd.f32 %v2158, %v2159
      %v2161 = vrot.slane %v2160, 2
      %v2162 = vadd.f32 %v2160, %v2161
      %v2163 = vrot.slane %v2162, 1
      %v2164 = vadd.f32 %v2162, %v2163
      %vm2165 = vcmp.eq.s32.totalorder %v575, 0
      %vm2166 = vcmp.eq.s32.totalorder %v575, 1
      %v2167 = vsel %vm2166, %v2164, 0.0
      %v2168 = vsel %vm2165, %v2127, %v2167
      %2169 = vst [vmem:[%s467] sm:$0xff] %v2168
      %2170 = vst [vmem:[%s458] sm:$0xff] %v2091
      %2171 = vst [vmem:[%s458 + $0x8] sm:$0xff] %v2092
      %2172 = vst [vmem:[%s458 + $0x10] sm:$0xff] %v2093
      %2173 = vst [vmem:[%s458 + $0x18] sm:$0xff] %v2094
      %2174 = vst [vmem:[%s458 + $0x20] sm:$0xff] %v2095
      %2175 = vst [vmem:[%s458 + $0x28] sm:$0xff] %v2096
      %2176 = vst [vmem:[%s458 + $0x30] sm:$0xff] %v2097
      %2177 = vst [vmem:[%s458 + $0x38] sm:$0xff] %v2098
      %2178 = vst [vmem:[%s458 + $0x40] sm:$0xff] %v2099
      %2179 = vst [vmem:[%s458 + $0x48] sm:$0xff] %v2100
      %2180 = vst [vmem:[%s458 + $0x50] sm:$0xff] %v2101
      %2181 = vst [vmem:[%s458 + $0x58] sm:$0xff] %v2102
      %2182 = vst [vmem:[%s458 + $0x60] sm:$0xff] %v2103
      %2183 = vst [vmem:[%s458 + $0x68] sm:$0xff] %v2104
      %2184 = vst [vmem:[%s458 + $0x70] sm:$0xff] %v2105
      %2185 = vst [vmem:[%s458 + $0x78] sm:$0xff] %v2106
      %s2186 = smul.u32 8, %s24
      %p2187 = scmp.lt.s32.totalorder %s23, 1
      %s2188 = scalar_select %p2187, %s23, 1
      %p2189 = scmp.lt.s32.totalorder %s2186, 15
      %s2190 = scalar_select %p2189, %s2186, 15
      %s2191 = smul.addr %s2190, 2
      %s2192 = smul.addr %s2188, 32
      %s2193 = sadd.s32 %s2191, %s2192
      %s2194 = smul.addr %s2193, 8
      %s2195 = scalar_lea.vmem %s6, %s2194
      %p2196 = scmp.lt.s32.totalorder %s23, 1
      %s2197 = scalar_select %p2196, %s23, 1
      %p2198 = scmp.lt.s32.totalorder %s24, 1
      %s2199 = scalar_select %p2198, %s24, 1
      %s2200 = smul.addr %s2197, 2
      %s2201 = sadd.s32 %s2199, %s2200
      %s2202 = smul.addr %s2201, 8
      %s2203 = scalar_lea.vmem %s7, %s2202
      // Predicated region
      $region45: #{encoding_block.4} parent=43 // pred_check
        %p2204 = pneg %p214
      $region46: #{encoding_block.4} parent=43 // pred_check_branch
        %2206 = sbr.rel (%p2204) target = $region48
      $region47: #{encoding_block.4} parent=43 // pred_region
        %s2207 = smul.u32 8, %s24
      $region48: #{encoding_block.4} parent=43 // pred_fallthru
        _
      // Predicated region
      $region49: #{encoding_block.4} parent=43 // pred_check
        %p2208 = pneg %p242
      $region50: #{encoding_block.4} parent=43 // pred_check_branch
        %2210 = sbr.rel (%p2208) target = $region52
      $region51: #{encoding_block.4} parent=43 // pred_region
        _
      $region52: #{encoding_block.4} parent=43 // pred_fallthru
        _
    $region44: #{encoding_block.4} parent=5 // pred_fallthru
      _
    %p2211 = scmp.le.s32.totalorder 2, %s14
    // Predicated region
    $region53: #{encoding_block.4} parent=5 // pred_check
      %p2212 = pneg %p2211
    $region54: #{encoding_block.4} parent=5 // pred_check_branch
      %2214 = sbr.rel (%p2212) target = $region56
    $region55: #{encoding_block.4} parent=5 // pred_region
      %s2215 = ssub.s32 %s14, 2
      // Predicated region
      $region57: #{encoding_block.4} parent=55 // pred_check
        %p2216 = pneg %p220
      $region58: #{encoding_block.4} parent=55 // pred_check_branch
        %2218 = sbr.rel (%p2216) target = $region60
      $region59: #{encoding_block.4} parent=55 // pred_region
        %s2219 = smul.u32 8, %s26
        %p2220 = scmp.lt.s32.totalorder %s25, 1
        %s2221 = scalar_select %p2220, %s25, 1
        %p2222 = scmp.lt.s32.totalorder %s2219, 15
        %s2223 = scalar_select %p2222, %s2219, 15
        %s2224 = smul.addr %s2223, 2
        %s2225 = smul.addr %s2221, 32
        %s2226 = sadd.s32 %s2224, %s2225
        %s2227 = smul.addr %s2226, 8
        %s2228 = scalar_lea.vmem %s6, %s2227
      $region60: #{encoding_block.4} parent=55 // pred_fallthru
        _
      // Predicated region
      $region61: #{encoding_block.4} parent=55 // pred_check
        %p2229 = pneg %p248
      $region62: #{encoding_block.4} parent=55 // pred_check_branch
        %2231 = sbr.rel (%p2229) target = $region64
      $region63: #{encoding_block.4} parent=55 // pred_region
        %p2232 = scmp.lt.s32.totalorder %s25, 1
        %s2233 = scalar_select %p2232, %s25, 1
        %p2234 = scmp.lt.s32.totalorder %s26, 1
        %s2235 = scalar_select %p2234, %s26, 1
        %s2236 = smul.addr %s2233, 2
        %s2237 = sadd.s32 %s2235, %s2236
        %s2238 = smul.addr %s2237, 8
        %s2239 = scalar_lea.vmem %s7, %s2238
      $region64: #{encoding_block.4} parent=55 // pred_fallthru
        _
    $region56: #{encoding_block.4} parent=5 // pred_fallthru
      _
  $region6: #{encoding_block.4} parent=0 // loop_footer
    %s18 = sadd.s32 1, %s14
  $region7: #{encoding_block.4} parent=0 // loop_footer_branch
    %13 = sbr.rel target = $region3
  $region8: #{encoding_block.4} parent=0 // loop_exit
    _

</llo_original>
